<compile_context>
chip_gen: v6e
topology: v6e:2x2x1
jax: 0.10.0
libtpu: 0.0.40
codegen_flags: <defaults>
</compile_context>

<pallas_src>
import functools
import math

import jax
import jax.numpy as jnp
from jax.experimental import pallas as pl
from jax.experimental.pallas import tpu as pltpu


# --------------------------------------------------------------------------
# Kernel
# --------------------------------------------------------------------------
def _unet_kernel(x_ref, w1_ref, b1_ref, w2_ref, b2_ref, w3_ref, b3_ref,
                 w4_ref, b4_ref, o_ref, a1_ref, a2_ref, *, B, H):
    """Fused forward pass for a block of B images (one grid step).

    x_ref  : (B, H+2, Kin1_pad)  bf16  zero-padded rows, lanes = w*Cin (+ zero pad)
    wK_ref : (3*KinK, W*CoutK)   bf16  K-concatenated banded conv weights
    bK_ref : (1, W*CoutK)        f32   bias tiled across the W positions
    w4_ref : (W*C3, W*Cout_pad)  bf16  block-diagonal 1x1-conv weight
    o_ref  : (B, H, W*Cout_pad)  f32
    a1/a2  : (B, H+2, W*C{1,2})  bf16  VMEM scratch for padded intermediates
    """
    bf16 = jnp.bfloat16

    def conv3x3_relu(window, w_ref, b_ref):
        # One K-concatenated MXU matmul per layer:
        #   LHS (B*H, 3*Kin) = images stacked on M, dy windows stacked on K.
        lhs = jnp.concatenate(
            [jnp.concatenate([window(b, dy) for dy in range(3)], axis=-1)
             for b in range(B)],
            axis=0)
        acc = jnp.dot(lhs, w_ref[...], preferred_element_type=jnp.float32)
        return jnp.maximum(acc + b_ref[...], 0.0)          # f32, (B*H, Nout)

    def store_padded(a_ref, h):
        # Interior rows 1..H are fully overwritten (lane offset 0, lane-dense);
        # only the 2 halo rows (= next layer's zero padding) are zeroed, every
        # grid step (cheap, and correct under megacore sharding).
        z = jnp.zeros((B, 1, a_ref.shape[-1]), bf16)
        a_ref[:, 0:1, :] = z
        a_ref[:, H + 1:H + 2, :] = z
        a_ref[:, 1:H + 1, :] = h.reshape(B, H, -1).astype(bf16)

    # encoder conv1: Cin -> 16, ReLU
    h1 = conv3x3_relu(lambda b, dy: x_ref[b, dy:dy + H, :], w1_ref, b1_ref)
    store_padded(a1_ref, h1)

    # encoder conv2: 16 -> 32, ReLU
    h2 = conv3x3_relu(lambda b, dy: a1_ref[b, dy:dy + H, :], w2_ref, b2_ref)
    store_padded(a2_ref, h2)

    # decoder conv3: 32 -> 16, ReLU
    h3 = conv3x3_relu(lambda b, dy: a2_ref[b, dy:dy + H, :], w3_ref, b3_ref)

    # decoder 1x1 conv: 16 -> Cout_pad (no ReLU); padding sliced off in wrapper
    out = jnp.dot(h3.astype(bf16), w4_ref[...],
                  preferred_element_type=jnp.float32) + b4_ref[...]
    o_ref[...] = out.reshape(B, H, -1).astype(o_ref.dtype)


# --------------------------------------------------------------------------
# Wrapper-side weight preparation (pure layout work, done once)
# --------------------------------------------------------------------------
def _band_conv3x3_fused(w_oihw, bias, W, *, k_in_pad=None, dtype=jnp.bfloat16):
    """(Cout,Cin,3,3) conv weight -> single (3*Kin, W*Cout) banded matrix.

    Column padding is folded in (zero pad columns contribute nothing, so they
    are simply absent):
        band[dy, j*Cin+ci, w*Cout+co] = k[dy, j-w+1, ci, co]  if |j-w| <= 1
    and the three dy slabs are concatenated along K, matching an LHS built as
    concat_dy(in_padded_rows[dy:dy+H, :]).
    """
    Cout, Cin, KH, KW = w_oihw.shape
    k = jnp.transpose(w_oihw, (2, 3, 1, 0)).astype(jnp.float32)   # (KH,KW,Cin,Cout)
    j = jnp.arange(W)[:, None]                                    # input column
    w = jnp.arange(W)[None, :]                                    # output column
    kx = j - w + (KW // 2)
    valid = (kx >= 0) & (kx <= KW - 1)
    band = jnp.where(valid[None, :, :, None, None],
                     k[:, jnp.clip(kx, 0, KW - 1)], 0.0)          # (KH,W,W,Cin,Cout)
    band = jnp.transpose(band, (0, 1, 3, 2, 4)).reshape(KH, W * Cin, W * Cout)
    Kin = W * Cin
    if k_in_pad is not None and k_in_pad > Kin:
        band = jnp.pad(band, ((0, 0), (0, k_in_pad - Kin), (0, 0)))
        Kin = k_in_pad
    wmat = band.reshape(KH * Kin, W * Cout).astype(dtype)
    brow = jnp.tile(bias.astype(jnp.float32), W).reshape(1, W * Cout)
    return wmat, brow


def simple_2d_unet(x_nchw, params):
    N, Cin, H, W = x_nchw.shape
    C1 = params["w1"].shape[0]          # 16
    C2 = params["w2"].shape[0]          # 32
    C3 = params["w3"].shape[0]          # 16
    Cout = params["w4"].shape[0]        # 2
    out_dtype = x_nchw.dtype

    LANE = 128
    Kin1 = W * Cin
    Kin1_pad = -(-Kin1 // LANE) * LANE              # input lanes -> multiple of 128

    # pad output channels so the kernel output row is a multiple of 128 lanes
    Cp = Cout
    while (W * Cp) % LANE:
        Cp += 1

    # batch blocking: raise matmul M (= B_blk*H) towards ~256 rows per grid step
    B_blk = max(1, min(N, 256 // max(H, 1)))
    N_pad = pl.cdiv(N, B_blk) * B_blk
    steps = N_pad // B_blk

    # layout plumbing (once): NCHW -> NHWC, flatten rows, pad rows/lanes/batch, bf16
    x = jnp.transpose(x_nchw, (0, 2, 3, 1)).reshape(N, H, Kin1)
    x_flat = jnp.pad(x, ((0, N_pad - N), (1, 1), (0, Kin1_pad - Kin1)))
    x_flat = x_flat.astype(jnp.bfloat16)

    # banded (Toeplitz) conv weights, K-concatenated across the 3 kernel rows
    w1c, b1r = _band_conv3x3_fused(params["w1"], params["b1"], W, k_in_pad=Kin1_pad)
    w2c, b2r = _band_conv3x3_fused(params["w2"], params["b2"], W)
    w3c, b3r = _band_conv3x3_fused(params["w3"], params["b3"], W)

    # 1x1 conv -> block-diagonal matmul with lane-dense padded output channels
    k4 = jnp.pad(params["w4"][:, :, 0, 0].T.astype(jnp.float32),
                 ((0, 0), (0, Cp - Cout)))                         # (C3, Cp)
    w4b = jnp.kron(jnp.eye(W, dtype=jnp.float32), k4).astype(jnp.bfloat16)
    b4r = jnp.tile(jnp.pad(params["b4"].astype(jnp.float32), (0, Cp - Cout)),
                   W).reshape(1, W * Cp)

    # TODO(synk): at BRATS-scale W (~240) the banded weights are O(W^2); add a
    # W-tiling grid axis with a 2-column halo (or switch to 9 shifted dense
    # matmuls), block the f32 accumulator over 8-32 output rows for large H,
    # and re-derive tile sizes for v7x's 64 MiB VMEM.

    full = lambda a: pl.BlockSpec(a.shape, lambda n: (0,) * a.ndim)
    kernel = functools.partial(_unet_kernel, B=B_blk, H=H)

    flops = 2 * B_blk * H * (3 * Kin1_pad * W * C1 +
                             3 * W * C1 * W * C2 +
                             3 * W * C2 * W * C3 +
                             W * C3 * W * Cp) * steps
    bytes_accessed = int(
        x_flat.size * 2 +
        (w1c.size + w2c.size + w3c.size + w4b.size) * 2 +
        (b1r.size + b2r.size + b3r.size + b4r.size) * 4 +
        N_pad * H * W * Cp * 4)

    out_flat = pl.pallas_call(
        kernel,
        out_shape=jax.ShapeDtypeStruct((N_pad, H, W * Cp), out_dtype),
        grid_spec=pltpu.PrefetchScalarGridSpec(
            num_scalar_prefetch=0,
            grid=(steps,),
            in_specs=[
                pl.BlockSpec((B_blk, H + 2, Kin1_pad), lambda n: (n, 0, 0)),
                full(w1c), full(b1r),
                full(w2c), full(b2r),
                full(w3c), full(b3r),
                full(w4b), full(b4r),
            ],
            out_specs=pl.BlockSpec((B_blk, H, W * Cp), lambda n: (n, 0, 0)),
            scratch_shapes=[
                pltpu.VMEM((B_blk, H + 2, W * C1), jnp.bfloat16),
                pltpu.VMEM((B_blk, H + 2, W * C2), jnp.bfloat16),
            ],
        ),
        compiler_params=pltpu.CompilerParams(
            dimension_semantics=("parallel",)),
        cost_estimate=pl.CostEstimate(flops=int(flops), transcendentals=0,
                                      bytes_accessed=bytes_accessed),
    )(x_flat, w1c, b1r, w2c, b2r, w3c, b3r, w4b, b4r)

    # back to NCHW like the PyTorch module (drop batch & channel padding)
    out = out_flat[:N].reshape(N, H, W, Cp)[..., :Cout]
    return jnp.transpose(out, (0, 3, 1, 2)).astype(out_dtype)


# --------------------------------------------------------------------------
# Params + pure-JAX reference
# --------------------------------------------------------------------------
def init_params(key, in_channels=4, out_channels=2, dtype=jnp.float32):
    keys = jax.random.split(key, 8)

    def conv_init(kw, kb, cout, cin, ksz):
        bound = 1.0 / math.sqrt(cin * ksz * ksz)
        w = jax.random.uniform(kw, (cout, cin, ksz, ksz), dtype, -bound, bound)
        b = jax.random.uniform(kb, (cout,), dtype, -bound, bound)
        return w, b

    w1, b1 = conv_init(keys[0], keys[1], 16, in_channels, 3)
    w2, b2 = conv_init(keys[2], keys[3], 32, 16, 3)
    w3, b3 = conv_init(keys[4], keys[5], 16, 32, 3)
    w4, b4 = conv_init(keys[6], keys[7], out_channels, 16, 1)
    return dict(w1=w1, b1=b1, w2=w2, b2=b2, w3=w3, b3=b3, w4=w4, b4=b4)


def unet_ref(x, p):
    dn = ("NCHW", "OIHW", "NCHW")

    def conv(h, w, b, pad):
        y = jax.lax.conv_general_dilated(
            h, w, window_strides=(1, 1), padding=[(pad, pad), (pad, pad)],
            dimension_numbers=dn, precision=jax.lax.Precision.HIGHEST)
        return y + b[None, :, None, None]

    h = jax.nn.relu(conv(x, p["w1"], p["b1"], 1))
    h = jax.nn.relu(conv(h, p["w2"], p["b2"], 1))
    h = jax.nn.relu(conv(h, p["w3"], p["b3"], 1))
    return conv(h, p["w4"], p["b4"], 0)


# --------------------------------------------------------------------------
if __name__ == "__main__":
    key = jax.random.PRNGKey(0)
    k_param, k_x = jax.random.split(key)

    N, Cin, H, W = 2, 4, 16, 16
    Cout = 2
    params = init_params(k_param, Cin, Cout)
    x = jax.random.normal(k_x, (N, Cin, H, W), jnp.float32)

    y = jax.block_until_ready(jax.jit(simple_2d_unet)(x, params))
    y_ref = unet_ref(x, params)

    assert y.shape == (N, Cout, H, W)
    max_err = float(jnp.max(jnp.abs(y - y_ref)))
    rel_err = float(jnp.linalg.norm((y - y_ref).ravel()) /
                    jnp.linalg.norm(y_ref.ravel()))
    # bf16 matmul operands with f32 accumulation -> ~1e-2-level tolerance
    assert max_err < 5e-2 and rel_err < 3e-2, (
        "mismatch vs reference: max abs err = %e, rel err = %e"
        % (max_err, rel_err))

    print("KERNEL_OK")
</pallas_src>

<mosaic_0001>
module attributes {stable_mosaic.version = 11 : i64} {
  func.func @_unet_kernel(%arg0: i32, %arg1: memref<2x18x128xbf16, #tpu.memory_space<vmem>>, %arg2: memref<384x256xbf16, #tpu.memory_space<vmem>>, %arg3: memref<1x256xf32, #tpu.memory_space<vmem>>, %arg4: memref<768x512xbf16, #tpu.memory_space<vmem>>, %arg5: memref<1x512xf32, #tpu.memory_space<vmem>>, %arg6: memref<1536x256xbf16, #tpu.memory_space<vmem>>, %arg7: memref<1x256xf32, #tpu.memory_space<vmem>>, %arg8: memref<256x128xbf16, #tpu.memory_space<vmem>>, %arg9: memref<1x128xf32, #tpu.memory_space<vmem>>, %arg10: memref<2x16x128xf32, #tpu.memory_space<vmem>>, %arg11: memref<2x18x256xbf16, #tpu.memory_space<vmem>>, %arg12: memref<2x18x512xbf16, #tpu.memory_space<vmem>>) attributes {dimension_semantics = [#tpu.dimension_semantics<parallel>], iteration_bounds = array<i64: 1>, scalar_prefetch = 0 : i64, scratch_operands = 2 : i64, tpu.core_type = #tpu.core_type<tc>, window_params = [{transform_indices = @transform_0, window_bounds = array<i64: 2, 18, 128>}, {pipeline_mode = #tpu.pipeline_mode<synchronous>, transform_indices = @transform_1, window_bounds = array<i64: 384, 256>}, {pipeline_mode = #tpu.pipeline_mode<synchronous>, transform_indices = @transform_2, window_bounds = array<i64: 1, 256>}, {pipeline_mode = #tpu.pipeline_mode<synchronous>, transform_indices = @transform_3, window_bounds = array<i64: 768, 512>}, {pipeline_mode = #tpu.pipeline_mode<synchronous>, transform_indices = @transform_4, window_bounds = array<i64: 1, 512>}, {pipeline_mode = #tpu.pipeline_mode<synchronous>, transform_indices = @transform_5, window_bounds = array<i64: 1536, 256>}, {pipeline_mode = #tpu.pipeline_mode<synchronous>, transform_indices = @transform_6, window_bounds = array<i64: 1, 256>}, {pipeline_mode = #tpu.pipeline_mode<synchronous>, transform_indices = @transform_7, window_bounds = array<i64: 256, 128>}, {pipeline_mode = #tpu.pipeline_mode<synchronous>, transform_indices = @transform_8, window_bounds = array<i64: 1, 128>}, {transform_indices = @transform_9, window_bounds = array<i64: 2, 16, 128>}]} {
    %c0 = arith.constant 0 : index
    %c0_0 = arith.constant 0 : index
    %c0_1 = arith.constant 0 : index
    %0 = vector.load %arg1[%c0, %c0_0, %c0_1] : memref<2x18x128xbf16, #tpu.memory_space<vmem>>, vector<1x16x128xbf16>
    %1 = vector.shape_cast %0 : vector<1x16x128xbf16> to vector<16x128xbf16>
    %c0_2 = arith.constant 0 : index
    %c1 = arith.constant 1 : index
    %c0_3 = arith.constant 0 : index
    %2 = vector.load %arg1[%c0_2, %c1, %c0_3] : memref<2x18x128xbf16, #tpu.memory_space<vmem>>, vector<1x16x128xbf16>
    %3 = vector.shape_cast %2 : vector<1x16x128xbf16> to vector<16x128xbf16>
    %c0_4 = arith.constant 0 : index
    %c2 = arith.constant 2 : index
    %c0_5 = arith.constant 0 : index
    %4 = vector.load %arg1[%c0_4, %c2, %c0_5] : memref<2x18x128xbf16, #tpu.memory_space<vmem>>, vector<1x16x128xbf16>
    %5 = vector.shape_cast %4 : vector<1x16x128xbf16> to vector<16x128xbf16>
    %6 = tpu.concatenate %1, %3, %5 in 1 : vector<16x128xbf16>, vector<16x128xbf16>, vector<16x128xbf16> -> vector<16x384xbf16>
    %c1_6 = arith.constant 1 : index
    %c0_7 = arith.constant 0 : index
    %c0_8 = arith.constant 0 : index
    %7 = vector.load %arg1[%c1_6, %c0_7, %c0_8] : memref<2x18x128xbf16, #tpu.memory_space<vmem>>, vector<1x16x128xbf16>
    %8 = vector.shape_cast %7 : vector<1x16x128xbf16> to vector<16x128xbf16>
    %c1_9 = arith.constant 1 : index
    %c1_10 = arith.constant 1 : index
    %c0_11 = arith.constant 0 : index
    %9 = vector.load %arg1[%c1_9, %c1_10, %c0_11] : memref<2x18x128xbf16, #tpu.memory_space<vmem>>, vector<1x16x128xbf16>
    %10 = vector.shape_cast %9 : vector<1x16x128xbf16> to vector<16x128xbf16>
    %c1_12 = arith.constant 1 : index
    %c2_13 = arith.constant 2 : index
    %c0_14 = arith.constant 0 : index
    %11 = vector.load %arg1[%c1_12, %c2_13, %c0_14] : memref<2x18x128xbf16, #tpu.memory_space<vmem>>, vector<1x16x128xbf16>
    %12 = vector.shape_cast %11 : vector<1x16x128xbf16> to vector<16x128xbf16>
    %13 = tpu.concatenate %8, %10, %12 in 1 : vector<16x128xbf16>, vector<16x128xbf16>, vector<16x128xbf16> -> vector<16x384xbf16>
    %14 = tpu.concatenate %6, %13 in 0 : vector<16x384xbf16>, vector<16x384xbf16> -> vector<32x384xbf16>
    %c0_15 = arith.constant 0 : index
    %c0_16 = arith.constant 0 : index
    %15 = vector.load %arg2[%c0_15, %c0_16] : memref<384x256xbf16, #tpu.memory_space<vmem>>, vector<384x256xbf16>
    %cst = arith.constant dense<0.000000e+00> : vector<32x256xf32>
    %16 = tpu.matmul %14, %15, %cst {dimension_numbers = #tpu.dot_dimension_numbers<[1], [0], [0], [1], [0, 0, 1, 1], [], []>} : vector<32x384xbf16>, vector<384x256xbf16>, vector<32x256xf32> -> vector<32x256xf32>
    %c0_17 = arith.constant 0 : index
    %c0_18 = arith.constant 0 : index
    %17 = vector.load %arg3[%c0_17, %c0_18] : memref<1x256xf32, #tpu.memory_space<vmem>>, vector<1x256xf32>
    %18 = vector.broadcast %17 : vector<1x256xf32> to vector<32x256xf32>
    %19 = arith.addf %16, %18 : vector<32x256xf32>
    %cst_19 = arith.constant 0.000000e+00 : f32
    %20 = vector.broadcast %cst_19 : f32 to vector<32x256xf32>
    %21 = arith.maximumf %19, %20 : vector<32x256xf32>
    %cst_20 = arith.constant 0.000000e+00 : bf16
    %22 = vector.broadcast %cst_20 : bf16 to vector<2x1x256xbf16>
    %c0_21 = arith.constant 0 : index
    %c0_22 = arith.constant 0 : index
    %c0_23 = arith.constant 0 : index
    %23 = vector.load %arg11[%c0_21, %c0_22, %c0_23] : memref<2x18x256xbf16, #tpu.memory_space<vmem>>, vector<2x1x256xbf16>
    tpu.vector_store %arg11[%c0_21, %c0_22, %c0_23], %22 {strides = array<i32>} : memref<2x18x256xbf16, #tpu.memory_space<vmem>>, vector<2x1x256xbf16>,
    %c0_24 = arith.constant 0 : index
    %c17 = arith.constant 17 : index
    %c0_25 = arith.constant 0 : index
    %24 = vector.load %arg11[%c0_24, %c17, %c0_25] : memref<2x18x256xbf16, #tpu.memory_space<vmem>>, vector<2x1x256xbf16>
    tpu.vector_store %arg11[%c0_24, %c17, %c0_25], %22 {strides = array<i32>} : memref<2x18x256xbf16, #tpu.memory_space<vmem>>, vector<2x1x256xbf16>,
    %25 = vector.shape_cast %21 : vector<32x256xf32> to vector<2x16x256xf32>
    %26 = arith.truncf %25 : vector<2x16x256xf32> to vector<2x16x256xbf16>
    %c0_26 = arith.constant 0 : index
    %c1_27 = arith.constant 1 : index
    %c0_28 = arith.constant 0 : index
    %27 = vector.load %arg11[%c0_26, %c1_27, %c0_28] : memref<2x18x256xbf16, #tpu.memory_space<vmem>>, vector<2x16x256xbf16>
    tpu.vector_store %arg11[%c0_26, %c1_27, %c0_28], %26 {strides = array<i32>} : memref<2x18x256xbf16, #tpu.memory_space<vmem>>, vector<2x16x256xbf16>,
    %c0_29 = arith.constant 0 : index
    %c0_30 = arith.constant 0 : index
    %c0_31 = arith.constant 0 : index
    %28 = vector.load %arg11[%c0_29, %c0_30, %c0_31] : memref<2x18x256xbf16, #tpu.memory_space<vmem>>, vector<1x16x256xbf16>
    %29 = vector.shape_cast %28 : vector<1x16x256xbf16> to vector<16x256xbf16>
    %c0_32 = arith.constant 0 : index
    %c1_33 = arith.constant 1 : index
    %c0_34 = arith.constant 0 : index
    %30 = vector.load %arg11[%c0_32, %c1_33, %c0_34] : memref<2x18x256xbf16, #tpu.memory_space<vmem>>, vector<1x16x256xbf16>
    %31 = vector.shape_cast %30 : vector<1x16x256xbf16> to vector<16x256xbf16>
    %c0_35 = arith.constant 0 : index
    %c2_36 = arith.constant 2 : index
    %c0_37 = arith.constant 0 : index
    %32 = vector.load %arg11[%c0_35, %c2_36, %c0_37] : memref<2x18x256xbf16, #tpu.memory_space<vmem>>, vector<1x16x256xbf16>
    %33 = vector.shape_cast %32 : vector<1x16x256xbf16> to vector<16x256xbf16>
    %34 = tpu.concatenate %29, %31, %33 in 1 : vector<16x256xbf16>, vector<16x256xbf16>, vector<16x256xbf16> -> vector<16x768xbf16>
    %c1_38 = arith.constant 1 : index
    %c0_39 = arith.constant 0 : index
    %c0_40 = arith.constant 0 : index
    %35 = vector.load %arg11[%c1_38, %c0_39, %c0_40] : memref<2x18x256xbf16, #tpu.memory_space<vmem>>, vector<1x16x256xbf16>
    %36 = vector.shape_cast %35 : vector<1x16x256xbf16> to vector<16x256xbf16>
    %c1_41 = arith.constant 1 : index
    %c1_42 = arith.constant 1 : index
    %c0_43 = arith.constant 0 : index
    %37 = vector.load %arg11[%c1_41, %c1_42, %c0_43] : memref<2x18x256xbf16, #tpu.memory_space<vmem>>, vector<1x16x256xbf16>
    %38 = vector.shape_cast %37 : vector<1x16x256xbf16> to vector<16x256xbf16>
    %c1_44 = arith.constant 1 : index
    %c2_45 = arith.constant 2 : index
    %c0_46 = arith.constant 0 : index
    %39 = vector.load %arg11[%c1_44, %c2_45, %c0_46] : memref<2x18x256xbf16, #tpu.memory_space<vmem>>, vector<1x16x256xbf16>
    %40 = vector.shape_cast %39 : vector<1x16x256xbf16> to vector<16x256xbf16>
    %41 = tpu.concatenate %36, %38, %40 in 1 : vector<16x256xbf16>, vector<16x256xbf16>, vector<16x256xbf16> -> vector<16x768xbf16>
    %42 = tpu.concatenate %34, %41 in 0 : vector<16x768xbf16>, vector<16x768xbf16> -> vector<32x768xbf16>
    %c0_47 = arith.constant 0 : index
    %c0_48 = arith.constant 0 : index
    %43 = vector.load %arg4[%c0_47, %c0_48] : memref<768x512xbf16, #tpu.memory_space<vmem>>, vector<768x512xbf16>
    %cst_49 = arith.constant dense<0.000000e+00> : vector<32x512xf32>
    %44 = tpu.matmul %42, %43, %cst_49 {dimension_numbers = #tpu.dot_dimension_numbers<[1], [0], [0], [1], [0, 0, 1, 1], [], []>} : vector<32x768xbf16>, vector<768x512xbf16>, vector<32x512xf32> -> vector<32x512xf32>
    %c0_50 = arith.constant 0 : index
    %c0_51 = arith.constant 0 : index
    %45 = vector.load %arg5[%c0_50, %c0_51] : memref<1x512xf32, #tpu.memory_space<vmem>>, vector<1x512xf32>
    %46 = vector.broadcast %45 : vector<1x512xf32> to vector<32x512xf32>
    %47 = arith.addf %44, %46 : vector<32x512xf32>
    %cst_52 = arith.constant 0.000000e+00 : f32
    %48 = vector.broadcast %cst_52 : f32 to vector<32x512xf32>
    %49 = arith.maximumf %47, %48 : vector<32x512xf32>
    %cst_53 = arith.constant 0.000000e+00 : bf16
    %50 = vector.broadcast %cst_53 : bf16 to vector<2x1x512xbf16>
    %c0_54 = arith.constant 0 : index
    %c0_55 = arith.constant 0 : index
    %c0_56 = arith.constant 0 : index
    %51 = vector.load %arg12[%c0_54, %c0_55, %c0_56] : memref<2x18x512xbf16, #tpu.memory_space<vmem>>, vector<2x1x512xbf16>
    tpu.vector_store %arg12[%c0_54, %c0_55, %c0_56], %50 {strides = array<i32>} : memref<2x18x512xbf16, #tpu.memory_space<vmem>>, vector<2x1x512xbf16>,
    %c0_57 = arith.constant 0 : index
    %c17_58 = arith.constant 17 : index
    %c0_59 = arith.constant 0 : index
    %52 = vector.load %arg12[%c0_57, %c17_58, %c0_59] : memref<2x18x512xbf16, #tpu.memory_space<vmem>>, vector<2x1x512xbf16>
    tpu.vector_store %arg12[%c0_57, %c17_58, %c0_59], %50 {strides = array<i32>} : memref<2x18x512xbf16, #tpu.memory_space<vmem>>, vector<2x1x512xbf16>,
    %53 = vector.shape_cast %49 : vector<32x512xf32> to vector<2x16x512xf32>
    %54 = arith.truncf %53 : vector<2x16x512xf32> to vector<2x16x512xbf16>
    %c0_60 = arith.constant 0 : index
    %c1_61 = arith.constant 1 : index
    %c0_62 = arith.constant 0 : index
    %55 = vector.load %arg12[%c0_60, %c1_61, %c0_62] : memref<2x18x512xbf16, #tpu.memory_space<vmem>>, vector<2x16x512xbf16>
    tpu.vector_store %arg12[%c0_60, %c1_61, %c0_62], %54 {strides = array<i32>} : memref<2x18x512xbf16, #tpu.memory_space<vmem>>, vector<2x16x512xbf16>,
    %c0_63 = arith.constant 0 : index
    %c0_64 = arith.constant 0 : index
    %c0_65 = arith.constant 0 : index
    %56 = vector.load %arg12[%c0_63, %c0_64, %c0_65] : memref<2x18x512xbf16, #tpu.memory_space<vmem>>, vector<1x16x512xbf16>
    %57 = vector.shape_cast %56 : vector<1x16x512xbf16> to vector<16x512xbf16>
    %c0_66 = arith.constant 0 : index
    %c1_67 = arith.constant 1 : index
    %c0_68 = arith.constant 0 : index
    %58 = vector.load %arg12[%c0_66, %c1_67, %c0_68] : memref<2x18x512xbf16, #tpu.memory_space<vmem>>, vector<1x16x512xbf16>
    %59 = vector.shape_cast %58 : vector<1x16x512xbf16> to vector<16x512xbf16>
    %c0_69 = arith.constant 0 : index
    %c2_70 = arith.constant 2 : index
    %c0_71 = arith.constant 0 : index
    %60 = vector.load %arg12[%c0_69, %c2_70, %c0_71] : memref<2x18x512xbf16, #tpu.memory_space<vmem>>, vector<1x16x512xbf16>
    %61 = vector.shape_cast %60 : vector<1x16x512xbf16> to vector<16x512xbf16>
    %62 = tpu.concatenate %57, %59, %61 in 1 : vector<16x512xbf16>, vector<16x512xbf16>, vector<16x512xbf16> -> vector<16x1536xbf16>
    %c1_72 = arith.constant 1 : index
    %c0_73 = arith.constant 0 : index
    %c0_74 = arith.constant 0 : index
    %63 = vector.load %arg12[%c1_72, %c0_73, %c0_74] : memref<2x18x512xbf16, #tpu.memory_space<vmem>>, vector<1x16x512xbf16>
    %64 = vector.shape_cast %63 : vector<1x16x512xbf16> to vector<16x512xbf16>
    %c1_75 = arith.constant 1 : index
    %c1_76 = arith.constant 1 : index
    %c0_77 = arith.constant 0 : index
    %65 = vector.load %arg12[%c1_75, %c1_76, %c0_77] : memref<2x18x512xbf16, #tpu.memory_space<vmem>>, vector<1x16x512xbf16>
    %66 = vector.shape_cast %65 : vector<1x16x512xbf16> to vector<16x512xbf16>
    %c1_78 = arith.constant 1 : index
    %c2_79 = arith.constant 2 : index
    %c0_80 = arith.constant 0 : index
    %67 = vector.load %arg12[%c1_78, %c2_79, %c0_80] : memref<2x18x512xbf16, #tpu.memory_space<vmem>>, vector<1x16x512xbf16>
    %68 = vector.shape_cast %67 : vector<1x16x512xbf16> to vector<16x512xbf16>
    %69 = tpu.concatenate %64, %66, %68 in 1 : vector<16x512xbf16>, vector<16x512xbf16>, vector<16x512xbf16> -> vector<16x1536xbf16>
    %70 = tpu.concatenate %62, %69 in 0 : vector<16x1536xbf16>, vector<16x1536xbf16> -> vector<32x1536xbf16>
    %c0_81 = arith.constant 0 : index
    %c0_82 = arith.constant 0 : index
    %71 = vector.load %arg6[%c0_81, %c0_82] : memref<1536x256xbf16, #tpu.memory_space<vmem>>, vector<1536x256xbf16>
    %cst_83 = arith.constant dense<0.000000e+00> : vector<32x256xf32>
    %72 = tpu.matmul %70, %71, %cst_83 {dimension_numbers = #tpu.dot_dimension_numbers<[1], [0], [0], [1], [0, 0, 1, 1], [], []>} : vector<32x1536xbf16>, vector<1536x256xbf16>, vector<32x256xf32> -> vector<32x256xf32>
    %c0_84 = arith.constant 0 : index
    %c0_85 = arith.constant 0 : index
    %73 = vector.load %arg7[%c0_84, %c0_85] : memref<1x256xf32, #tpu.memory_space<vmem>>, vector<1x256xf32>
    %74 = vector.broadcast %73 : vector<1x256xf32> to vector<32x256xf32>
    %75 = arith.addf %72, %74 : vector<32x256xf32>
    %cst_86 = arith.constant 0.000000e+00 : f32
    %76 = vector.broadcast %cst_86 : f32 to vector<32x256xf32>
    %77 = arith.maximumf %75, %76 : vector<32x256xf32>
    %78 = arith.truncf %77 : vector<32x256xf32> to vector<32x256xbf16>
    %c0_87 = arith.constant 0 : index
    %c0_88 = arith.constant 0 : index
    %79 = vector.load %arg8[%c0_87, %c0_88] : memref<256x128xbf16, #tpu.memory_space<vmem>>, vector<256x128xbf16>
    %cst_89 = arith.constant dense<0.000000e+00> : vector<32x128xf32>
    %80 = tpu.matmul %78, %79, %cst_89 {dimension_numbers = #tpu.dot_dimension_numbers<[1], [0], [0], [1], [0, 0, 1, 1], [], []>} : vector<32x256xbf16>, vector<256x128xbf16>, vector<32x128xf32> -> vector<32x128xf32>
    %c0_90 = arith.constant 0 : index
    %c0_91 = arith.constant 0 : index
    %81 = vector.load %arg9[%c0_90, %c0_91] : memref<1x128xf32, #tpu.memory_space<vmem>>, vector<1x128xf32>
    %82 = vector.broadcast %81 : vector<1x128xf32> to vector<32x128xf32>
    %83 = arith.addf %80, %82 : vector<32x128xf32>
    %84 = vector.shape_cast %83 : vector<32x128xf32> to vector<2x16x128xf32>
    %c0_92 = arith.constant 0 : index
    %c0_93 = arith.constant 0 : index
    %c0_94 = arith.constant 0 : index
    %85 = vector.load %arg10[%c0_92, %c0_93, %c0_94] : memref<2x16x128xf32, #tpu.memory_space<vmem>>, vector<2x16x128xf32>
    tpu.vector_store %arg10[%c0_92, %c0_93, %c0_94], %84 {strides = array<i32>} : memref<2x16x128xf32, #tpu.memory_space<vmem>>, vector<2x16x128xf32>,
    return
  }
  func.func @transform_0(%arg0: i32) -> (i32, i32, i32) {
    %c0_i32 = arith.constant 0 : i32
    %c0_i32_0 = arith.constant 0 : i32
    %c0_i32_1 = arith.constant 0 : i32
    return %arg0, %c0_i32, %c0_i32_0 : i32, i32, i32
  }
  func.func @transform_1(%arg0: i32) -> (i32, i32) {
    %c0_i32 = arith.constant 0 : i32
    %c0_i32_0 = arith.constant 0 : i32
    %c0_i32_1 = arith.constant 0 : i32
    return %c0_i32, %c0_i32_0 : i32, i32
  }
  func.func @transform_2(%arg0: i32) -> (i32, i32) {
    %c0_i32 = arith.constant 0 : i32
    %c0_i32_0 = arith.constant 0 : i32
    %c0_i32_1 = arith.constant 0 : i32
    return %c0_i32, %c0_i32_0 : i32, i32
  }
  func.func @transform_3(%arg0: i32) -> (i32, i32) {
    %c0_i32 = arith.constant 0 : i32
    %c0_i32_0 = arith.constant 0 : i32
    %c0_i32_1 = arith.constant 0 : i32
    return %c0_i32, %c0_i32_0 : i32, i32
  }
  func.func @transform_4(%arg0: i32) -> (i32, i32) {
    %c0_i32 = arith.constant 0 : i32
    %c0_i32_0 = arith.constant 0 : i32
    %c0_i32_1 = arith.constant 0 : i32
    return %c0_i32, %c0_i32_0 : i32, i32
  }
  func.func @transform_5(%arg0: i32) -> (i32, i32) {
    %c0_i32 = arith.constant 0 : i32
    %c0_i32_0 = arith.constant 0 : i32
    %c0_i32_1 = arith.constant 0 : i32
    return %c0_i32, %c0_i32_0 : i32, i32
  }
  func.func @transform_6(%arg0: i32) -> (i32, i32) {
    %c0_i32 = arith.constant 0 : i32
    %c0_i32_0 = arith.constant 0 : i32
    %c0_i32_1 = arith.constant 0 : i32
    return %c0_i32, %c0_i32_0 : i32, i32
  }
  func.func @transform_7(%arg0: i32) -> (i32, i32) {
    %c0_i32 = arith.constant 0 : i32
    %c0_i32_0 = arith.constant 0 : i32
    %c0_i32_1 = arith.constant 0 : i32
    return %c0_i32, %c0_i32_0 : i32, i32
  }
  func.func @transform_8(%arg0: i32) -> (i32, i32) {
    %c0_i32 = arith.constant 0 : i32
    %c0_i32_0 = arith.constant 0 : i32
    %c0_i32_1 = arith.constant 0 : i32
    return %c0_i32, %c0_i32_0 : i32, i32
  }
  func.func @transform_9(%arg0: i32) -> (i32, i32, i32) {
    %c0_i32 = arith.constant 0 : i32
    %c0_i32_0 = arith.constant 0 : i32
    %c0_i32_1 = arith.constant 0 : i32
    return %arg0, %c0_i32, %c0_i32_0 : i32, i32, i32
  }
}

</mosaic_0001>

<llo_original>
// kernel: tile.28
$region0: #{tile.28}
  #allocation0 [shape = 's32[1]{0}', space=sflag, size = 0x4, scoped, tag = 'scoped memory for tile.28']
  %s0 = inlined_call_operand.vmem [shape: f32[32], index: 0, kind: input, shape index: {}]
  %s1 = inlined_call_operand.vmem [shape: f32[16,32], index: 1, kind: output, shape index: {}]
  // Predicated region
  $region2: #{tile.28} parent=0 // pred_check
    _
  $region3: #{tile.28} parent=0 // pred_check_branch
    %3 = sbr.rel (0) target = $region5
  $region4: #{tile.28} parent=0 // pred_region
    _
  $region5: #{tile.28} parent=0 // pred_fallthru
    _
  %v4 = vld [vmem:[%s0] ss:$0 sm:$0xff]
  %5 = vst [vmem:[%s1] sm:$0xff] %v4
  %s6 = scalar_lea.vmem %s1, 8
  %7 = vst [vmem:[%s6] sm:$0xff] %v4

// kernel: tile.29
$region0: #{tile.29}
  %s0 = inlined_call_operand.vmem [shape: f32[16,32], index: 0, kind: input, shape index: {}]
  %s1 = inlined_call_operand.vmem [shape: f32[1,512], index: 1, kind: output, shape index: {}]
  $region1: #{tile.29} parent=0
    #allocation0 [shape = 'u8[16384]{0}', space=vmem, size = 0x4000, scoped, tag = 'scoped mem for output reshape']
    %v2 = vld [vmem:[%s0] ss:$4 sm:$0xf]
    %vm3 = vcmask 261120
    %4 = vst.msk [vmem:[#allocation0] ss:$8 sm:$0xf] %vm3, %v2
    %s5 = scalar_lea.vmem %s0, 3
    %v6 = vld [vmem:[%s5] ss:$4 sm:$0xf]
    %7 = vrot.lane.b32.xlu0 %v6, 96
    %v8 = vpop.permute.xlu0 %7
    %vm9 = vcmask 1048320
    %10 = vst.msk [vmem:[#allocation0] ss:$8 sm:$0xf] %vm9, %v8
    %s11 = scalar_lea.vmem %s0, 2
    %v12 = vld [vmem:[%s11] ss:$4 sm:$0xf]
    %13 = vrot.lane.b32.xlu0 %v12, 64
    %v14 = vpop.permute.xlu0 %13
    %vm15 = vcmask 785920
    %16 = vst.msk [vmem:[#allocation0] ss:$8 sm:$0xf] %vm15, %v14
    %s17 = scalar_lea.vmem %s0, 1
    %v18 = vld [vmem:[%s17] ss:$4 sm:$0xf]
    %19 = vrot.lane.b32.xlu0 %v18, 32
    %v20 = vpop.permute.xlu0 %19
    %vm21 = vcmask 523520
    %22 = vst.msk [vmem:[#allocation0] ss:$8 sm:$0xf] %vm21, %v20
    %s24 = sshll.u32 1, 1
    %s25 = ssub.s32 %s24, 1
    %v27 = vld [vmem:[#allocation0] sm:%s25]
    %s28 = sshll.u32 1, 1
    %s29 = ssub.s32 %s28, 1
    %30 = vst [vmem:[%s1] sm:%s29] %v27
    %s31 = scalar_lea.vmem [#allocation0], 8
    %v32 = vld [vmem:[%s31] sm:%s25]
    %s33 = sshll.u32 1, 1
    %s34 = ssub.s32 %s33, 1
    %s35 = scalar_lea.vmem %s1, 1
    %36 = vst [vmem:[%s35] sm:%s34] %v32
    %s37 = scalar_lea.vmem [#allocation0], 16
    %v38 = vld [vmem:[%s37] sm:%s25]
    %s39 = sshll.u32 1, 1
    %s40 = ssub.s32 %s39, 1
    %s41 = smul.addr 1, 2
    %s42 = scalar_lea.vmem %s1, %s41
    %43 = vst [vmem:[%s42] sm:%s40] %v38
    %s44 = scalar_lea.vmem [#allocation0], 24
    %v45 = vld [vmem:[%s44] sm:%s25]
    %s46 = sshll.u32 1, 1
    %s47 = ssub.s32 %s46, 1
    %s48 = smul.addr 1, 3
    %s49 = scalar_lea.vmem %s1, %s48
    %50 = vst [vmem:[%s49] sm:%s47] %v45

// kernel: tile.23
$region0: #{tile.23}
  #allocation0 [shape = 's32[1]{0}', space=sflag, size = 0x4, scoped, tag = 'scoped memory for tile.23']
  %s0 = inlined_call_operand.vmem [shape: f32[16], index: 0, kind: input, shape index: {}]
  %s1 = inlined_call_operand.vmem [shape: f32[16,16], index: 1, kind: output, shape index: {}]
  // Predicated region
  $region2: #{tile.23} parent=0 // pred_check
    _
  $region3: #{tile.23} parent=0 // pred_check_branch
    %3 = sbr.rel (0) target = $region5
  $region4: #{tile.23} parent=0 // pred_region
    _
  $region5: #{tile.23} parent=0 // pred_fallthru
    _
  %v4 = vld [vmem:[%s0] ss:$0 sm:$0xff]
  %5 = vst [vmem:[%s1] sm:$0xff] %v4
  %s6 = scalar_lea.vmem %s1, 8
  %7 = vst [vmem:[%s6] sm:$0xff] %v4

// kernel: tile.24
$region0: #{tile.24}
  %s0 = inlined_call_operand.vmem [shape: f32[16,16], index: 0, kind: input, shape index: {}]
  %s1 = inlined_call_operand.vmem [shape: f32[1,256], index: 1, kind: output, shape index: {}]
  $region1: #{tile.24} parent=0
    #allocation0 [shape = 'u8[8192]{0}', space=vmem, size = 0x2000, scoped, tag = 'scoped mem for output reshape']
    %s2 = smov 3
    %v3 = vld [vmem:[%s0] ss:$8 sm:%s2]
    %vm4 = vcmask 130048
    %5 = vst.msk [vmem:[#allocation0] ss:$8 sm:$0x3] %vm4, %v3
    %s6 = scalar_lea.vmem %s0, 7
    %s7 = smov 3
    %v8 = vld [vmem:[%s6] ss:$8 sm:%s7]
    %9 = vrot.lane.b32.xlu0 %v8, 112
    %v10 = vpop.permute.xlu0 %9
    %vm11 = vcmask 1048448
    %12 = vst.msk [vmem:[#allocation0] ss:$8 sm:$0x3] %vm11, %v10
    %s13 = scalar_lea.vmem %s0, 6
    %s14 = smov 3
    %v15 = vld [vmem:[%s13] ss:$8 sm:%s14]
    %16 = vrot.lane.b32.xlu0 %v15, 96
    %v17 = vpop.permute.xlu0 %16
    %vm18 = vcmask 917248
    %19 = vst.msk [vmem:[#allocation0] ss:$8 sm:$0x3] %vm18, %v17
    %s20 = scalar_lea.vmem %s0, 5
    %s21 = smov 3
    %v22 = vld [vmem:[%s20] ss:$8 sm:%s21]
    %23 = vrot.lane.b32.xlu0 %v22, 80
    %v24 = vpop.permute.xlu0 %23
    %vm25 = vcmask 786048
    %26 = vst.msk [vmem:[#allocation0] ss:$8 sm:$0x3] %vm25, %v24
    %s27 = scalar_lea.vmem %s0, 4
    %s28 = smov 3
    %v29 = vld [vmem:[%s27] ss:$8 sm:%s28]
    %30 = vrot.lane.b32.xlu0 %v29, 64
    %v31 = vpop.permute.xlu0 %30
    %vm32 = vcmask 654848
    %33 = vst.msk [vmem:[#allocation0] ss:$8 sm:$0x3] %vm32, %v31
    %s34 = scalar_lea.vmem %s0, 3
    %s35 = smov 3
    %v36 = vld [vmem:[%s34] ss:$8 sm:%s35]
    %37 = vrot.lane.b32.xlu0 %v36, 48
    %v38 = vpop.permute.xlu0 %37
    %vm39 = vcmask 523648
    %40 = vst.msk [vmem:[#allocation0] ss:$8 sm:$0x3] %vm39, %v38
    %s41 = scalar_lea.vmem %s0, 2
    %s42 = smov 3
    %v43 = vld [vmem:[%s41] ss:$8 sm:%s42]
    %44 = vrot.lane.b32.xlu0 %v43, 32
    %v45 = vpop.permute.xlu0 %44
    %vm46 = vcmask 392448
    %47 = vst.msk [vmem:[#allocation0] ss:$8 sm:$0x3] %vm46, %v45
    %s48 = scalar_lea.vmem %s0, 1
    %s49 = smov 3
    %v50 = vld [vmem:[%s48] ss:$8 sm:%s49]
    %51 = vrot.lane.b32.xlu0 %v50, 16
    %v52 = vpop.permute.xlu0 %51
    %vm53 = vcmask 261248
    %54 = vst.msk [vmem:[#allocation0] ss:$8 sm:$0x3] %vm53, %v52
    %s56 = sshll.u32 1, 1
    %s57 = ssub.s32 %s56, 1
    %v59 = vld [vmem:[#allocation0] sm:%s57]
    %s60 = sshll.u32 1, 1
    %s61 = ssub.s32 %s60, 1
    %62 = vst [vmem:[%s1] sm:%s61] %v59
    %s63 = scalar_lea.vmem [#allocation0], 8
    %v64 = vld [vmem:[%s63] sm:%s57]
    %s65 = sshll.u32 1, 1
    %s66 = ssub.s32 %s65, 1
    %s67 = scalar_lea.vmem %s1, 1
    %68 = vst [vmem:[%s67] sm:%s66] %v64

// kernel: tile.38
$region0: #{tile.38}
  #allocation0 [shape = 's32[1]{0}', space=sflag, size = 0x4, scoped, tag = 'scoped memory for tile.38']
  %s0 = inlined_call_operand.vmem [shape: f32[8], index: 0, kind: input, shape index: {}]
  %s1 = inlined_call_operand.vmem [shape: f32[16,8], index: 1, kind: output, shape index: {}]
  // Predicated region
  $region2: #{tile.38} parent=0 // pred_check
    _
  $region3: #{tile.38} parent=0 // pred_check_branch
    %3 = sbr.rel (0) target = $region5
  $region4: #{tile.38} parent=0 // pred_region
    _
  $region5: #{tile.38} parent=0 // pred_fallthru
    _
  %v4 = vld [vmem:[%s0] ss:$0 sm:$0xff]
  %5 = vst [vmem:[%s1] sm:$0xff] %v4
  %s6 = scalar_lea.vmem %s1, 8
  %7 = vst [vmem:[%s6] sm:$0xff] %v4

// kernel: tile.39
$region0: #{tile.39}
  %s0 = inlined_call_operand.vmem [shape: f32[16,8], index: 0, kind: input, shape index: {}]
  %s1 = inlined_call_operand.vmem [shape: f32[1,128], index: 1, kind: output, shape index: {}]
  $region1: #{tile.39} parent=0
    #allocation0 [shape = 'u8[4096]{0}', space=vmem, size = 0x1000, scoped, tag = 'scoped mem for output reshape']
    %v2 = vld [vmem:[%s0] sm:$0x1]
    %vm3 = vcmask 64512
    %4 = vst.msk [vmem:[#allocation0] sm:$0x1] %vm3, %v2
    %s5 = scalar_lea.vmem %s0, 15
    %v6 = vld [vmem:[%s5] sm:$0x1]
    %7 = vrot.lane.b32.xlu0 %v6, 120
    %v8 = vpop.permute.xlu0 %7
    %vm9 = vcmask 1048512
    %10 = vst.msk [vmem:[#allocation0] sm:$0x1] %vm9, %v8
    %s11 = scalar_lea.vmem %s0, 14
    %v12 = vld [vmem:[%s11] sm:$0x1]
    %13 = vrot.lane.b32.xlu0 %v12, 112
    %v14 = vpop.permute.xlu0 %13
    %vm15 = vcmask 982912
    %16 = vst.msk [vmem:[#allocation0] sm:$0x1] %vm15, %v14
    %s17 = scalar_lea.vmem %s0, 13
    %v18 = vld [vmem:[%s17] sm:$0x1]
    %19 = vrot.lane.b32.xlu0 %v18, 104
    %v20 = vpop.permute.xlu0 %19
    %vm21 = vcmask 917312
    %22 = vst.msk [vmem:[#allocation0] sm:$0x1] %vm21, %v20
    %s23 = scalar_lea.vmem %s0, 12
    %v24 = vld [vmem:[%s23] sm:$0x1]
    %25 = vrot.lane.b32.xlu0 %v24, 96
    %v26 = vpop.permute.xlu0 %25
    %vm27 = vcmask 851712
    %28 = vst.msk [vmem:[#allocation0] sm:$0x1] %vm27, %v26
    %s29 = scalar_lea.vmem %s0, 11
    %v30 = vld [vmem:[%s29] sm:$0x1]
    %31 = vrot.lane.b32.xlu0 %v30, 88
    %v32 = vpop.permute.xlu0 %31
    %vm33 = vcmask 786112
    %34 = vst.msk [vmem:[#allocation0] sm:$0x1] %vm33, %v32
    %s35 = scalar_lea.vmem %s0, 10
    %v36 = vld [vmem:[%s35] sm:$0x1]
    %37 = vrot.lane.b32.xlu0 %v36, 80
    %v38 = vpop.permute.xlu0 %37
    %vm39 = vcmask 720512
    %40 = vst.msk [vmem:[#allocation0] sm:$0x1] %vm39, %v38
    %s41 = scalar_lea.vmem %s0, 9
    %v42 = vld [vmem:[%s41] sm:$0x1]
    %43 = vrot.lane.b32.xlu0 %v42, 72
    %v44 = vpop.permute.xlu0 %43
    %vm45 = vcmask 654912
    %46 = vst.msk [vmem:[#allocation0] sm:$0x1] %vm45, %v44
    %s47 = scalar_lea.vmem %s0, 8
    %v48 = vld [vmem:[%s47] sm:$0x1]
    %49 = vrot.lane.b32.xlu0 %v48, 64
    %v50 = vpop.permute.xlu0 %49
    %vm51 = vcmask 589312
    %52 = vst.msk [vmem:[#allocation0] sm:$0x1] %vm51, %v50
    %s53 = scalar_lea.vmem %s0, 7
    %v54 = vld [vmem:[%s53] sm:$0x1]
    %55 = vrot.lane.b32.xlu0 %v54, 56
    %v56 = vpop.permute.xlu0 %55
    %vm57 = vcmask 523712
    %58 = vst.msk [vmem:[#allocation0] sm:$0x1] %vm57, %v56
    %s59 = scalar_lea.vmem %s0, 6
    %v60 = vld [vmem:[%s59] sm:$0x1]
    %61 = vrot.lane.b32.xlu0 %v60, 48
    %v62 = vpop.permute.xlu0 %61
    %vm63 = vcmask 458112
    %64 = vst.msk [vmem:[#allocation0] sm:$0x1] %vm63, %v62
    %s65 = scalar_lea.vmem %s0, 5
    %v66 = vld [vmem:[%s65] sm:$0x1]
    %67 = vrot.lane.b32.xlu0 %v66, 40
    %v68 = vpop.permute.xlu0 %67
    %vm69 = vcmask 392512
    %70 = vst.msk [vmem:[#allocation0] sm:$0x1] %vm69, %v68
    %s71 = scalar_lea.vmem %s0, 4
    %v72 = vld [vmem:[%s71] sm:$0x1]
    %73 = vrot.lane.b32.xlu0 %v72, 32
    %v74 = vpop.permute.xlu0 %73
    %vm75 = vcmask 326912
    %76 = vst.msk [vmem:[#allocation0] sm:$0x1] %vm75, %v74
    %s77 = scalar_lea.vmem %s0, 3
    %v78 = vld [vmem:[%s77] sm:$0x1]
    %79 = vrot.lane.b32.xlu0 %v78, 24
    %v80 = vpop.permute.xlu0 %79
    %vm81 = vcmask 261312
    %82 = vst.msk [vmem:[#allocation0] sm:$0x1] %vm81, %v80
    %s83 = scalar_lea.vmem %s0, 2
    %v84 = vld [vmem:[%s83] sm:$0x1]
    %85 = vrot.lane.b32.xlu0 %v84, 16
    %v86 = vpop.permute.xlu0 %85
    %vm87 = vcmask 195712
    %88 = vst.msk [vmem:[#allocation0] sm:$0x1] %vm87, %v86
    %s89 = scalar_lea.vmem %s0, 1
    %v90 = vld [vmem:[%s89] sm:$0x1]
    %91 = vrot.lane.b32.xlu0 %v90, 8
    %v92 = vpop.permute.xlu0 %91
    %vm93 = vcmask 130112
    %94 = vst.msk [vmem:[#allocation0] sm:$0x1] %vm93, %v92
    %s96 = sshll.u32 1, 1
    %s97 = ssub.s32 %s96, 1
    %v99 = vld [vmem:[#allocation0] sm:%s97]
    %s100 = sshll.u32 1, 1
    %s101 = ssub.s32 %s100, 1
    %102 = vst [vmem:[%s1] sm:%s101] %v99

// kernel: simple_2d_unet.1
$region0: #{simple_2d_unet.1}
  #allocation0 [shape = 'u32[]', space=smem, size = 0x4, offset = 0x4, fixed_abs, tag = 'smem constant byte address 0x4 - core index']
  #allocation1 [shape = 'u32[144,128]{1,0:T(1,128)}', space=vmem, size = 0x12000, scoped, tag = 'internal scratch']
  #allocation2 [shape = 'bf16[2,18,256]{2,1,0:T(8,128)(2,1)}', space=vmem, size = 0x6000, scoped, tag = 'scratch operand']
  #allocation3 [shape = 'bf16[2,18,512]{2,1,0:T(8,128)(2,1)}', space=vmem, size = 0xc000, scoped, tag = 'scratch operand']
  %s0 = inlined_call_operand.vmem [shape: bf16[2,18,128], index: 0, kind: input, shape index: {}]
  %s1 = inlined_call_operand.vmem [shape: bf16[384,256], index: 1, kind: input, shape index: {}]
  %s2 = inlined_call_operand.vmem [shape: f32[1,256], index: 2, kind: input, shape index: {}]
  %s3 = inlined_call_operand.vmem [shape: bf16[768,512], index: 3, kind: input, shape index: {}]
  %s4 = inlined_call_operand.vmem [shape: f32[1,512], index: 4, kind: input, shape index: {}]
  %s5 = inlined_call_operand.vmem [shape: bf16[1536,256], index: 5, kind: input, shape index: {}]
  %s6 = inlined_call_operand.vmem [shape: f32[1,256], index: 6, kind: input, shape index: {}]
  %s7 = inlined_call_operand.vmem [shape: bf16[256,128], index: 7, kind: input, shape index: {}]
  %s8 = inlined_call_operand.vmem [shape: f32[1,128], index: 8, kind: input, shape index: {}]
  %s9 = inlined_call_operand.vmem [shape: f32[2,16,128], index: 9, kind: output, shape index: {}]
  %s10 = sld [smem:[#allocation0]]
  $region46: #{simple_2d_unet.1} parent=0
    _
  %s12 = ssub.s32 1, %s10
  %s13 = scalar_select 0, %s12, %s10
  // Predicated region
  $region2: #{simple_2d_unet.1} parent=0 // pred_check
    _
  $region3: #{simple_2d_unet.1} parent=0 // pred_check_branch
    %15 = sbr.rel (0) target = $region5
  $region4: #{simple_2d_unet.1} parent=0 // pred_region
    _
  $region5: #{simple_2d_unet.1} parent=0 // pred_fallthru
    _
  // Predicated region
  $region6: #{simple_2d_unet.1} parent=0 // pred_check
    _
  $region7: #{simple_2d_unet.1} parent=0 // pred_check_branch
    %17 = sbr.rel (0) target = $region9
  $region8: #{simple_2d_unet.1} parent=0 // pred_region
    _
  $region9: #{simple_2d_unet.1} parent=0 // pred_fallthru
    _
  // Predicated region
  $region10: #{simple_2d_unet.1} parent=0 // pred_check
    _
  $region11: #{simple_2d_unet.1} parent=0 // pred_check_branch
    %19 = sbr.rel (0) target = $region13
  $region12: #{simple_2d_unet.1} parent=0 // pred_region
    _
  $region13: #{simple_2d_unet.1} parent=0 // pred_fallthru
    _
  // Predicated region
  $region14: #{simple_2d_unet.1} parent=0 // pred_check
    _
  $region15: #{simple_2d_unet.1} parent=0 // pred_check_branch
    %21 = sbr.rel (0) target = $region17
  $region16: #{simple_2d_unet.1} parent=0 // pred_region
    _
  $region17: #{simple_2d_unet.1} parent=0 // pred_fallthru
    _
  // Predicated region
  $region18: #{simple_2d_unet.1} parent=0 // pred_check
    _
  $region19: #{simple_2d_unet.1} parent=0 // pred_check_branch
    %23 = sbr.rel (0) target = $region21
  $region20: #{simple_2d_unet.1} parent=0 // pred_region
    _
  $region21: #{simple_2d_unet.1} parent=0 // pred_fallthru
    _
  // Predicated region
  $region22: #{simple_2d_unet.1} parent=0 // pred_check
    _
  $region23: #{simple_2d_unet.1} parent=0 // pred_check_branch
    %25 = sbr.rel (0) target = $region25
  $region24: #{simple_2d_unet.1} parent=0 // pred_region
    _
  $region25: #{simple_2d_unet.1} parent=0 // pred_fallthru
    _
  // Predicated region
  $region26: #{simple_2d_unet.1} parent=0 // pred_check
    _
  $region27: #{simple_2d_unet.1} parent=0 // pred_check_branch
    %27 = sbr.rel (0) target = $region29
  $region28: #{simple_2d_unet.1} parent=0 // pred_region
    _
  $region29: #{simple_2d_unet.1} parent=0 // pred_fallthru
    _
  // Predicated region
  $region30: #{simple_2d_unet.1} parent=0 // pred_check
    _
  $region31: #{simple_2d_unet.1} parent=0 // pred_check_branch
    %29 = sbr.rel (0) target = $region33
  $region32: #{simple_2d_unet.1} parent=0 // pred_region
    _
  $region33: #{simple_2d_unet.1} parent=0 // pred_fallthru
    _
  // Predicated region
  $region34: #{simple_2d_unet.1} parent=0 // pred_check
    _
  $region35: #{simple_2d_unet.1} parent=0 // pred_check_branch
    %31 = sbr.rel (0) target = $region37
  $region36: #{simple_2d_unet.1} parent=0 // pred_region
    _
  $region37: #{simple_2d_unet.1} parent=0 // pred_fallthru
    _
  %v33 = vld [vmem:[%s0] sm:$0xf]
  %v34 = vld [vmem:[%s0 + $0x4] sm:$0xf]
  %v35 = vld [vmem:[%s0 + $0x8] sm:$0x1]
  %v36 = vld [vmem:[%s0] sm:$0xe]
  %v39 = vunpack.c.l.b16 %v33
  %v40 = vunpack.c.l.b16 %v34
  %v41 = vpack.c.b16 %v40, %v39
  %v44 = vunpack.c.l.b16 %v35
  %v45 = vpack.c.b16 %v44, %v44
  %vm46 = vsmask.f32 7424
  %v48 = vshrl.u32 %v41, 16
  %v50 = vshll.u32 %v41, 16
  %v52 = vrot.slane %v50, 1
  %v53 = vor.u32 %v48, %v52
  %v55 = vshll.u32 %v45, 16
  %v57 = vrot.slane %v55, 1
  %v58 = vsel %vm46, %v53, %v57
  %v61 = vunpack.c.l.b16 %v36
  %v62 = vpack.c.b16 %v40, %v61
  %vm63 = vcmask 1046528
  %v64 = vrot.slane %v62, 1
  %v65 = vrot.slane %v45, 1
  %v66 = vsel %vm63, %v64, %v65
  %s68 = scalar_lea.vmem %s0, 12
  %v69 = vld [vmem:[%s68] sm:$0xf]
  %v70 = vld [vmem:[%s68 + $0x4] sm:$0xf]
  %v71 = vld [vmem:[%s68 + $0x8] sm:$0x1]
  %v72 = vld [vmem:[%s68] sm:$0xe]
  %v75 = vunpack.c.l.b16 %v69
  %v76 = vunpack.c.l.b16 %v70
  %v77 = vpack.c.b16 %v76, %v75
  %v80 = vunpack.c.l.b16 %v71
  %v81 = vpack.c.b16 %v80, %v80
  %v83 = vshrl.u32 %v77, 16
  %v85 = vshll.u32 %v77, 16
  %v87 = vrot.slane %v85, 1
  %v88 = vor.u32 %v83, %v87
  %v90 = vshll.u32 %v81, 16
  %v92 = vrot.slane %v90, 1
  %v93 = vsel %vm46, %v88, %v92
  %v96 = vunpack.c.l.b16 %v72
  %v97 = vpack.c.b16 %v76, %v96
  %v98 = vrot.slane %v97, 1
  %v99 = vrot.slane %v81, 1
  %v100 = vsel %vm63, %v98, %v99
  %v102 = vld [vmem:[%s1] sm:$0xff]
  %v103 = vld [vmem:[%s1 + $0x8] sm:$0xff]
  %v104 = vld [vmem:[%s1 + $0x10] sm:$0xff]
  %v105 = vld [vmem:[%s1 + $0x18] sm:$0xff]
  %v106 = vld [vmem:[%s1 + $0x20] sm:$0xff]
  %v107 = vld [vmem:[%s1 + $0x28] sm:$0xff]
  %v108 = vld [vmem:[%s1 + $0x30] sm:$0xff]
  %v109 = vld [vmem:[%s1 + $0x38] sm:$0xff]
  %v110 = vld [vmem:[%s1 + $0x40] sm:$0xff]
  %v111 = vld [vmem:[%s1 + $0x48] sm:$0xff]
  %v112 = vld [vmem:[%s1 + $0x50] sm:$0xff]
  %v113 = vld [vmem:[%s1 + $0x58] sm:$0xff]
  %v114 = vld [vmem:[%s1 + $0x60] sm:$0xff]
  %v115 = vld [vmem:[%s1 + $0x68] sm:$0xff]
  %v116 = vld [vmem:[%s1 + $0x70] sm:$0xff]
  %v117 = vld [vmem:[%s1 + $0x78] sm:$0xff]
  %v118 = vld [vmem:[%s1 + $0x80] sm:$0xff]
  %v119 = vld [vmem:[%s1 + $0x88] sm:$0xff]
  %v120 = vld [vmem:[%s1 + $0x90] sm:$0xff]
  %v121 = vld [vmem:[%s1 + $0x98] sm:$0xff]
  %v122 = vld [vmem:[%s1 + $0xa0] sm:$0xff]
  %v123 = vld [vmem:[%s1 + $0xa8] sm:$0xff]
  %v124 = vld [vmem:[%s1 + $0xb0] sm:$0xff]
  %v125 = vld [vmem:[%s1 + $0xb8] sm:$0xff]
  %v126 = vld [vmem:[%s1 + $0xc0] sm:$0xff]
  %v127 = vld [vmem:[%s1 + $0xc8] sm:$0xff]
  %v128 = vld [vmem:[%s1 + $0xd0] sm:$0xff]
  %v129 = vld [vmem:[%s1 + $0xd8] sm:$0xff]
  %v130 = vld [vmem:[%s1 + $0xe0] sm:$0xff]
  %v131 = vld [vmem:[%s1 + $0xe8] sm:$0xff]
  %v132 = vld [vmem:[%s1 + $0xf0] sm:$0xff]
  %v133 = vld [vmem:[%s1 + $0xf8] sm:$0xff]
  %v134 = vld [vmem:[%s1 + $0x100] sm:$0xff]
  %v135 = vld [vmem:[%s1 + $0x108] sm:$0xff]
  %v136 = vld [vmem:[%s1 + $0x110] sm:$0xff]
  %v137 = vld [vmem:[%s1 + $0x118] sm:$0xff]
  %v138 = vld [vmem:[%s1 + $0x120] sm:$0xff]
  %v139 = vld [vmem:[%s1 + $0x128] sm:$0xff]
  %v140 = vld [vmem:[%s1 + $0x130] sm:$0xff]
  %v141 = vld [vmem:[%s1 + $0x138] sm:$0xff]
  %v142 = vld [vmem:[%s1 + $0x140] sm:$0xff]
  %v143 = vld [vmem:[%s1 + $0x148] sm:$0xff]
  %v144 = vld [vmem:[%s1 + $0x150] sm:$0xff]
  %v145 = vld [vmem:[%s1 + $0x158] sm:$0xff]
  %v146 = vld [vmem:[%s1 + $0x160] sm:$0xff]
  %v147 = vld [vmem:[%s1 + $0x168] sm:$0xff]
  %v148 = vld [vmem:[%s1 + $0x170] sm:$0xff]
  %v149 = vld [vmem:[%s1 + $0x178] sm:$0xff]
  %v150 = vld [vmem:[%s2] sm:$0x3]
  %v152 = vlaneseq
  %v153 = vshrl.u32 %v152, 7
  %v154 = vsub.s32 0, %v153
  %v155 = vrot.slane %v150, %v154
  %v156 = vlaneseq
  %v157 = vshrl.u32 %v156, 7
  %v158 = vsub.s32 1, %v157
  %v159 = vrot.slane %v150, %v158
  %v210 = vunpack.c.l.b16 %v102
  %v211 = vunpack.c.h.b16 %v102
  %v212 = vunpack.c.l.b16 %v103
  %v213 = vunpack.c.h.b16 %v103
  %v214 = vunpack.c.l.b16 %v104
  %v215 = vunpack.c.h.b16 %v104
  %v216 = vunpack.c.l.b16 %v105
  %v217 = vunpack.c.h.b16 %v105
  %v218 = vunpack.c.l.b16 %v106
  %v219 = vunpack.c.h.b16 %v106
  %v220 = vunpack.c.l.b16 %v107
  %v221 = vunpack.c.h.b16 %v107
  %v222 = vunpack.c.l.b16 %v108
  %v223 = vunpack.c.h.b16 %v108
  %v224 = vunpack.c.l.b16 %v109
  %v225 = vunpack.c.h.b16 %v109
  %v226 = vunpack.c.l.b16 %v110
  %v227 = vunpack.c.h.b16 %v110
  %v228 = vunpack.c.l.b16 %v111
  %v229 = vunpack.c.h.b16 %v111
  %v230 = vunpack.c.l.b16 %v112
  %v231 = vunpack.c.h.b16 %v112
  %v232 = vunpack.c.l.b16 %v113
  %v233 = vunpack.c.h.b16 %v113
  %v234 = vunpack.c.l.b16 %v114
  %v235 = vunpack.c.h.b16 %v114
  %v236 = vunpack.c.l.b16 %v115
  %v237 = vunpack.c.h.b16 %v115
  %v238 = vunpack.c.l.b16 %v116
  %v239 = vunpack.c.h.b16 %v116
  %v240 = vunpack.c.l.b16 %v117
  %v241 = vunpack.c.h.b16 %v117
  %v242 = vunpack.c.l.b16 %v118
  %v243 = vunpack.c.h.b16 %v118
  %v244 = vunpack.c.l.b16 %v119
  %v245 = vunpack.c.h.b16 %v119
  %v246 = vunpack.c.l.b16 %v120
  %v247 = vunpack.c.h.b16 %v120
  %v248 = vunpack.c.l.b16 %v121
  %v249 = vunpack.c.h.b16 %v121
  %v250 = vunpack.c.l.b16 %v122
  %v251 = vunpack.c.h.b16 %v122
  %v252 = vunpack.c.l.b16 %v123
  %v253 = vunpack.c.h.b16 %v123
  %v254 = vunpack.c.l.b16 %v124
  %v255 = vunpack.c.h.b16 %v124
  %v256 = vunpack.c.l.b16 %v125
  %v257 = vunpack.c.h.b16 %v125
  %v258 = vunpack.c.l.b16 %v126
  %v259 = vunpack.c.h.b16 %v126
  %v260 = vunpack.c.l.b16 %v127
  %v261 = vunpack.c.h.b16 %v127
  %v262 = vunpack.c.l.b16 %v128
  %v263 = vunpack.c.h.b16 %v128
  %v264 = vunpack.c.l.b16 %v129
  %v265 = vunpack.c.h.b16 %v129
  %v266 = vunpack.c.l.b16 %v130
  %v267 = vunpack.c.h.b16 %v130
  %v268 = vunpack.c.l.b16 %v131
  %v269 = vunpack.c.h.b16 %v131
  %v270 = vunpack.c.l.b16 %v132
  %v271 = vunpack.c.h.b16 %v132
  %v272 = vunpack.c.l.b16 %v133
  %v273 = vunpack.c.h.b16 %v133
  %v274 = vunpack.c.l.b16 %v134
  %v275 = vunpack.c.h.b16 %v134
  %v276 = vunpack.c.l.b16 %v135
  %v277 = vunpack.c.h.b16 %v135
  %v278 = vunpack.c.l.b16 %v136
  %v279 = vunpack.c.h.b16 %v136
  %v280 = vunpack.c.l.b16 %v137
  %v281 = vunpack.c.h.b16 %v137
  %v282 = vunpack.c.l.b16 %v138
  %v283 = vunpack.c.h.b16 %v138
  %v284 = vunpack.c.l.b16 %v139
  %v285 = vunpack.c.h.b16 %v139
  %v286 = vunpack.c.l.b16 %v140
  %v287 = vunpack.c.h.b16 %v140
  %v288 = vunpack.c.l.b16 %v141
  %v289 = vunpack.c.h.b16 %v141
  %v290 = vunpack.c.l.b16 %v142
  %v291 = vunpack.c.h.b16 %v142
  %v292 = vunpack.c.l.b16 %v143
  %v293 = vunpack.c.h.b16 %v143
  %v294 = vunpack.c.l.b16 %v144
  %v295 = vunpack.c.h.b16 %v144
  %v296 = vunpack.c.l.b16 %v145
  %v297 = vunpack.c.h.b16 %v145
  %v298 = vunpack.c.l.b16 %v146
  %v299 = vunpack.c.h.b16 %v146
  %v300 = vunpack.c.l.b16 %v147
  %v301 = vunpack.c.h.b16 %v147
  %v302 = vunpack.c.l.b16 %v148
  %v303 = vunpack.c.h.b16 %v148
  %v304 = vunpack.c.l.b16 %v149
  %v305 = vunpack.c.h.b16 %v149
  %v306 = vpack.c.b16 %v212, %v210
  %v307 = vpack.c.b16 %v213, %v211
  %v308 = vpack.c.b16 %v216, %v214
  %v309 = vpack.c.b16 %v217, %v215
  %v310 = vpack.c.b16 %v220, %v218
  %v311 = vpack.c.b16 %v221, %v219
  %v312 = vpack.c.b16 %v224, %v222
  %v313 = vpack.c.b16 %v225, %v223
  %v314 = vpack.c.b16 %v228, %v226
  %v315 = vpack.c.b16 %v229, %v227
  %v316 = vpack.c.b16 %v232, %v230
  %v317 = vpack.c.b16 %v233, %v231
  %v318 = vpack.c.b16 %v236, %v234
  %v319 = vpack.c.b16 %v237, %v235
  %v320 = vpack.c.b16 %v240, %v238
  %v321 = vpack.c.b16 %v241, %v239
  %v322 = vpack.c.b16 %v244, %v242
  %v323 = vpack.c.b16 %v245, %v243
  %v324 = vpack.c.b16 %v248, %v246
  %v325 = vpack.c.b16 %v249, %v247
  %v326 = vpack.c.b16 %v252, %v250
  %v327 = vpack.c.b16 %v253, %v251
  %v328 = vpack.c.b16 %v256, %v254
  %v329 = vpack.c.b16 %v257, %v255
  %v330 = vpack.c.b16 %v260, %v258
  %v331 = vpack.c.b16 %v261, %v259
  %v332 = vpack.c.b16 %v264, %v262
  %v333 = vpack.c.b16 %v265, %v263
  %v334 = vpack.c.b16 %v268, %v266
  %v335 = vpack.c.b16 %v269, %v267
  %v336 = vpack.c.b16 %v272, %v270
  %v337 = vpack.c.b16 %v273, %v271
  %v338 = vpack.c.b16 %v276, %v274
  %v339 = vpack.c.b16 %v277, %v275
  %v340 = vpack.c.b16 %v280, %v278
  %v341 = vpack.c.b16 %v281, %v279
  %v342 = vpack.c.b16 %v284, %v282
  %v343 = vpack.c.b16 %v285, %v283
  %v344 = vpack.c.b16 %v288, %v286
  %v345 = vpack.c.b16 %v289, %v287
  %v346 = vpack.c.b16 %v292, %v290
  %v347 = vpack.c.b16 %v293, %v291
  %v348 = vpack.c.b16 %v296, %v294
  %v349 = vpack.c.b16 %v297, %v295
  %v350 = vpack.c.b16 %v300, %v298
  %v351 = vpack.c.b16 %v301, %v299
  %v352 = vpack.c.b16 %v304, %v302
  %v353 = vpack.c.b16 %v305, %v303
  %402 = vmatprep.subr.bf16.mxu0 %v321
  %403 = vmatpush1.bf16.msra.mxu0 %v320
  %404 = vmatprep.subr.bf16.mxu0 %v319
  %405 = vmatpush1.bf16.msra.mxu0 %v318
  %406 = vmatprep.subr.bf16.mxu0 %v317
  %407 = vmatpush1.bf16.msra.mxu0 %v316
  %408 = vmatprep.subr.bf16.mxu0 %v315
  %409 = vmatpush1.bf16.msra.mxu0 %v314
  %410 = vmatprep.subr.bf16.mxu0 %v313
  %411 = vmatpush1.bf16.msra.mxu0 %v312
  %412 = vmatprep.subr.bf16.mxu0 %v311
  %413 = vmatpush1.bf16.msra.mxu0 %v310
  %414 = vmatprep.subr.bf16.mxu0 %v309
  %415 = vmatpush1.bf16.msra.mxu0 %v308
  %416 = vmatprep.subr.bf16.mxu0 %v307
  %417 = vmatpush1.bf16.msra.mxu0 %v306
  %418 = vmatprep.subr.bf16.mxu0 %v337
  %419 = vmatpush2.bf16.msra.mxu0 %v336
  %420 = vmatprep.subr.bf16.mxu0 %v335
  %421 = vmatpush2.bf16.msra.mxu0 %v334
  %422 = vmatprep.subr.bf16.mxu0 %v333
  %423 = vmatpush2.bf16.msra.mxu0 %v332
  %424 = vmatprep.subr.bf16.mxu0 %v331
  %425 = vmatpush2.bf16.msra.mxu0 %v330
  %426 = vmatprep.subr.bf16.mxu0 %v329
  %427 = vmatpush2.bf16.msra.mxu0 %v328
  %428 = vmatprep.subr.bf16.mxu0 %v327
  %429 = vmatpush2.bf16.msra.mxu0 %v326
  %430 = vmatprep.subr.bf16.mxu0 %v325
  %431 = vmatpush2.bf16.msra.mxu0 %v324
  %432 = vmatprep.subr.bf16.mxu0 %v323
  %433 = vmatpush2.bf16.msra.mxu0 %v322
  %434 = vmatprep.mubr.bf16.mxu0 %v58
  %435 = vmatmul.mubr.bf16.gmra.mxu0 %v41
  %v436 = vpop.f32.mrf.mxu0
  %v437 = vadd.f32 %v155, %v436
  %v438 = vpop.f32.mrf.mxu0
  %v439 = vadd.f32 %v159, %v438
  %v440 = vpop.f32.mrf.mxu0
  %v441 = vadd.f32 %v155, %v440
  %v442 = vpop.f32.mrf.mxu0
  %v443 = vadd.f32 %v159, %v442
  %444 = vmatprep.mubr.bf16.mxu0 %v93
  %445 = vmatmul.mubr.bf16.gmra.mxu0 %v77
  %v446 = vpop.f32.mrf.mxu0
  %v447 = vadd.f32 %v155, %v446
  %v448 = vpop.f32.mrf.mxu0
  %v449 = vadd.f32 %v159, %v448
  %v450 = vpop.f32.mrf.mxu0
  %v451 = vadd.f32 %v155, %v450
  %v452 = vpop.f32.mrf.mxu0
  %v453 = vadd.f32 %v159, %v452
  %454 = vdwg.mxu0
  %455 = vmatprep.subr.bf16.mxu0 %v353
  %456 = vmatpush1.bf16.msra.mxu0 %v352
  %457 = vmatprep.subr.bf16.mxu0 %v351
  %458 = vmatpush1.bf16.msra.mxu0 %v350
  %459 = vmatprep.subr.bf16.mxu0 %v349
  %460 = vmatpush1.bf16.msra.mxu0 %v348
  %461 = vmatprep.subr.bf16.mxu0 %v347
  %462 = vmatpush1.bf16.msra.mxu0 %v346
  %463 = vmatprep.subr.bf16.mxu0 %v345
  %464 = vmatpush1.bf16.msra.mxu0 %v344
  %465 = vmatprep.subr.bf16.mxu0 %v343
  %466 = vmatpush1.bf16.msra.mxu0 %v342
  %467 = vmatprep.subr.bf16.mxu0 %v341
  %468 = vmatpush1.bf16.msra.mxu0 %v340
  %469 = vmatprep.subr.bf16.mxu0 %v339
  %470 = vmatpush1.bf16.msra.mxu0 %v338
  %471 = vmatprep.subr.bf16.mxu0 0
  %472 = vmatpush2.bf16.msra.mxu0 0
  %473 = vmatprep.subr.bf16.mxu0 0
  %474 = vmatpush2.bf16.msra.mxu0 0
  %475 = vmatprep.subr.bf16.mxu0 0
  %476 = vmatpush2.bf16.msra.mxu0 0
  %477 = vmatprep.subr.bf16.mxu0 0
  %478 = vmatpush2.bf16.msra.mxu0 0
  %479 = vmatprep.subr.bf16.mxu0 0
  %480 = vmatpush2.bf16.msra.mxu0 0
  %481 = vmatprep.subr.bf16.mxu0 0
  %482 = vmatpush2.bf16.msra.mxu0 0
  %483 = vmatprep.subr.bf16.mxu0 0
  %484 = vmatpush2.bf16.msra.mxu0 0
  %485 = vmatprep.subr.bf16.mxu0 0
  %486 = vmatpush2.bf16.msra.mxu0 0
  %487 = vmatprep.mubr.bf16.mxu0 0
  %488 = vmatmul.mubr.bf16.gmra.mxu0 %v66
  %v489 = vpop.f32.mrf.mxu0
  %v490 = vadd.f32 %v437, %v489
  %v491 = vpop.f32.mrf.mxu0
  %v492 = vadd.f32 %v439, %v491
  %v493 = vpop.f32.mrf.mxu0
  %v494 = vadd.f32 %v441, %v493
  %v495 = vpop.f32.mrf.mxu0
  %v496 = vadd.f32 %v443, %v495
  %497 = vmatprep.mubr.bf16.mxu0 0
  %498 = vmatmul.mubr.bf16.gmra.mxu0 %v100
  %v499 = vpop.f32.mrf.mxu0
  %v500 = vadd.f32 %v447, %v499
  %v501 = vpop.f32.mrf.mxu0
  %v502 = vadd.f32 %v449, %v501
  %v503 = vpop.f32.mrf.mxu0
  %v504 = vadd.f32 %v451, %v503
  %v505 = vpop.f32.mrf.mxu0
  %v506 = vadd.f32 %v453, %v505
  %507 = vdwg.mxu0
  %v508 = vmax.f32 %v490, 0.0
  %v509 = vmax.f32 %v492, 0.0
  %v510 = vmax.f32 %v494, 0.0
  %v511 = vmax.f32 %v496, 0.0
  %v512 = vmax.f32 %v500, 0.0
  %v513 = vmax.f32 %v502, 0.0
  %v514 = vmax.f32 %v504, 0.0
  %v515 = vmax.f32 %v506, 0.0
  %vm516 = vcmask 1040384
  %vm517 = vsmask.f32 256
  %vm518 = vmand %vm516, %vm517
  %vm519 = vcmask 1044484
  %vm520 = vsmask.f32 4352
  %vm521 = vmand %vm519, %vm520
  %vm522 = vmor %vm521, %vm518
  %v523 = vld [vmem:[#allocation2] sm:$0x11]
  %v524 = vsel %vm522, 0, %v523
  %525 = vst [vmem:[#allocation2] sm:$0x11] %v524
  %v526 = vld [vmem:[#allocation2 + $0x18] sm:$0x11]
  %v527 = vsel %vm522, 0, %v526
  %528 = vst [vmem:[#allocation2 + $0x18] sm:$0x11] %v527
  %vm529 = vsmask.f32 7938
  %vm530 = vmand %vm516, %vm529
  %vm531 = vsmask.f32 7954
  %vm532 = vmand %vm519, %vm531
  %vm533 = vmor %vm532, %vm530
  %v534 = vld [vmem:[#allocation2 + $0x10] sm:$0x11]
  %v535 = vsel %vm533, 0, %v534
  %536 = vst [vmem:[#allocation2 + $0x10] sm:$0x11] %v535
  %v537 = vld [vmem:[#allocation2 + $0x28] sm:$0x11]
  %v538 = vsel %vm533, 0, %v537
  %539 = vst [vmem:[#allocation2 + $0x28] sm:$0x11] %v538
  %v540 = vpack.c.bf16 %v510, %v508
  %v541 = vpack.c.bf16 %v511, %v509
  %v542 = vpack.c.bf16 %v514, %v512
  %v543 = vpack.c.bf16 %v515, %v513
  %v548 = vunpack.c.l.b16 %v540
  %v549 = vunpack.c.l.b16 %v541
  %v550 = vunpack.c.h.b16 %v540
  %v551 = vunpack.c.h.b16 %v541
  %v552 = vunpack.c.l.b16 %v542
  %v553 = vunpack.c.l.b16 %v543
  %v554 = vunpack.c.h.b16 %v542
  %v555 = vunpack.c.h.b16 %v543
  %v556 = vpack.c.b16 %v549, %v548
  %v557 = vpack.c.b16 %v551, %v550
  %v558 = vpack.c.b16 %v553, %v552
  %v559 = vpack.c.b16 %v555, %v554
  %vm560 = vsmask.f32 4368
  %vm561 = vmor %vm517, %vm560
  %v563 = vshrl.u32 %v556, 16
  %v565 = vrot.slane %v563, 7
  %v566 = vshll.u32 %v556, 16
  %v568 = vor.u32 %v565, %v566
  %v569 = vrot.slane %v565, 4
  %v571 = vshrl.u32 %v557, 16
  %v573 = vrot.slane %v571, 7
  %v574 = vshll.u32 %v557, 16
  %v576 = vor.u32 %v573, %v574
  %v577 = vsel %vm561, %v569, %v576
  %v578 = vrot.slane %v573, 4
  %v580 = vshrl.u32 %v558, 16
  %v582 = vrot.slane %v580, 7
  %v583 = vshll.u32 %v558, 16
  %v585 = vor.u32 %v582, %v583
  %v586 = vrot.slane %v582, 4
  %v588 = vshrl.u32 %v559, 16
  %v590 = vrot.slane %v588, 7
  %v591 = vshll.u32 %v559, 16
  %v593 = vor.u32 %v590, %v591
  %v594 = vsel %vm561, %v586, %v593
  %v595 = vrot.slane %v590, 4
  %vm602 = vcmask 1043456
  %vm603 = vmand %vm602, %vm529
  %vm604 = vcmask 1047556
  %vm605 = vmand %vm604, %vm531
  %vm606 = vmor %vm605, %vm603
  %v607 = vld [vmem:[#allocation2] sm:$0xff]
  %v608 = vsel %vm606, %v568, %v607
  %609 = vst [vmem:[#allocation2] sm:$0xff] %v608
  %610 = vst [vmem:[#allocation2 + $0x8] sm:$0xff] %v577
  %v611 = vld [vmem:[#allocation2 + $0x10] sm:$0x11]
  %v612 = vsel %vm522, %v578, %v611
  %613 = vst [vmem:[#allocation2 + $0x10] sm:$0x11] %v612
  %v614 = vld [vmem:[#allocation2 + $0x18] sm:$0xff]
  %v615 = vsel %vm606, %v585, %v614
  %616 = vst [vmem:[#allocation2 + $0x18] sm:$0xff] %v615
  %617 = vst [vmem:[#allocation2 + $0x20] sm:$0xff] %v594
  %v618 = vld [vmem:[#allocation2 + $0x28] sm:$0x11]
  %v619 = vsel %vm522, %v595, %v618
  %620 = vst [vmem:[#allocation2 + $0x28] sm:$0x11] %v619
  %v621 = vld [vmem:[#allocation2] sm:$0xff]
  %v622 = vld [vmem:[#allocation2 + $0x8] sm:$0xff]
  %v623 = vld [vmem:[#allocation2 + $0x10] sm:$0x11]
  %v624 = vld [vmem:[#allocation2] sm:$0xee]
  %v627 = vunpack.c.l.b16 %v621
  %v628 = vunpack.c.h.b16 %v621
  %v629 = vunpack.c.l.b16 %v622
  %v630 = vunpack.c.h.b16 %v622
  %v631 = vpack.c.b16 %v629, %v627
  %v632 = vpack.c.b16 %v630, %v628
  %v636 = vunpack.c.l.b16 %v623
  %v637 = vunpack.c.h.b16 %v623
  %v638 = vpack.c.b16 %v636, %v636
  %v639 = vpack.c.b16 %v637, %v637
  %v641 = vshrl.u32 %v631, 16
  %v643 = vshll.u32 %v631, 16
  %v645 = vrot.slane %v643, 1
  %v646 = vor.u32 %v641, %v645
  %v648 = vshll.u32 %v638, 16
  %v650 = vrot.slane %v648, 1
  %v651 = vsel %vm46, %v646, %v650
  %v653 = vshrl.u32 %v632, 16
  %v655 = vshll.u32 %v632, 16
  %v657 = vrot.slane %v655, 1
  %v658 = vor.u32 %v653, %v657
  %v660 = vshll.u32 %v639, 16
  %v662 = vrot.slane %v660, 1
  %v663 = vsel %vm46, %v658, %v662
  %v667 = vunpack.c.l.b16 %v624
  %v668 = vunpack.c.h.b16 %v624
  %v669 = vpack.c.b16 %v629, %v667
  %v670 = vpack.c.b16 %v630, %v668
  %v671 = vrot.slane %v669, 1
  %v672 = vrot.slane %v638, 1
  %v673 = vsel %vm63, %v671, %v672
  %v674 = vrot.slane %v670, 1
  %v675 = vrot.slane %v639, 1
  %v676 = vsel %vm63, %v674, %v675
  %s679 = scalar_lea.vmem [#allocation2], 24
  %v680 = vld [vmem:[%s679] sm:$0xff]
  %v681 = vld [vmem:[%s679 + $0x8] sm:$0xff]
  %v682 = vld [vmem:[%s679 + $0x10] sm:$0x11]
  %v683 = vld [vmem:[%s679] sm:$0xee]
  %v686 = vunpack.c.l.b16 %v680
  %v687 = vunpack.c.h.b16 %v680
  %v688 = vunpack.c.l.b16 %v681
  %v689 = vunpack.c.h.b16 %v681
  %v690 = vpack.c.b16 %v688, %v686
  %v691 = vpack.c.b16 %v689, %v687
  %v695 = vunpack.c.l.b16 %v682
  %v696 = vunpack.c.h.b16 %v682
  %v697 = vpack.c.b16 %v695, %v695
  %v698 = vpack.c.b16 %v696, %v696
  %v700 = vshrl.u32 %v690, 16
  %v702 = vshll.u32 %v690, 16
  %v704 = vrot.slane %v702, 1
  %v705 = vor.u32 %v700, %v704
  %v707 = vshll.u32 %v697, 16
  %v709 = vrot.slane %v707, 1
  %v710 = vsel %vm46, %v705, %v709
  %v712 = vshrl.u32 %v691, 16
  %v714 = vshll.u32 %v691, 16
  %v716 = vrot.slane %v714, 1
  %v717 = vor.u32 %v712, %v716
  %v719 = vshll.u32 %v698, 16
  %v721 = vrot.slane %v719, 1
  %v722 = vsel %vm46, %v717, %v721
  %v726 = vunpack.c.l.b16 %v683
  %v727 = vunpack.c.h.b16 %v683
  %v728 = vpack.c.b16 %v688, %v726
  %v729 = vpack.c.b16 %v689, %v727
  %v730 = vrot.slane %v728, 1
  %v731 = vrot.slane %v697, 1
  %v732 = vsel %vm63, %v730, %v731
  %v733 = vrot.slane %v729, 1
  %v734 = vrot.slane %v698, 1
  %v735 = vsel %vm63, %v733, %v734
  %v738 = vld [vmem:[%s3] sm:$0xff]
  %v739 = vld [vmem:[%s3 + $0x8] sm:$0xff]
  %v740 = vld [vmem:[%s3 + $0x10] sm:$0xff]
  %v741 = vld [vmem:[%s3 + $0x18] sm:$0xff]
  %v742 = vld [vmem:[%s3 + $0x20] sm:$0xff]
  %v743 = vld [vmem:[%s3 + $0x28] sm:$0xff]
  %v744 = vld [vmem:[%s3 + $0x30] sm:$0xff]
  %v745 = vld [vmem:[%s3 + $0x38] sm:$0xff]
  %v746 = vld [vmem:[%s3 + $0x40] sm:$0xff]
  %v747 = vld [vmem:[%s3 + $0x48] sm:$0xff]
  %v748 = vld [vmem:[%s3 + $0x50] sm:$0xff]
  %v749 = vld [vmem:[%s3 + $0x58] sm:$0xff]
  %v750 = vld [vmem:[%s3 + $0x60] sm:$0xff]
  %v751 = vld [vmem:[%s3 + $0x68] sm:$0xff]
  %v752 = vld [vmem:[%s3 + $0x70] sm:$0xff]
  %v753 = vld [vmem:[%s3 + $0x78] sm:$0xff]
  %v754 = vld [vmem:[%s3 + $0x80] sm:$0xff]
  %v755 = vld [vmem:[%s3 + $0x88] sm:$0xff]
  %v756 = vld [vmem:[%s3 + $0x90] sm:$0xff]
  %v757 = vld [vmem:[%s3 + $0x98] sm:$0xff]
  %v758 = vld [vmem:[%s3 + $0xa0] sm:$0xff]
  %v759 = vld [vmem:[%s3 + $0xa8] sm:$0xff]
  %v760 = vld [vmem:[%s3 + $0xb0] sm:$0xff]
  %v761 = vld [vmem:[%s3 + $0xb8] sm:$0xff]
  %v762 = vld [vmem:[%s3 + $0xc0] sm:$0xff]
  %v763 = vld [vmem:[%s3 + $0xc8] sm:$0xff]
  %v764 = vld [vmem:[%s3 + $0xd0] sm:$0xff]
  %v765 = vld [vmem:[%s3 + $0xd8] sm:$0xff]
  %v766 = vld [vmem:[%s3 + $0xe0] sm:$0xff]
  %v767 = vld [vmem:[%s3 + $0xe8] sm:$0xff]
  %v768 = vld [vmem:[%s3 + $0xf0] sm:$0xff]
  %v769 = vld [vmem:[%s3 + $0xf8] sm:$0xff]
  %v770 = vld [vmem:[%s3 + $0x100] sm:$0xff]
  %v771 = vld [vmem:[%s3 + $0x108] sm:$0xff]
  %v772 = vld [vmem:[%s3 + $0x110] sm:$0xff]
  %v773 = vld [vmem:[%s3 + $0x118] sm:$0xff]
  %v774 = vld [vmem:[%s3 + $0x120] sm:$0xff]
  %v775 = vld [vmem:[%s3 + $0x128] sm:$0xff]
  %v776 = vld [vmem:[%s3 + $0x130] sm:$0xff]
  %v777 = vld [vmem:[%s3 + $0x138] sm:$0xff]
  %v778 = vld [vmem:[%s3 + $0x140] sm:$0xff]
  %v779 = vld [vmem:[%s3 + $0x148] sm:$0xff]
  %v780 = vld [vmem:[%s3 + $0x150] sm:$0xff]
  %v781 = vld [vmem:[%s3 + $0x158] sm:$0xff]
  %v782 = vld [vmem:[%s3 + $0x160] sm:$0xff]
  %v783 = vld [vmem:[%s3 + $0x168] sm:$0xff]
  %v784 = vld [vmem:[%s3 + $0x170] sm:$0xff]
  %v785 = vld [vmem:[%s3 + $0x178] sm:$0xff]
  %v786 = vld [vmem:[%s3 + $0x180] sm:$0xff]
  %v787 = vld [vmem:[%s3 + $0x188] sm:$0xff]
  %v788 = vld [vmem:[%s3 + $0x190] sm:$0xff]
  %v789 = vld [vmem:[%s3 + $0x198] sm:$0xff]
  %v790 = vld [vmem:[%s3 + $0x1a0] sm:$0xff]
  %v791 = vld [vmem:[%s3 + $0x1a8] sm:$0xff]
  %v792 = vld [vmem:[%s3 + $0x1b0] sm:$0xff]
  %v793 = vld [vmem:[%s3 + $0x1b8] sm:$0xff]
  %v794 = vld [vmem:[%s3 + $0x1c0] sm:$0xff]
  %v795 = vld [vmem:[%s3 + $0x1c8] sm:$0xff]
  %v796 = vld [vmem:[%s3 + $0x1d0] sm:$0xff]
  %v797 = vld [vmem:[%s3 + $0x1d8] sm:$0xff]
  %v798 = vld [vmem:[%s3 + $0x1e0] sm:$0xff]
  %v799 = vld [vmem:[%s3 + $0x1e8] sm:$0xff]
  %v800 = vld [vmem:[%s3 + $0x1f0] sm:$0xff]
  %v801 = vld [vmem:[%s3 + $0x1f8] sm:$0xff]
  %v802 = vld [vmem:[%s3 + $0x200] sm:$0xff]
  %v803 = vld [vmem:[%s3 + $0x208] sm:$0xff]
  %v804 = vld [vmem:[%s3 + $0x210] sm:$0xff]
  %v805 = vld [vmem:[%s3 + $0x218] sm:$0xff]
  %v806 = vld [vmem:[%s3 + $0x220] sm:$0xff]
  %v807 = vld [vmem:[%s3 + $0x228] sm:$0xff]
  %v808 = vld [vmem:[%s3 + $0x230] sm:$0xff]
  %v809 = vld [vmem:[%s3 + $0x238] sm:$0xff]
  %v810 = vld [vmem:[%s3 + $0x240] sm:$0xff]
  %v811 = vld [vmem:[%s3 + $0x248] sm:$0xff]
  %v812 = vld [vmem:[%s3 + $0x250] sm:$0xff]
  %v813 = vld [vmem:[%s3 + $0x258] sm:$0xff]
  %v814 = vld [vmem:[%s3 + $0x260] sm:$0xff]
  %v815 = vld [vmem:[%s3 + $0x268] sm:$0xff]
  %v816 = vld [vmem:[%s3 + $0x270] sm:$0xff]
  %v817 = vld [vmem:[%s3 + $0x278] sm:$0xff]
  %v818 = vld [vmem:[%s3 + $0x280] sm:$0xff]
  %v819 = vld [vmem:[%s3 + $0x288] sm:$0xff]
  %v820 = vld [vmem:[%s3 + $0x290] sm:$0xff]
  %v821 = vld [vmem:[%s3 + $0x298] sm:$0xff]
  %v822 = vld [vmem:[%s3 + $0x2a0] sm:$0xff]
  %v823 = vld [vmem:[%s3 + $0x2a8] sm:$0xff]
  %v824 = vld [vmem:[%s3 + $0x2b0] sm:$0xff]
  %v825 = vld [vmem:[%s3 + $0x2b8] sm:$0xff]
  %v826 = vld [vmem:[%s3 + $0x2c0] sm:$0xff]
  %v827 = vld [vmem:[%s3 + $0x2c8] sm:$0xff]
  %v828 = vld [vmem:[%s3 + $0x2d0] sm:$0xff]
  %v829 = vld [vmem:[%s3 + $0x2d8] sm:$0xff]
  %v830 = vld [vmem:[%s3 + $0x2e0] sm:$0xff]
  %v831 = vld [vmem:[%s3 + $0x2e8] sm:$0xff]
  %v832 = vld [vmem:[%s3 + $0x2f0] sm:$0xff]
  %v833 = vld [vmem:[%s3 + $0x2f8] sm:$0xff]
  %v834 = vld [vmem:[%s3 + $0x300] sm:$0xff]
  %v835 = vld [vmem:[%s3 + $0x308] sm:$0xff]
  %v836 = vld [vmem:[%s3 + $0x310] sm:$0xff]
  %v837 = vld [vmem:[%s3 + $0x318] sm:$0xff]
  %v838 = vld [vmem:[%s3 + $0x320] sm:$0xff]
  %v839 = vld [vmem:[%s3 + $0x328] sm:$0xff]
  %v840 = vld [vmem:[%s3 + $0x330] sm:$0xff]
  %v841 = vld [vmem:[%s3 + $0x338] sm:$0xff]
  %v842 = vld [vmem:[%s3 + $0x340] sm:$0xff]
  %v843 = vld [vmem:[%s3 + $0x348] sm:$0xff]
  %v844 = vld [vmem:[%s3 + $0x350] sm:$0xff]
  %v845 = vld [vmem:[%s3 + $0x358] sm:$0xff]
  %v846 = vld [vmem:[%s3 + $0x360] sm:$0xff]
  %v847 = vld [vmem:[%s3 + $0x368] sm:$0xff]
  %v848 = vld [vmem:[%s3 + $0x370] sm:$0xff]
  %v849 = vld [vmem:[%s3 + $0x378] sm:$0xff]
  %v850 = vld [vmem:[%s3 + $0x380] sm:$0xff]
  %v851 = vld [vmem:[%s3 + $0x388] sm:$0xff]
  %v852 = vld [vmem:[%s3 + $0x390] sm:$0xff]
  %v853 = vld [vmem:[%s3 + $0x398] sm:$0xff]
  %v854 = vld [vmem:[%s3 + $0x3a0] sm:$0xff]
  %v855 = vld [vmem:[%s3 + $0x3a8] sm:$0xff]
  %v856 = vld [vmem:[%s3 + $0x3b0] sm:$0xff]
  %v857 = vld [vmem:[%s3 + $0x3b8] sm:$0xff]
  %v858 = vld [vmem:[%s3 + $0x3c0] sm:$0xff]
  %v859 = vld [vmem:[%s3 + $0x3c8] sm:$0xff]
  %v860 = vld [vmem:[%s3 + $0x3d0] sm:$0xff]
  %v861 = vld [vmem:[%s3 + $0x3d8] sm:$0xff]
  %v862 = vld [vmem:[%s3 + $0x3e0] sm:$0xff]
  %v863 = vld [vmem:[%s3 + $0x3e8] sm:$0xff]
  %v864 = vld [vmem:[%s3 + $0x3f0] sm:$0xff]
  %v865 = vld [vmem:[%s3 + $0x3f8] sm:$0xff]
  %v866 = vld [vmem:[%s3 + $0x400] sm:$0xff]
  %v867 = vld [vmem:[%s3 + $0x408] sm:$0xff]
  %v868 = vld [vmem:[%s3 + $0x410] sm:$0xff]
  %v869 = vld [vmem:[%s3 + $0x418] sm:$0xff]
  %v870 = vld [vmem:[%s3 + $0x420] sm:$0xff]
  %v871 = vld [vmem:[%s3 + $0x428] sm:$0xff]
  %v872 = vld [vmem:[%s3 + $0x430] sm:$0xff]
  %v873 = vld [vmem:[%s3 + $0x438] sm:$0xff]
  %v874 = vld [vmem:[%s3 + $0x440] sm:$0xff]
  %v875 = vld [vmem:[%s3 + $0x448] sm:$0xff]
  %v876 = vld [vmem:[%s3 + $0x450] sm:$0xff]
  %v877 = vld [vmem:[%s3 + $0x458] sm:$0xff]
  %v878 = vld [vmem:[%s3 + $0x460] sm:$0xff]
  %v879 = vld [vmem:[%s3 + $0x468] sm:$0xff]
  %v880 = vld [vmem:[%s3 + $0x470] sm:$0xff]
  %v881 = vld [vmem:[%s3 + $0x478] sm:$0xff]
  %v882 = vld [vmem:[%s3 + $0x480] sm:$0xff]
  %v883 = vld [vmem:[%s3 + $0x488] sm:$0xff]
  %v884 = vld [vmem:[%s3 + $0x490] sm:$0xff]
  %v885 = vld [vmem:[%s3 + $0x498] sm:$0xff]
  %v886 = vld [vmem:[%s3 + $0x4a0] sm:$0xff]
  %v887 = vld [vmem:[%s3 + $0x4a8] sm:$0xff]
  %v888 = vld [vmem:[%s3 + $0x4b0] sm:$0xff]
  %v889 = vld [vmem:[%s3 + $0x4b8] sm:$0xff]
  %v890 = vld [vmem:[%s3 + $0x4c0] sm:$0xff]
  %v891 = vld [vmem:[%s3 + $0x4c8] sm:$0xff]
  %v892 = vld [vmem:[%s3 + $0x4d0] sm:$0xff]
  %v893 = vld [vmem:[%s3 + $0x4d8] sm:$0xff]
  %v894 = vld [vmem:[%s3 + $0x4e0] sm:$0xff]
  %v895 = vld [vmem:[%s3 + $0x4e8] sm:$0xff]
  %v896 = vld [vmem:[%s3 + $0x4f0] sm:$0xff]
  %v897 = vld [vmem:[%s3 + $0x4f8] sm:$0xff]
  %v898 = vld [vmem:[%s3 + $0x500] sm:$0xff]
  %v899 = vld [vmem:[%s3 + $0x508] sm:$0xff]
  %v900 = vld [vmem:[%s3 + $0x510] sm:$0xff]
  %v901 = vld [vmem:[%s3 + $0x518] sm:$0xff]
  %v902 = vld [vmem:[%s3 + $0x520] sm:$0xff]
  %v903 = vld [vmem:[%s3 + $0x528] sm:$0xff]
  %v904 = vld [vmem:[%s3 + $0x530] sm:$0xff]
  %v905 = vld [vmem:[%s3 + $0x538] sm:$0xff]
  %v906 = vld [vmem:[%s3 + $0x540] sm:$0xff]
  %v907 = vld [vmem:[%s3 + $0x548] sm:$0xff]
  %v908 = vld [vmem:[%s3 + $0x550] sm:$0xff]
  %v909 = vld [vmem:[%s3 + $0x558] sm:$0xff]
  %v910 = vld [vmem:[%s3 + $0x560] sm:$0xff]
  %v911 = vld [vmem:[%s3 + $0x568] sm:$0xff]
  %v912 = vld [vmem:[%s3 + $0x570] sm:$0xff]
  %v913 = vld [vmem:[%s3 + $0x578] sm:$0xff]
  %v914 = vld [vmem:[%s3 + $0x580] sm:$0xff]
  %v915 = vld [vmem:[%s3 + $0x588] sm:$0xff]
  %v916 = vld [vmem:[%s3 + $0x590] sm:$0xff]
  %v917 = vld [vmem:[%s3 + $0x598] sm:$0xff]
  %v918 = vld [vmem:[%s3 + $0x5a0] sm:$0xff]
  %v919 = vld [vmem:[%s3 + $0x5a8] sm:$0xff]
  %v920 = vld [vmem:[%s3 + $0x5b0] sm:$0xff]
  %v921 = vld [vmem:[%s3 + $0x5b8] sm:$0xff]
  %v922 = vld [vmem:[%s3 + $0x5c0] sm:$0xff]
  %v923 = vld [vmem:[%s3 + $0x5c8] sm:$0xff]
  %v924 = vld [vmem:[%s3 + $0x5d0] sm:$0xff]
  %v925 = vld [vmem:[%s3 + $0x5d8] sm:$0xff]
  %v926 = vld [vmem:[%s3 + $0x5e0] sm:$0xff]
  %v927 = vld [vmem:[%s3 + $0x5e8] sm:$0xff]
  %v928 = vld [vmem:[%s3 + $0x5f0] sm:$0xff]
  %v929 = vld [vmem:[%s3 + $0x5f8] sm:$0xff]
  %v930 = vld [vmem:[%s4] sm:$0xf]
  %v932 = vlaneseq
  %v933 = vshrl.u32 %v932, 7
  %v934 = vsub.s32 0, %v933
  %v935 = vrot.slane %v930, %v934
  %v936 = vlaneseq
  %v937 = vshrl.u32 %v936, 7
  %v938 = vsub.s32 1, %v937
  %v939 = vrot.slane %v930, %v938
  %v940 = vlaneseq
  %v941 = vshrl.u32 %v940, 7
  %v942 = vsub.s32 2, %v941
  %v943 = vrot.slane %v930, %v942
  %v944 = vlaneseq
  %v945 = vshrl.u32 %v944, 7
  %v946 = vsub.s32 3, %v945
  %v947 = vrot.slane %v930, %v946
  %v1144 = vunpack.c.l.b16 %v738
  %v1145 = vunpack.c.h.b16 %v738
  %v1146 = vunpack.c.l.b16 %v739
  %v1147 = vunpack.c.h.b16 %v739
  %v1148 = vunpack.c.l.b16 %v740
  %v1149 = vunpack.c.h.b16 %v740
  %v1150 = vunpack.c.l.b16 %v741
  %v1151 = vunpack.c.h.b16 %v741
  %v1152 = vunpack.c.l.b16 %v742
  %v1153 = vunpack.c.h.b16 %v742
  %v1154 = vunpack.c.l.b16 %v743
  %v1155 = vunpack.c.h.b16 %v743
  %v1156 = vunpack.c.l.b16 %v744
  %v1157 = vunpack.c.h.b16 %v744
  %v1158 = vunpack.c.l.b16 %v745
  %v1159 = vunpack.c.h.b16 %v745
  %v1160 = vunpack.c.l.b16 %v746
  %v1161 = vunpack.c.h.b16 %v746
  %v1162 = vunpack.c.l.b16 %v747
  %v1163 = vunpack.c.h.b16 %v747
  %v1164 = vunpack.c.l.b16 %v748
  %v1165 = vunpack.c.h.b16 %v748
  %v1166 = vunpack.c.l.b16 %v749
  %v1167 = vunpack.c.h.b16 %v749
  %v1168 = vunpack.c.l.b16 %v750
  %v1169 = vunpack.c.h.b16 %v750
  %v1170 = vunpack.c.l.b16 %v751
  %v1171 = vunpack.c.h.b16 %v751
  %v1172 = vunpack.c.l.b16 %v752
  %v1173 = vunpack.c.h.b16 %v752
  %v1174 = vunpack.c.l.b16 %v753
  %v1175 = vunpack.c.h.b16 %v753
  %v1176 = vunpack.c.l.b16 %v754
  %v1177 = vunpack.c.h.b16 %v754
  %v1178 = vunpack.c.l.b16 %v755
  %v1179 = vunpack.c.h.b16 %v755
  %v1180 = vunpack.c.l.b16 %v756
  %v1181 = vunpack.c.h.b16 %v756
  %v1182 = vunpack.c.l.b16 %v757
  %v1183 = vunpack.c.h.b16 %v757
  %v1184 = vunpack.c.l.b16 %v758
  %v1185 = vunpack.c.h.b16 %v758
  %v1186 = vunpack.c.l.b16 %v759
  %v1187 = vunpack.c.h.b16 %v759
  %v1188 = vunpack.c.l.b16 %v760
  %v1189 = vunpack.c.h.b16 %v760
  %v1190 = vunpack.c.l.b16 %v761
  %v1191 = vunpack.c.h.b16 %v761
  %v1192 = vunpack.c.l.b16 %v762
  %v1193 = vunpack.c.h.b16 %v762
  %v1194 = vunpack.c.l.b16 %v763
  %v1195 = vunpack.c.h.b16 %v763
  %v1196 = vunpack.c.l.b16 %v764
  %v1197 = vunpack.c.h.b16 %v764
  %v1198 = vunpack.c.l.b16 %v765
  %v1199 = vunpack.c.h.b16 %v765
  %v1200 = vunpack.c.l.b16 %v766
  %v1201 = vunpack.c.h.b16 %v766
  %v1202 = vunpack.c.l.b16 %v767
  %v1203 = vunpack.c.h.b16 %v767
  %v1204 = vunpack.c.l.b16 %v768
  %v1205 = vunpack.c.h.b16 %v768
  %v1206 = vunpack.c.l.b16 %v769
  %v1207 = vunpack.c.h.b16 %v769
  %v1208 = vunpack.c.l.b16 %v770
  %v1209 = vunpack.c.h.b16 %v770
  %v1210 = vunpack.c.l.b16 %v771
  %v1211 = vunpack.c.h.b16 %v771
  %v1212 = vunpack.c.l.b16 %v772
  %v1213 = vunpack.c.h.b16 %v772
  %v1214 = vunpack.c.l.b16 %v773
  %v1215 = vunpack.c.h.b16 %v773
  %v1216 = vunpack.c.l.b16 %v774
  %v1217 = vunpack.c.h.b16 %v774
  %v1218 = vunpack.c.l.b16 %v775
  %v1219 = vunpack.c.h.b16 %v775
  %v1220 = vunpack.c.l.b16 %v776
  %v1221 = vunpack.c.h.b16 %v776
  %v1222 = vunpack.c.l.b16 %v777
  %v1223 = vunpack.c.h.b16 %v777
  %v1224 = vunpack.c.l.b16 %v778
  %v1225 = vunpack.c.h.b16 %v778
  %v1226 = vunpack.c.l.b16 %v779
  %v1227 = vunpack.c.h.b16 %v779
  %v1228 = vunpack.c.l.b16 %v780
  %v1229 = vunpack.c.h.b16 %v780
  %v1230 = vunpack.c.l.b16 %v781
  %v1231 = vunpack.c.h.b16 %v781
  %v1232 = vunpack.c.l.b16 %v782
  %v1233 = vunpack.c.h.b16 %v782
  %v1234 = vunpack.c.l.b16 %v783
  %v1235 = vunpack.c.h.b16 %v783
  %v1236 = vunpack.c.l.b16 %v784
  %v1237 = vunpack.c.h.b16 %v784
  %v1238 = vunpack.c.l.b16 %v785
  %v1239 = vunpack.c.h.b16 %v785
  %v1240 = vunpack.c.l.b16 %v786
  %v1241 = vunpack.c.h.b16 %v786
  %v1242 = vunpack.c.l.b16 %v787
  %v1243 = vunpack.c.h.b16 %v787
  %v1244 = vunpack.c.l.b16 %v788
  %v1245 = vunpack.c.h.b16 %v788
  %v1246 = vunpack.c.l.b16 %v789
  %v1247 = vunpack.c.h.b16 %v789
  %v1248 = vunpack.c.l.b16 %v790
  %v1249 = vunpack.c.h.b16 %v790
  %v1250 = vunpack.c.l.b16 %v791
  %v1251 = vunpack.c.h.b16 %v791
  %v1252 = vunpack.c.l.b16 %v792
  %v1253 = vunpack.c.h.b16 %v792
  %v1254 = vunpack.c.l.b16 %v793
  %v1255 = vunpack.c.h.b16 %v793
  %v1256 = vunpack.c.l.b16 %v794
  %v1257 = vunpack.c.h.b16 %v794
  %v1258 = vunpack.c.l.b16 %v795
  %v1259 = vunpack.c.h.b16 %v795
  %v1260 = vunpack.c.l.b16 %v796
  %v1261 = vunpack.c.h.b16 %v796
  %v1262 = vunpack.c.l.b16 %v797
  %v1263 = vunpack.c.h.b16 %v797
  %v1264 = vunpack.c.l.b16 %v798
  %v1265 = vunpack.c.h.b16 %v798
  %v1266 = vunpack.c.l.b16 %v799
  %v1267 = vunpack.c.h.b16 %v799
  %v1268 = vunpack.c.l.b16 %v800
  %v1269 = vunpack.c.h.b16 %v800
  %v1270 = vunpack.c.l.b16 %v801
  %v1271 = vunpack.c.h.b16 %v801
  %v1272 = vunpack.c.l.b16 %v802
  %v1273 = vunpack.c.h.b16 %v802
  %v1274 = vunpack.c.l.b16 %v803
  %v1275 = vunpack.c.h.b16 %v803
  %v1276 = vunpack.c.l.b16 %v804
  %v1277 = vunpack.c.h.b16 %v804
  %v1278 = vunpack.c.l.b16 %v805
  %v1279 = vunpack.c.h.b16 %v805
  %v1280 = vunpack.c.l.b16 %v806
  %v1281 = vunpack.c.h.b16 %v806
  %v1282 = vunpack.c.l.b16 %v807
  %v1283 = vunpack.c.h.b16 %v807
  %v1284 = vunpack.c.l.b16 %v808
  %v1285 = vunpack.c.h.b16 %v808
  %v1286 = vunpack.c.l.b16 %v809
  %v1287 = vunpack.c.h.b16 %v809
  %v1288 = vunpack.c.l.b16 %v810
  %v1289 = vunpack.c.h.b16 %v810
  %v1290 = vunpack.c.l.b16 %v811
  %v1291 = vunpack.c.h.b16 %v811
  %v1292 = vunpack.c.l.b16 %v812
  %v1293 = vunpack.c.h.b16 %v812
  %v1294 = vunpack.c.l.b16 %v813
  %v1295 = vunpack.c.h.b16 %v813
  %v1296 = vunpack.c.l.b16 %v814
  %v1297 = vunpack.c.h.b16 %v814
  %v1298 = vunpack.c.l.b16 %v815
  %v1299 = vunpack.c.h.b16 %v815
  %v1300 = vunpack.c.l.b16 %v816
  %v1301 = vunpack.c.h.b16 %v816
  %v1302 = vunpack.c.l.b16 %v817
  %v1303 = vunpack.c.h.b16 %v817
  %v1304 = vunpack.c.l.b16 %v818
  %v1305 = vunpack.c.h.b16 %v818
  %v1306 = vunpack.c.l.b16 %v819
  %v1307 = vunpack.c.h.b16 %v819
  %v1308 = vunpack.c.l.b16 %v820
  %v1309 = vunpack.c.h.b16 %v820
  %v1310 = vunpack.c.l.b16 %v821
  %v1311 = vunpack.c.h.b16 %v821
  %v1312 = vunpack.c.l.b16 %v822
  %v1313 = vunpack.c.h.b16 %v822
  %v1314 = vunpack.c.l.b16 %v823
  %v1315 = vunpack.c.h.b16 %v823
  %v1316 = vunpack.c.l.b16 %v824
  %v1317 = vunpack.c.h.b16 %v824
  %v1318 = vunpack.c.l.b16 %v825
  %v1319 = vunpack.c.h.b16 %v825
  %v1320 = vunpack.c.l.b16 %v826
  %v1321 = vunpack.c.h.b16 %v826
  %v1322 = vunpack.c.l.b16 %v827
  %v1323 = vunpack.c.h.b16 %v827
  %v1324 = vunpack.c.l.b16 %v828
  %v1325 = vunpack.c.h.b16 %v828
  %v1326 = vunpack.c.l.b16 %v829
  %v1327 = vunpack.c.h.b16 %v829
  %v1328 = vunpack.c.l.b16 %v830
  %v1329 = vunpack.c.h.b16 %v830
  %v1330 = vunpack.c.l.b16 %v831
  %v1331 = vunpack.c.h.b16 %v831
  %v1332 = vunpack.c.l.b16 %v832
  %v1333 = vunpack.c.h.b16 %v832
  %v1334 = vunpack.c.l.b16 %v833
  %v1335 = vunpack.c.h.b16 %v833
  %v1336 = vunpack.c.l.b16 %v834
  %v1337 = vunpack.c.h.b16 %v834
  %v1338 = vunpack.c.l.b16 %v835
  %v1339 = vunpack.c.h.b16 %v835
  %v1340 = vunpack.c.l.b16 %v836
  %v1341 = vunpack.c.h.b16 %v836
  %v1342 = vunpack.c.l.b16 %v837
  %v1343 = vunpack.c.h.b16 %v837
  %v1344 = vunpack.c.l.b16 %v838
  %v1345 = vunpack.c.h.b16 %v838
  %v1346 = vunpack.c.l.b16 %v839
  %v1347 = vunpack.c.h.b16 %v839
  %v1348 = vunpack.c.l.b16 %v840
  %v1349 = vunpack.c.h.b16 %v840
  %v1350 = vunpack.c.l.b16 %v841
  %v1351 = vunpack.c.h.b16 %v841
  %v1352 = vunpack.c.l.b16 %v842
  %v1353 = vunpack.c.h.b16 %v842
  %v1354 = vunpack.c.l.b16 %v843
  %v1355 = vunpack.c.h.b16 %v843
  %v1356 = vunpack.c.l.b16 %v844
  %v1357 = vunpack.c.h.b16 %v844
  %v1358 = vunpack.c.l.b16 %v845
  %v1359 = vunpack.c.h.b16 %v845
  %v1360 = vunpack.c.l.b16 %v846
  %v1361 = vunpack.c.h.b16 %v846
  %v1362 = vunpack.c.l.b16 %v847
  %v1363 = vunpack.c.h.b16 %v847
  %v1364 = vunpack.c.l.b16 %v848
  %v1365 = vunpack.c.h.b16 %v848
  %v1366 = vunpack.c.l.b16 %v849
  %v1367 = vunpack.c.h.b16 %v849
  %v1368 = vunpack.c.l.b16 %v850
  %v1369 = vunpack.c.h.b16 %v850
  %v1370 = vunpack.c.l.b16 %v851
  %v1371 = vunpack.c.h.b16 %v851
  %v1372 = vunpack.c.l.b16 %v852
  %v1373 = vunpack.c.h.b16 %v852
  %v1374 = vunpack.c.l.b16 %v853
  %v1375 = vunpack.c.h.b16 %v853
  %v1376 = vunpack.c.l.b16 %v854
  %v1377 = vunpack.c.h.b16 %v854
  %v1378 = vunpack.c.l.b16 %v855
  %v1379 = vunpack.c.h.b16 %v855
  %v1380 = vunpack.c.l.b16 %v856
  %v1381 = vunpack.c.h.b16 %v856
  %v1382 = vunpack.c.l.b16 %v857
  %v1383 = vunpack.c.h.b16 %v857
  %v1384 = vunpack.c.l.b16 %v858
  %v1385 = vunpack.c.h.b16 %v858
  %v1386 = vunpack.c.l.b16 %v859
  %v1387 = vunpack.c.h.b16 %v859
  %v1388 = vunpack.c.l.b16 %v860
  %v1389 = vunpack.c.h.b16 %v860
  %v1390 = vunpack.c.l.b16 %v861
  %v1391 = vunpack.c.h.b16 %v861
  %v1392 = vunpack.c.l.b16 %v862
  %v1393 = vunpack.c.h.b16 %v862
  %v1394 = vunpack.c.l.b16 %v863
  %v1395 = vunpack.c.h.b16 %v863
  %v1396 = vunpack.c.l.b16 %v864
  %v1397 = vunpack.c.h.b16 %v864
  %v1398 = vunpack.c.l.b16 %v865
  %v1399 = vunpack.c.h.b16 %v865
  %v1400 = vunpack.c.l.b16 %v866
  %v1401 = vunpack.c.h.b16 %v866
  %v1402 = vunpack.c.l.b16 %v867
  %v1403 = vunpack.c.h.b16 %v867
  %v1404 = vunpack.c.l.b16 %v868
  %v1405 = vunpack.c.h.b16 %v868
  %v1406 = vunpack.c.l.b16 %v869
  %v1407 = vunpack.c.h.b16 %v869
  %v1408 = vunpack.c.l.b16 %v870
  %v1409 = vunpack.c.h.b16 %v870
  %v1410 = vunpack.c.l.b16 %v871
  %v1411 = vunpack.c.h.b16 %v871
  %v1412 = vunpack.c.l.b16 %v872
  %v1413 = vunpack.c.h.b16 %v872
  %v1414 = vunpack.c.l.b16 %v873
  %v1415 = vunpack.c.h.b16 %v873
  %v1416 = vunpack.c.l.b16 %v874
  %v1417 = vunpack.c.h.b16 %v874
  %v1418 = vunpack.c.l.b16 %v875
  %v1419 = vunpack.c.h.b16 %v875
  %v1420 = vunpack.c.l.b16 %v876
  %v1421 = vunpack.c.h.b16 %v876
  %v1422 = vunpack.c.l.b16 %v877
  %v1423 = vunpack.c.h.b16 %v877
  %v1424 = vunpack.c.l.b16 %v878
  %v1425 = vunpack.c.h.b16 %v878
  %v1426 = vunpack.c.l.b16 %v879
  %v1427 = vunpack.c.h.b16 %v879
  %v1428 = vunpack.c.l.b16 %v880
  %v1429 = vunpack.c.h.b16 %v880
  %v1430 = vunpack.c.l.b16 %v881
  %v1431 = vunpack.c.h.b16 %v881
  %v1432 = vunpack.c.l.b16 %v882
  %v1433 = vunpack.c.h.b16 %v882
  %v1434 = vunpack.c.l.b16 %v883
  %v1435 = vunpack.c.h.b16 %v883
  %v1436 = vunpack.c.l.b16 %v884
  %v1437 = vunpack.c.h.b16 %v884
  %v1438 = vunpack.c.l.b16 %v885
  %v1439 = vunpack.c.h.b16 %v885
  %v1440 = vunpack.c.l.b16 %v886
  %v1441 = vunpack.c.h.b16 %v886
  %v1442 = vunpack.c.l.b16 %v887
  %v1443 = vunpack.c.h.b16 %v887
  %v1444 = vunpack.c.l.b16 %v888
  %v1445 = vunpack.c.h.b16 %v888
  %v1446 = vunpack.c.l.b16 %v889
  %v1447 = vunpack.c.h.b16 %v889
  %v1448 = vunpack.c.l.b16 %v890
  %v1449 = vunpack.c.h.b16 %v890
  %v1450 = vunpack.c.l.b16 %v891
  %v1451 = vunpack.c.h.b16 %v891
  %v1452 = vunpack.c.l.b16 %v892
  %v1453 = vunpack.c.h.b16 %v892
  %v1454 = vunpack.c.l.b16 %v893
  %v1455 = vunpack.c.h.b16 %v893
  %v1456 = vunpack.c.l.b16 %v894
  %v1457 = vunpack.c.h.b16 %v894
  %v1458 = vunpack.c.l.b16 %v895
  %v1459 = vunpack.c.h.b16 %v895
  %v1460 = vunpack.c.l.b16 %v896
  %v1461 = vunpack.c.h.b16 %v896
  %v1462 = vunpack.c.l.b16 %v897
  %v1463 = vunpack.c.h.b16 %v897
  %v1464 = vunpack.c.l.b16 %v898
  %v1465 = vunpack.c.h.b16 %v898
  %v1466 = vunpack.c.l.b16 %v899
  %v1467 = vunpack.c.h.b16 %v899
  %v1468 = vunpack.c.l.b16 %v900
  %v1469 = vunpack.c.h.b16 %v900
  %v1470 = vunpack.c.l.b16 %v901
  %v1471 = vunpack.c.h.b16 %v901
  %v1472 = vunpack.c.l.b16 %v902
  %v1473 = vunpack.c.h.b16 %v902
  %v1474 = vunpack.c.l.b16 %v903
  %v1475 = vunpack.c.h.b16 %v903
  %v1476 = vunpack.c.l.b16 %v904
  %v1477 = vunpack.c.h.b16 %v904
  %v1478 = vunpack.c.l.b16 %v905
  %v1479 = vunpack.c.h.b16 %v905
  %v1480 = vunpack.c.l.b16 %v906
  %v1481 = vunpack.c.h.b16 %v906
  %v1482 = vunpack.c.l.b16 %v907
  %v1483 = vunpack.c.h.b16 %v907
  %v1484 = vunpack.c.l.b16 %v908
  %v1485 = vunpack.c.h.b16 %v908
  %v1486 = vunpack.c.l.b16 %v909
  %v1487 = vunpack.c.h.b16 %v909
  %v1488 = vunpack.c.l.b16 %v910
  %v1489 = vunpack.c.h.b16 %v910
  %v1490 = vunpack.c.l.b16 %v911
  %v1491 = vunpack.c.h.b16 %v911
  %v1492 = vunpack.c.l.b16 %v912
  %v1493 = vunpack.c.h.b16 %v912
  %v1494 = vunpack.c.l.b16 %v913
  %v1495 = vunpack.c.h.b16 %v913
  %v1496 = vunpack.c.l.b16 %v914
  %v1497 = vunpack.c.h.b16 %v914
  %v1498 = vunpack.c.l.b16 %v915
  %v1499 = vunpack.c.h.b16 %v915
  %v1500 = vunpack.c.l.b16 %v916
  %v1501 = vunpack.c.h.b16 %v916
  %v1502 = vunpack.c.l.b16 %v917
  %v1503 = vunpack.c.h.b16 %v917
  %v1504 = vunpack.c.l.b16 %v918
  %v1505 = vunpack.c.h.b16 %v918
  %v1506 = vunpack.c.l.b16 %v919
  %v1507 = vunpack.c.h.b16 %v919
  %v1508 = vunpack.c.l.b16 %v920
  %v1509 = vunpack.c.h.b16 %v920
  %v1510 = vunpack.c.l.b16 %v921
  %v1511 = vunpack.c.h.b16 %v921
  %v1512 = vunpack.c.l.b16 %v922
  %v1513 = vunpack.c.h.b16 %v922
  %v1514 = vunpack.c.l.b16 %v923
  %v1515 = vunpack.c.h.b16 %v923
  %v1516 = vunpack.c.l.b16 %v924
  %v1517 = vunpack.c.h.b16 %v924
  %v1518 = vunpack.c.l.b16 %v925
  %v1519 = vunpack.c.h.b16 %v925
  %v1520 = vunpack.c.l.b16 %v926
  %v1521 = vunpack.c.h.b16 %v926
  %v1522 = vunpack.c.l.b16 %v927
  %v1523 = vunpack.c.h.b16 %v927
  %v1524 = vunpack.c.l.b16 %v928
  %v1525 = vunpack.c.h.b16 %v928
  %v1526 = vunpack.c.l.b16 %v929
  %v1527 = vunpack.c.h.b16 %v929
  %v1528 = vpack.c.b16 %v1148, %v1144
  %v1529 = vpack.c.b16 %v1149, %v1145
  %v1530 = vpack.c.b16 %v1150, %v1146
  %v1531 = vpack.c.b16 %v1151, %v1147
  %v1532 = vpack.c.b16 %v1156, %v1152
  %v1533 = vpack.c.b16 %v1157, %v1153
  %v1534 = vpack.c.b16 %v1158, %v1154
  %v1535 = vpack.c.b16 %v1159, %v1155
  %v1536 = vpack.c.b16 %v1164, %v1160
  %v1537 = vpack.c.b16 %v1165, %v1161
  %v1538 = vpack.c.b16 %v1166, %v1162
  %v1539 = vpack.c.b16 %v1167, %v1163
  %v1540 = vpack.c.b16 %v1172, %v1168
  %v1541 = vpack.c.b16 %v1173, %v1169
  %v1542 = vpack.c.b16 %v1174, %v1170
  %v1543 = vpack.c.b16 %v1175, %v1171
  %v1544 = vpack.c.b16 %v1180, %v1176
  %v1545 = vpack.c.b16 %v1181, %v1177
  %v1546 = vpack.c.b16 %v1182, %v1178
  %v1547 = vpack.c.b16 %v1183, %v1179
  %v1548 = vpack.c.b16 %v1188, %v1184
  %v1549 = vpack.c.b16 %v1189, %v1185
  %v1550 = vpack.c.b16 %v1190, %v1186
  %v1551 = vpack.c.b16 %v1191, %v1187
  %v1552 = vpack.c.b16 %v1196, %v1192
  %v1553 = vpack.c.b16 %v1197, %v1193
  %v1554 = vpack.c.b16 %v1198, %v1194
  %v1555 = vpack.c.b16 %v1199, %v1195
  %v1556 = vpack.c.b16 %v1204, %v1200
  %v1557 = vpack.c.b16 %v1205, %v1201
  %v1558 = vpack.c.b16 %v1206, %v1202
  %v1559 = vpack.c.b16 %v1207, %v1203
  %v1560 = vpack.c.b16 %v1212, %v1208
  %v1561 = vpack.c.b16 %v1213, %v1209
  %v1562 = vpack.c.b16 %v1214, %v1210
  %v1563 = vpack.c.b16 %v1215, %v1211
  %v1564 = vpack.c.b16 %v1220, %v1216
  %v1565 = vpack.c.b16 %v1221, %v1217
  %v1566 = vpack.c.b16 %v1222, %v1218
  %v1567 = vpack.c.b16 %v1223, %v1219
  %v1568 = vpack.c.b16 %v1228, %v1224
  %v1569 = vpack.c.b16 %v1229, %v1225
  %v1570 = vpack.c.b16 %v1230, %v1226
  %v1571 = vpack.c.b16 %v1231, %v1227
  %v1572 = vpack.c.b16 %v1236, %v1232
  %v1573 = vpack.c.b16 %v1237, %v1233
  %v1574 = vpack.c.b16 %v1238, %v1234
  %v1575 = vpack.c.b16 %v1239, %v1235
  %v1576 = vpack.c.b16 %v1244, %v1240
  %v1577 = vpack.c.b16 %v1245, %v1241
  %v1578 = vpack.c.b16 %v1246, %v1242
  %v1579 = vpack.c.b16 %v1247, %v1243
  %v1580 = vpack.c.b16 %v1252, %v1248
  %v1581 = vpack.c.b16 %v1253, %v1249
  %v1582 = vpack.c.b16 %v1254, %v1250
  %v1583 = vpack.c.b16 %v1255, %v1251
  %v1584 = vpack.c.b16 %v1260, %v1256
  %v1585 = vpack.c.b16 %v1261, %v1257
  %v1586 = vpack.c.b16 %v1262, %v1258
  %v1587 = vpack.c.b16 %v1263, %v1259
  %v1588 = vpack.c.b16 %v1268, %v1264
  %v1589 = vpack.c.b16 %v1269, %v1265
  %v1590 = vpack.c.b16 %v1270, %v1266
  %v1591 = vpack.c.b16 %v1271, %v1267
  %v1592 = vpack.c.b16 %v1276, %v1272
  %v1593 = vpack.c.b16 %v1277, %v1273
  %v1594 = vpack.c.b16 %v1278, %v1274
  %v1595 = vpack.c.b16 %v1279, %v1275
  %v1596 = vpack.c.b16 %v1284, %v1280
  %v1597 = vpack.c.b16 %v1285, %v1281
  %v1598 = vpack.c.b16 %v1286, %v1282
  %v1599 = vpack.c.b16 %v1287, %v1283
  %v1600 = vpack.c.b16 %v1292, %v1288
  %v1601 = vpack.c.b16 %v1293, %v1289
  %v1602 = vpack.c.b16 %v1294, %v1290
  %v1603 = vpack.c.b16 %v1295, %v1291
  %v1604 = vpack.c.b16 %v1300, %v1296
  %v1605 = vpack.c.b16 %v1301, %v1297
  %v1606 = vpack.c.b16 %v1302, %v1298
  %v1607 = vpack.c.b16 %v1303, %v1299
  %v1608 = vpack.c.b16 %v1308, %v1304
  %v1609 = vpack.c.b16 %v1309, %v1305
  %v1610 = vpack.c.b16 %v1310, %v1306
  %v1611 = vpack.c.b16 %v1311, %v1307
  %v1612 = vpack.c.b16 %v1316, %v1312
  %v1613 = vpack.c.b16 %v1317, %v1313
  %v1614 = vpack.c.b16 %v1318, %v1314
  %v1615 = vpack.c.b16 %v1319, %v1315
  %v1616 = vpack.c.b16 %v1324, %v1320
  %v1617 = vpack.c.b16 %v1325, %v1321
  %v1618 = vpack.c.b16 %v1326, %v1322
  %v1619 = vpack.c.b16 %v1327, %v1323
  %v1620 = vpack.c.b16 %v1332, %v1328
  %v1621 = vpack.c.b16 %v1333, %v1329
  %v1622 = vpack.c.b16 %v1334, %v1330
  %v1623 = vpack.c.b16 %v1335, %v1331
  %v1624 = vpack.c.b16 %v1340, %v1336
  %v1625 = vpack.c.b16 %v1341, %v1337
  %v1626 = vpack.c.b16 %v1342, %v1338
  %v1627 = vpack.c.b16 %v1343, %v1339
  %v1628 = vpack.c.b16 %v1348, %v1344
  %v1629 = vpack.c.b16 %v1349, %v1345
  %v1630 = vpack.c.b16 %v1350, %v1346
  %v1631 = vpack.c.b16 %v1351, %v1347
  %v1632 = vpack.c.b16 %v1356, %v1352
  %v1633 = vpack.c.b16 %v1357, %v1353
  %v1634 = vpack.c.b16 %v1358, %v1354
  %v1635 = vpack.c.b16 %v1359, %v1355
  %v1636 = vpack.c.b16 %v1364, %v1360
  %v1637 = vpack.c.b16 %v1365, %v1361
  %v1638 = vpack.c.b16 %v1366, %v1362
  %v1639 = vpack.c.b16 %v1367, %v1363
  %v1640 = vpack.c.b16 %v1372, %v1368
  %v1641 = vpack.c.b16 %v1373, %v1369
  %v1642 = vpack.c.b16 %v1374, %v1370
  %v1643 = vpack.c.b16 %v1375, %v1371
  %v1644 = vpack.c.b16 %v1380, %v1376
  %v1645 = vpack.c.b16 %v1381, %v1377
  %v1646 = vpack.c.b16 %v1382, %v1378
  %v1647 = vpack.c.b16 %v1383, %v1379
  %v1648 = vpack.c.b16 %v1388, %v1384
  %v1649 = vpack.c.b16 %v1389, %v1385
  %v1650 = vpack.c.b16 %v1390, %v1386
  %v1651 = vpack.c.b16 %v1391, %v1387
  %v1652 = vpack.c.b16 %v1396, %v1392
  %v1653 = vpack.c.b16 %v1397, %v1393
  %v1654 = vpack.c.b16 %v1398, %v1394
  %v1655 = vpack.c.b16 %v1399, %v1395
  %v1656 = vpack.c.b16 %v1404, %v1400
  %v1657 = vpack.c.b16 %v1405, %v1401
  %v1658 = vpack.c.b16 %v1406, %v1402
  %v1659 = vpack.c.b16 %v1407, %v1403
  %v1660 = vpack.c.b16 %v1412, %v1408
  %v1661 = vpack.c.b16 %v1413, %v1409
  %v1662 = vpack.c.b16 %v1414, %v1410
  %v1663 = vpack.c.b16 %v1415, %v1411
  %v1664 = vpack.c.b16 %v1420, %v1416
  %v1665 = vpack.c.b16 %v1421, %v1417
  %v1666 = vpack.c.b16 %v1422, %v1418
  %v1667 = vpack.c.b16 %v1423, %v1419
  %v1668 = vpack.c.b16 %v1428, %v1424
  %v1669 = vpack.c.b16 %v1429, %v1425
  %v1670 = vpack.c.b16 %v1430, %v1426
  %v1671 = vpack.c.b16 %v1431, %v1427
  %v1672 = vpack.c.b16 %v1436, %v1432
  %v1673 = vpack.c.b16 %v1437, %v1433
  %v1674 = vpack.c.b16 %v1438, %v1434
  %v1675 = vpack.c.b16 %v1439, %v1435
  %v1676 = vpack.c.b16 %v1444, %v1440
  %v1677 = vpack.c.b16 %v1445, %v1441
  %v1678 = vpack.c.b16 %v1446, %v1442
  %v1679 = vpack.c.b16 %v1447, %v1443
  %v1680 = vpack.c.b16 %v1452, %v1448
  %v1681 = vpack.c.b16 %v1453, %v1449
  %v1682 = vpack.c.b16 %v1454, %v1450
  %v1683 = vpack.c.b16 %v1455, %v1451
  %v1684 = vpack.c.b16 %v1460, %v1456
  %v1685 = vpack.c.b16 %v1461, %v1457
  %v1686 = vpack.c.b16 %v1462, %v1458
  %v1687 = vpack.c.b16 %v1463, %v1459
  %v1688 = vpack.c.b16 %v1468, %v1464
  %v1689 = vpack.c.b16 %v1469, %v1465
  %v1690 = vpack.c.b16 %v1470, %v1466
  %v1691 = vpack.c.b16 %v1471, %v1467
  %v1692 = vpack.c.b16 %v1476, %v1472
  %v1693 = vpack.c.b16 %v1477, %v1473
  %v1694 = vpack.c.b16 %v1478, %v1474
  %v1695 = vpack.c.b16 %v1479, %v1475
  %v1696 = vpack.c.b16 %v1484, %v1480
  %v1697 = vpack.c.b16 %v1485, %v1481
  %v1698 = vpack.c.b16 %v1486, %v1482
  %v1699 = vpack.c.b16 %v1487, %v1483
  %v1700 = vpack.c.b16 %v1492, %v1488
  %v1701 = vpack.c.b16 %v1493, %v1489
  %v1702 = vpack.c.b16 %v1494, %v1490
  %v1703 = vpack.c.b16 %v1495, %v1491
  %v1704 = vpack.c.b16 %v1500, %v1496
  %v1705 = vpack.c.b16 %v1501, %v1497
  %v1706 = vpack.c.b16 %v1502, %v1498
  %v1707 = vpack.c.b16 %v1503, %v1499
  %v1708 = vpack.c.b16 %v1508, %v1504
  %v1709 = vpack.c.b16 %v1509, %v1505
  %v1710 = vpack.c.b16 %v1510, %v1506
  %v1711 = vpack.c.b16 %v1511, %v1507
  %v1712 = vpack.c.b16 %v1516, %v1512
  %v1713 = vpack.c.b16 %v1517, %v1513
  %v1714 = vpack.c.b16 %v1518, %v1514
  %v1715 = vpack.c.b16 %v1519, %v1515
  %v1716 = vpack.c.b16 %v1524, %v1520
  %v1717 = vpack.c.b16 %v1525, %v1521
  %v1718 = vpack.c.b16 %v1526, %v1522
  %v1719 = vpack.c.b16 %v1527, %v1523
  %1912 = vmatprep.subr.bf16.mxu0 %v1557
  %1913 = vmatpush1.bf16.msra.mxu0 %v1556
  %1914 = vmatprep.subr.bf16.mxu0 %v1553
  %1915 = vmatpush1.bf16.msra.mxu0 %v1552
  %1916 = vmatprep.subr.bf16.mxu0 %v1549
  %1917 = vmatpush1.bf16.msra.mxu0 %v1548
  %1918 = vmatprep.subr.bf16.mxu0 %v1545
  %1919 = vmatpush1.bf16.msra.mxu0 %v1544
  %1920 = vmatprep.subr.bf16.mxu0 %v1541
  %1921 = vmatpush1.bf16.msra.mxu0 %v1540
  %1922 = vmatprep.subr.bf16.mxu0 %v1537
  %1923 = vmatpush1.bf16.msra.mxu0 %v1536
  %1924 = vmatprep.subr.bf16.mxu0 %v1533
  %1925 = vmatpush1.bf16.msra.mxu0 %v1532
  %1926 = vmatprep.subr.bf16.mxu0 %v1529
  %1927 = vmatpush1.bf16.msra.mxu0 %v1528
  %1928 = vmatprep.subr.bf16.mxu0 %v1589
  %1929 = vmatpush2.bf16.msra.mxu0 %v1588
  %1930 = vmatprep.subr.bf16.mxu0 %v1585
  %1931 = vmatpush2.bf16.msra.mxu0 %v1584
  %1932 = vmatprep.subr.bf16.mxu0 %v1581
  %1933 = vmatpush2.bf16.msra.mxu0 %v1580
  %1934 = vmatprep.subr.bf16.mxu0 %v1577
  %1935 = vmatpush2.bf16.msra.mxu0 %v1576
  %1936 = vmatprep.subr.bf16.mxu0 %v1573
  %1937 = vmatpush2.bf16.msra.mxu0 %v1572
  %1938 = vmatprep.subr.bf16.mxu0 %v1569
  %1939 = vmatpush2.bf16.msra.mxu0 %v1568
  %1940 = vmatprep.subr.bf16.mxu0 %v1565
  %1941 = vmatpush2.bf16.msra.mxu0 %v1564
  %1942 = vmatprep.subr.bf16.mxu0 %v1561
  %1943 = vmatpush2.bf16.msra.mxu0 %v1560
  %1944 = vmatprep.mubr.bf16.mxu0 %v632
  %1945 = vmatmul.mubr.bf16.gmra.mxu0 %v631
  %v1946 = vpop.f32.mrf.mxu0
  %v1947 = vadd.f32 %v935, %v1946
  %v1948 = vpop.f32.mrf.mxu0
  %v1949 = vadd.f32 %v939, %v1948
  %v1950 = vpop.f32.mrf.mxu0
  %v1951 = vadd.f32 %v935, %v1950
  %v1952 = vpop.f32.mrf.mxu0
  %v1953 = vadd.f32 %v939, %v1952
  %1954 = vmatprep.mubr.bf16.mxu0 %v691
  %1955 = vmatmul.mubr.bf16.gmra.mxu0 %v690
  %v1956 = vpop.f32.mrf.mxu0
  %v1957 = vadd.f32 %v935, %v1956
  %v1958 = vpop.f32.mrf.mxu0
  %v1959 = vadd.f32 %v939, %v1958
  %v1960 = vpop.f32.mrf.mxu0
  %v1961 = vadd.f32 %v935, %v1960
  %v1962 = vpop.f32.mrf.mxu0
  %v1963 = vadd.f32 %v939, %v1962
  %1964 = vdwg.mxu0
  %1965 = vmatprep.subr.bf16.mxu0 %v1621
  %1966 = vmatpush1.bf16.msra.mxu0 %v1620
  %1967 = vmatprep.subr.bf16.mxu0 %v1617
  %1968 = vmatpush1.bf16.msra.mxu0 %v1616
  %1969 = vmatprep.subr.bf16.mxu0 %v1613
  %1970 = vmatpush1.bf16.msra.mxu0 %v1612
  %1971 = vmatprep.subr.bf16.mxu0 %v1609
  %1972 = vmatpush1.bf16.msra.mxu0 %v1608
  %1973 = vmatprep.subr.bf16.mxu0 %v1605
  %1974 = vmatpush1.bf16.msra.mxu0 %v1604
  %1975 = vmatprep.subr.bf16.mxu0 %v1601
  %1976 = vmatpush1.bf16.msra.mxu0 %v1600
  %1977 = vmatprep.subr.bf16.mxu0 %v1597
  %1978 = vmatpush1.bf16.msra.mxu0 %v1596
  %1979 = vmatprep.subr.bf16.mxu0 %v1593
  %1980 = vmatpush1.bf16.msra.mxu0 %v1592
  %1981 = vmatprep.subr.bf16.mxu0 %v1653
  %1982 = vmatpush2.bf16.msra.mxu0 %v1652
  %1983 = vmatprep.subr.bf16.mxu0 %v1649
  %1984 = vmatpush2.bf16.msra.mxu0 %v1648
  %1985 = vmatprep.subr.bf16.mxu0 %v1645
  %1986 = vmatpush2.bf16.msra.mxu0 %v1644
  %1987 = vmatprep.subr.bf16.mxu0 %v1641
  %1988 = vmatpush2.bf16.msra.mxu0 %v1640
  %1989 = vmatprep.subr.bf16.mxu0 %v1637
  %1990 = vmatpush2.bf16.msra.mxu0 %v1636
  %1991 = vmatprep.subr.bf16.mxu0 %v1633
  %1992 = vmatpush2.bf16.msra.mxu0 %v1632
  %1993 = vmatprep.subr.bf16.mxu0 %v1629
  %1994 = vmatpush2.bf16.msra.mxu0 %v1628
  %1995 = vmatprep.subr.bf16.mxu0 %v1625
  %1996 = vmatpush2.bf16.msra.mxu0 %v1624
  %1997 = vmatprep.mubr.bf16.mxu0 %v663
  %1998 = vmatmul.mubr.bf16.gmra.mxu0 %v651
  %v1999 = vpop.f32.mrf.mxu0
  %v2000 = vadd.f32 %v1947, %v1999
  %v2001 = vpop.f32.mrf.mxu0
  %v2002 = vadd.f32 %v1949, %v2001
  %v2003 = vpop.f32.mrf.mxu0
  %v2004 = vadd.f32 %v1951, %v2003
  %v2005 = vpop.f32.mrf.mxu0
  %v2006 = vadd.f32 %v1953, %v2005
  %2007 = vmatprep.mubr.bf16.mxu0 %v722
  %2008 = vmatmul.mubr.bf16.gmra.mxu0 %v710
  %v2009 = vpop.f32.mrf.mxu0
  %v2010 = vadd.f32 %v1957, %v2009
  %v2011 = vpop.f32.mrf.mxu0
  %v2012 = vadd.f32 %v1959, %v2011
  %v2013 = vpop.f32.mrf.mxu0
  %v2014 = vadd.f32 %v1961, %v2013
  %v2015 = vpop.f32.mrf.mxu0
  %v2016 = vadd.f32 %v1963, %v2015
  %2017 = vdwg.mxu0
  %2018 = vmatprep.subr.bf16.mxu0 %v1685
  %2019 = vmatpush1.bf16.msra.mxu0 %v1684
  %2020 = vmatprep.subr.bf16.mxu0 %v1681
  %2021 = vmatpush1.bf16.msra.mxu0 %v1680
  %2022 = vmatprep.subr.bf16.mxu0 %v1677
  %2023 = vmatpush1.bf16.msra.mxu0 %v1676
  %2024 = vmatprep.subr.bf16.mxu0 %v1673
  %2025 = vmatpush1.bf16.msra.mxu0 %v1672
  %2026 = vmatprep.subr.bf16.mxu0 %v1669
  %2027 = vmatpush1.bf16.msra.mxu0 %v1668
  %2028 = vmatprep.subr.bf16.mxu0 %v1665
  %2029 = vmatpush1.bf16.msra.mxu0 %v1664
  %2030 = vmatprep.subr.bf16.mxu0 %v1661
  %2031 = vmatpush1.bf16.msra.mxu0 %v1660
  %2032 = vmatprep.subr.bf16.mxu0 %v1657
  %2033 = vmatpush1.bf16.msra.mxu0 %v1656
  %2034 = vmatprep.subr.bf16.mxu0 %v1717
  %2035 = vmatpush2.bf16.msra.mxu0 %v1716
  %2036 = vmatprep.subr.bf16.mxu0 %v1713
  %2037 = vmatpush2.bf16.msra.mxu0 %v1712
  %2038 = vmatprep.subr.bf16.mxu0 %v1709
  %2039 = vmatpush2.bf16.msra.mxu0 %v1708
  %2040 = vmatprep.subr.bf16.mxu0 %v1705
  %2041 = vmatpush2.bf16.msra.mxu0 %v1704
  %2042 = vmatprep.subr.bf16.mxu0 %v1701
  %2043 = vmatpush2.bf16.msra.mxu0 %v1700
  %2044 = vmatprep.subr.bf16.mxu0 %v1697
  %2045 = vmatpush2.bf16.msra.mxu0 %v1696
  %2046 = vmatprep.subr.bf16.mxu0 %v1693
  %2047 = vmatpush2.bf16.msra.mxu0 %v1692
  %2048 = vmatprep.subr.bf16.mxu0 %v1689
  %2049 = vmatpush2.bf16.msra.mxu0 %v1688
  %2050 = vmatprep.mubr.bf16.mxu0 %v676
  %2051 = vmatmul.mubr.bf16.gmra.mxu0 %v673
  %v2052 = vpop.f32.mrf.mxu0
  %v2053 = vadd.f32 %v2000, %v2052
  %v2054 = vpop.f32.mrf.mxu0
  %v2055 = vadd.f32 %v2002, %v2054
  %v2056 = vpop.f32.mrf.mxu0
  %v2057 = vadd.f32 %v2004, %v2056
  %v2058 = vpop.f32.mrf.mxu0
  %v2059 = vadd.f32 %v2006, %v2058
  %2060 = vmatprep.mubr.bf16.mxu0 %v735
  %2061 = vmatmul.mubr.bf16.gmra.mxu0 %v732
  %v2062 = vpop.f32.mrf.mxu0
  %v2063 = vadd.f32 %v2010, %v2062
  %v2064 = vpop.f32.mrf.mxu0
  %v2065 = vadd.f32 %v2012, %v2064
  %v2066 = vpop.f32.mrf.mxu0
  %v2067 = vadd.f32 %v2014, %v2066
  %v2068 = vpop.f32.mrf.mxu0
  %v2069 = vadd.f32 %v2016, %v2068
  %2070 = vdwg.mxu0
  %2071 = vmatprep.subr.bf16.mxu0 %v1559
  %2072 = vmatpush1.bf16.msra.mxu0 %v1558
  %2073 = vmatprep.subr.bf16.mxu0 %v1555
  %2074 = vmatpush1.bf16.msra.mxu0 %v1554
  %2075 = vmatprep.subr.bf16.mxu0 %v1551
  %2076 = vmatpush1.bf16.msra.mxu0 %v1550
  %2077 = vmatprep.subr.bf16.mxu0 %v1547
  %2078 = vmatpush1.bf16.msra.mxu0 %v1546
  %2079 = vmatprep.subr.bf16.mxu0 %v1543
  %2080 = vmatpush1.bf16.msra.mxu0 %v1542
  %2081 = vmatprep.subr.bf16.mxu0 %v1539
  %2082 = vmatpush1.bf16.msra.mxu0 %v1538
  %2083 = vmatprep.subr.bf16.mxu0 %v1535
  %2084 = vmatpush1.bf16.msra.mxu0 %v1534
  %2085 = vmatprep.subr.bf16.mxu0 %v1531
  %2086 = vmatpush1.bf16.msra.mxu0 %v1530
  %2087 = vmatprep.subr.bf16.mxu0 %v1591
  %2088 = vmatpush2.bf16.msra.mxu0 %v1590
  %2089 = vmatprep.subr.bf16.mxu0 %v1587
  %2090 = vmatpush2.bf16.msra.mxu0 %v1586
  %2091 = vmatprep.subr.bf16.mxu0 %v1583
  %2092 = vmatpush2.bf16.msra.mxu0 %v1582
  %2093 = vmatprep.subr.bf16.mxu0 %v1579
  %2094 = vmatpush2.bf16.msra.mxu0 %v1578
  %2095 = vmatprep.subr.bf16.mxu0 %v1575
  %2096 = vmatpush2.bf16.msra.mxu0 %v1574
  %2097 = vmatprep.subr.bf16.mxu0 %v1571
  %2098 = vmatpush2.bf16.msra.mxu0 %v1570
  %2099 = vmatprep.subr.bf16.mxu0 %v1567
  %2100 = vmatpush2.bf16.msra.mxu0 %v1566
  %2101 = vmatprep.subr.bf16.mxu0 %v1563
  %2102 = vmatpush2.bf16.msra.mxu0 %v1562
  %2103 = vmatprep.mubr.bf16.mxu0 %v632
  %2104 = vmatmul.mubr.bf16.gmra.mxu0 %v631
  %v2105 = vpop.f32.mrf.mxu0
  %v2106 = vadd.f32 %v943, %v2105
  %v2107 = vpop.f32.mrf.mxu0
  %v2108 = vadd.f32 %v947, %v2107
  %v2109 = vpop.f32.mrf.mxu0
  %v2110 = vadd.f32 %v943, %v2109
  %v2111 = vpop.f32.mrf.mxu0
  %v2112 = vadd.f32 %v947, %v2111
  %2113 = vmatprep.mubr.bf16.mxu0 %v691
  %2114 = vmatmul.mubr.bf16.gmra.mxu0 %v690
  %v2115 = vpop.f32.mrf.mxu0
  %v2116 = vadd.f32 %v943, %v2115
  %v2117 = vpop.f32.mrf.mxu0
  %v2118 = vadd.f32 %v947, %v2117
  %v2119 = vpop.f32.mrf.mxu0
  %v2120 = vadd.f32 %v943, %v2119
  %v2121 = vpop.f32.mrf.mxu0
  %v2122 = vadd.f32 %v947, %v2121
  %2123 = vdwg.mxu0
  %2124 = vmatprep.subr.bf16.mxu0 %v1623
  %2125 = vmatpush1.bf16.msra.mxu0 %v1622
  %2126 = vmatprep.subr.bf16.mxu0 %v1619
  %2127 = vmatpush1.bf16.msra.mxu0 %v1618
  %2128 = vmatprep.subr.bf16.mxu0 %v1615
  %2129 = vmatpush1.bf16.msra.mxu0 %v1614
  %2130 = vmatprep.subr.bf16.mxu0 %v1611
  %2131 = vmatpush1.bf16.msra.mxu0 %v1610
  %2132 = vmatprep.subr.bf16.mxu0 %v1607
  %2133 = vmatpush1.bf16.msra.mxu0 %v1606
  %2134 = vmatprep.subr.bf16.mxu0 %v1603
  %2135 = vmatpush1.bf16.msra.mxu0 %v1602
  %2136 = vmatprep.subr.bf16.mxu0 %v1599
  %2137 = vmatpush1.bf16.msra.mxu0 %v1598
  %2138 = vmatprep.subr.bf16.mxu0 %v1595
  %2139 = vmatpush1.bf16.msra.mxu0 %v1594
  %2140 = vmatprep.subr.bf16.mxu0 %v1655
  %2141 = vmatpush2.bf16.msra.mxu0 %v1654
  %2142 = vmatprep.subr.bf16.mxu0 %v1651
  %2143 = vmatpush2.bf16.msra.mxu0 %v1650
  %2144 = vmatprep.subr.bf16.mxu0 %v1647
  %2145 = vmatpush2.bf16.msra.mxu0 %v1646
  %2146 = vmatprep.subr.bf16.mxu0 %v1643
  %2147 = vmatpush2.bf16.msra.mxu0 %v1642
  %2148 = vmatprep.subr.bf16.mxu0 %v1639
  %2149 = vmatpush2.bf16.msra.mxu0 %v1638
  %2150 = vmatprep.subr.bf16.mxu0 %v1635
  %2151 = vmatpush2.bf16.msra.mxu0 %v1634
  %2152 = vmatprep.subr.bf16.mxu0 %v1631
  %2153 = vmatpush2.bf16.msra.mxu0 %v1630
  %2154 = vmatprep.subr.bf16.mxu0 %v1627
  %2155 = vmatpush2.bf16.msra.mxu0 %v1626
  %2156 = vmatprep.mubr.bf16.mxu0 %v663
  %2157 = vmatmul.mubr.bf16.gmra.mxu0 %v651
  %v2158 = vpop.f32.mrf.mxu0
  %v2159 = vadd.f32 %v2106, %v2158
  %v2160 = vpop.f32.mrf.mxu0
  %v2161 = vadd.f32 %v2108, %v2160
  %v2162 = vpop.f32.mrf.mxu0
  %v2163 = vadd.f32 %v2110, %v2162
  %v2164 = vpop.f32.mrf.mxu0
  %v2165 = vadd.f32 %v2112, %v2164
  %2166 = vmatprep.mubr.bf16.mxu0 %v722
  %2167 = vmatmul.mubr.bf16.gmra.mxu0 %v710
  %v2168 = vpop.f32.mrf.mxu0
  %v2169 = vadd.f32 %v2116, %v2168
  %v2170 = vpop.f32.mrf.mxu0
  %v2171 = vadd.f32 %v2118, %v2170
  %v2172 = vpop.f32.mrf.mxu0
  %v2173 = vadd.f32 %v2120, %v2172
  %v2174 = vpop.f32.mrf.mxu0
  %v2175 = vadd.f32 %v2122, %v2174
  %2176 = vdwg.mxu0
  %2177 = vmatprep.subr.bf16.mxu0 %v1687
  %2178 = vmatpush1.bf16.msra.mxu0 %v1686
  %2179 = vmatprep.subr.bf16.mxu0 %v1683
  %2180 = vmatpush1.bf16.msra.mxu0 %v1682
  %2181 = vmatprep.subr.bf16.mxu0 %v1679
  %2182 = vmatpush1.bf16.msra.mxu0 %v1678
  %2183 = vmatprep.subr.bf16.mxu0 %v1675
  %2184 = vmatpush1.bf16.msra.mxu0 %v1674
  %2185 = vmatprep.subr.bf16.mxu0 %v1671
  %2186 = vmatpush1.bf16.msra.mxu0 %v1670
  %2187 = vmatprep.subr.bf16.mxu0 %v1667
  %2188 = vmatpush1.bf16.msra.mxu0 %v1666
  %2189 = vmatprep.subr.bf16.mxu0 %v1663
  %2190 = vmatpush1.bf16.msra.mxu0 %v1662
  %2191 = vmatprep.subr.bf16.mxu0 %v1659
  %2192 = vmatpush1.bf16.msra.mxu0 %v1658
  %2193 = vmatprep.subr.bf16.mxu0 %v1719
  %2194 = vmatpush2.bf16.msra.mxu0 %v1718
  %2195 = vmatprep.subr.bf16.mxu0 %v1715
  %2196 = vmatpush2.bf16.msra.mxu0 %v1714
  %2197 = vmatprep.subr.bf16.mxu0 %v1711
  %2198 = vmatpush2.bf16.msra.mxu0 %v1710
  %2199 = vmatprep.subr.bf16.mxu0 %v1707
  %2200 = vmatpush2.bf16.msra.mxu0 %v1706
  %2201 = vmatprep.subr.bf16.mxu0 %v1703
  %2202 = vmatpush2.bf16.msra.mxu0 %v1702
  %2203 = vmatprep.subr.bf16.mxu0 %v1699
  %2204 = vmatpush2.bf16.msra.mxu0 %v1698
  %2205 = vmatprep.subr.bf16.mxu0 %v1695
  %2206 = vmatpush2.bf16.msra.mxu0 %v1694
  %2207 = vmatprep.subr.bf16.mxu0 %v1691
  %2208 = vmatpush2.bf16.msra.mxu0 %v1690
  %2209 = vmatprep.mubr.bf16.mxu0 %v676
  %2210 = vmatmul.mubr.bf16.gmra.mxu0 %v673
  %v2211 = vpop.f32.mrf.mxu0
  %v2212 = vadd.f32 %v2159, %v2211
  %v2213 = vpop.f32.mrf.mxu0
  %v2214 = vadd.f32 %v2161, %v2213
  %v2215 = vpop.f32.mrf.mxu0
  %v2216 = vadd.f32 %v2163, %v2215
  %v2217 = vpop.f32.mrf.mxu0
  %v2218 = vadd.f32 %v2165, %v2217
  %2219 = vmatprep.mubr.bf16.mxu0 %v735
  %2220 = vmatmul.mubr.bf16.gmra.mxu0 %v732
  %v2221 = vpop.f32.mrf.mxu0
  %v2222 = vadd.f32 %v2169, %v2221
  %v2223 = vpop.f32.mrf.mxu0
  %v2224 = vadd.f32 %v2171, %v2223
  %v2225 = vpop.f32.mrf.mxu0
  %v2226 = vadd.f32 %v2173, %v2225
  %v2227 = vpop.f32.mrf.mxu0
  %v2228 = vadd.f32 %v2175, %v2227
  %2229 = vdwg.mxu0
  %v2230 = vmax.f32 %v2053, 0.0
  %v2231 = vmax.f32 %v2055, 0.0
  %v2232 = vmax.f32 %v2212, 0.0
  %v2233 = vmax.f32 %v2214, 0.0
  %v2234 = vmax.f32 %v2057, 0.0
  %v2235 = vmax.f32 %v2059, 0.0
  %v2236 = vmax.f32 %v2216, 0.0
  %v2237 = vmax.f32 %v2218, 0.0
  %v2238 = vmax.f32 %v2063, 0.0
  %v2239 = vmax.f32 %v2065, 0.0
  %v2240 = vmax.f32 %v2222, 0.0
  %v2241 = vmax.f32 %v2224, 0.0
  %v2242 = vmax.f32 %v2067, 0.0
  %v2243 = vmax.f32 %v2069, 0.0
  %v2244 = vmax.f32 %v2226, 0.0
  %v2245 = vmax.f32 %v2228, 0.0
  %v2246 = vld [vmem:[#allocation3] sm:$0x11]
  %v2247 = vsel %vm522, 0, %v2246
  %2248 = vst [vmem:[#allocation3] sm:$0x11] %v2247
  %v2249 = vld [vmem:[#allocation3 + $0x8] sm:$0x11]
  %v2250 = vsel %vm522, 0, %v2249
  %2251 = vst [vmem:[#allocation3 + $0x8] sm:$0x11] %v2250
  %v2252 = vld [vmem:[#allocation3 + $0x30] sm:$0x11]
  %v2253 = vsel %vm522, 0, %v2252
  %2254 = vst [vmem:[#allocation3 + $0x30] sm:$0x11] %v2253
  %v2255 = vld [vmem:[#allocation3 + $0x38] sm:$0x11]
  %v2256 = vsel %vm522, 0, %v2255
  %2257 = vst [vmem:[#allocation3 + $0x38] sm:$0x11] %v2256
  %v2258 = vld [vmem:[#allocation3 + $0x20] sm:$0x11]
  %v2259 = vsel %vm533, 0, %v2258
  %2260 = vst [vmem:[#allocation3 + $0x20] sm:$0x11] %v2259
  %v2261 = vld [vmem:[#allocation3 + $0x28] sm:$0x11]
  %v2262 = vsel %vm533, 0, %v2261
  %2263 = vst [vmem:[#allocation3 + $0x28] sm:$0x11] %v2262
  %v2264 = vld [vmem:[#allocation3 + $0x50] sm:$0x11]
  %v2265 = vsel %vm533, 0, %v2264
  %2266 = vst [vmem:[#allocation3 + $0x50] sm:$0x11] %v2265
  %v2267 = vld [vmem:[#allocation3 + $0x58] sm:$0x11]
  %v2268 = vsel %vm533, 0, %v2267
  %2269 = vst [vmem:[#allocation3 + $0x58] sm:$0x11] %v2268
  %v2270 = vpack.c.bf16 %v2234, %v2230
  %v2271 = vpack.c.bf16 %v2235, %v2231
  %v2272 = vpack.c.bf16 %v2236, %v2232
  %v2273 = vpack.c.bf16 %v2237, %v2233
  %v2274 = vpack.c.bf16 %v2242, %v2238
  %v2275 = vpack.c.bf16 %v2243, %v2239
  %v2276 = vpack.c.bf16 %v2244, %v2240
  %v2277 = vpack.c.bf16 %v2245, %v2241
  %v2286 = vunpack.c.l.b16 %v2270
  %v2287 = vunpack.c.l.b16 %v2271
  %v2288 = vunpack.c.l.b16 %v2272
  %v2289 = vunpack.c.l.b16 %v2273
  %v2290 = vunpack.c.h.b16 %v2270
  %v2291 = vunpack.c.h.b16 %v2271
  %v2292 = vunpack.c.h.b16 %v2272
  %v2293 = vunpack.c.h.b16 %v2273
  %v2294 = vunpack.c.l.b16 %v2274
  %v2295 = vunpack.c.l.b16 %v2275
  %v2296 = vunpack.c.l.b16 %v2276
  %v2297 = vunpack.c.l.b16 %v2277
  %v2298 = vunpack.c.h.b16 %v2274
  %v2299 = vunpack.c.h.b16 %v2275
  %v2300 = vunpack.c.h.b16 %v2276
  %v2301 = vunpack.c.h.b16 %v2277
  %v2302 = vpack.c.b16 %v2287, %v2286
  %v2303 = vpack.c.b16 %v2289, %v2288
  %v2304 = vpack.c.b16 %v2291, %v2290
  %v2305 = vpack.c.b16 %v2293, %v2292
  %v2306 = vpack.c.b16 %v2295, %v2294
  %v2307 = vpack.c.b16 %v2297, %v2296
  %v2308 = vpack.c.b16 %v2299, %v2298
  %v2309 = vpack.c.b16 %v2301, %v2300
  %v2311 = vshrl.u32 %v2302, 16
  %v2313 = vrot.slane %v2311, 7
  %v2314 = vshll.u32 %v2302, 16
  %v2316 = vor.u32 %v2313, %v2314
  %v2318 = vshrl.u32 %v2303, 16
  %v2320 = vrot.slane %v2318, 7
  %v2321 = vshll.u32 %v2303, 16
  %v2323 = vor.u32 %v2320, %v2321
  %v2324 = vrot.slane %v2313, 4
  %v2326 = vshrl.u32 %v2304, 16
  %v2328 = vrot.slane %v2326, 7
  %v2329 = vshll.u32 %v2304, 16
  %v2331 = vor.u32 %v2328, %v2329
  %v2332 = vsel %vm561, %v2324, %v2331
  %v2333 = vrot.slane %v2320, 4
  %v2335 = vshrl.u32 %v2305, 16
  %v2337 = vrot.slane %v2335, 7
  %v2338 = vshll.u32 %v2305, 16
  %v2340 = vor.u32 %v2337, %v2338
  %v2341 = vsel %vm561, %v2333, %v2340
  %v2342 = vrot.slane %v2328, 4
  %v2343 = vrot.slane %v2337, 4
  %v2345 = vshrl.u32 %v2306, 16
  %v2347 = vrot.slane %v2345, 7
  %v2348 = vshll.u32 %v2306, 16
  %v2350 = vor.u32 %v2347, %v2348
  %v2352 = vshrl.u32 %v2307, 16
  %v2354 = vrot.slane %v2352, 7
  %v2355 = vshll.u32 %v2307, 16
  %v2357 = vor.u32 %v2354, %v2355
  %v2358 = vrot.slane %v2347, 4
  %v2360 = vshrl.u32 %v2308, 16
  %v2362 = vrot.slane %v2360, 7
  %v2363 = vshll.u32 %v2308, 16
  %v2365 = vor.u32 %v2362, %v2363
  %v2366 = vsel %vm561, %v2358, %v2365
  %v2367 = vrot.slane %v2354, 4
  %v2369 = vshrl.u32 %v2309, 16
  %v2371 = vrot.slane %v2369, 7
  %v2372 = vshll.u32 %v2309, 16
  %v2374 = vor.u32 %v2371, %v2372
  %v2375 = vsel %vm561, %v2367, %v2374
  %v2376 = vrot.slane %v2362, 4
  %v2377 = vrot.slane %v2371, 4
  %v2390 = vld [vmem:[#allocation3] sm:$0xff]
  %v2391 = vsel %vm606, %v2316, %v2390
  %2392 = vst [vmem:[#allocation3] sm:$0xff] %v2391
  %v2393 = vld [vmem:[#allocation3 + $0x8] sm:$0xff]
  %v2394 = vsel %vm606, %v2323, %v2393
  %2395 = vst [vmem:[#allocation3 + $0x8] sm:$0xff] %v2394
  %2396 = vst [vmem:[#allocation3 + $0x10] sm:$0xff] %v2332
  %2397 = vst [vmem:[#allocation3 + $0x18] sm:$0xff] %v2341
  %v2398 = vld [vmem:[#allocation3 + $0x20] sm:$0x11]
  %v2399 = vsel %vm522, %v2342, %v2398
  %2400 = vst [vmem:[#allocation3 + $0x20] sm:$0x11] %v2399
  %v2401 = vld [vmem:[#allocation3 + $0x28] sm:$0x11]
  %v2402 = vsel %vm522, %v2343, %v2401
  %2403 = vst [vmem:[#allocation3 + $0x28] sm:$0x11] %v2402
  %v2404 = vld [vmem:[#allocation3 + $0x30] sm:$0xff]
  %v2405 = vsel %vm606, %v2350, %v2404
  %2406 = vst [vmem:[#allocation3 + $0x30] sm:$0xff] %v2405
  %v2407 = vld [vmem:[#allocation3 + $0x38] sm:$0xff]
  %v2408 = vsel %vm606, %v2357, %v2407
  %2409 = vst [vmem:[#allocation3 + $0x38] sm:$0xff] %v2408
  %2410 = vst [vmem:[#allocation3 + $0x40] sm:$0xff] %v2366
  %2411 = vst [vmem:[#allocation3 + $0x48] sm:$0xff] %v2375
  %v2412 = vld [vmem:[#allocation3 + $0x50] sm:$0x11]
  %v2413 = vsel %vm522, %v2376, %v2412
  %2414 = vst [vmem:[#allocation3 + $0x50] sm:$0x11] %v2413
  %v2415 = vld [vmem:[#allocation3 + $0x58] sm:$0x11]
  %v2416 = vsel %vm522, %v2377, %v2415
  %2417 = vst [vmem:[#allocation3 + $0x58] sm:$0x11] %v2416
  %v2418 = vld [vmem:[#allocation3] sm:$0xff]
  %v2419 = vld [vmem:[#allocation3 + $0x8] sm:$0xff]
  %v2420 = vld [vmem:[#allocation3 + $0x10] sm:$0xff]
  %v2421 = vld [vmem:[#allocation3 + $0x18] sm:$0xff]
  %v2422 = vld [vmem:[#allocation3 + $0x20] sm:$0x11]
  %v2423 = vld [vmem:[#allocation3 + $0x28] sm:$0x11]
  %v2424 = vld [vmem:[#allocation3] sm:$0xee]
  %v2425 = vld [vmem:[#allocation3 + $0x8] sm:$0xee]
  %v2430 = vunpack.c.l.b16 %v2418
  %v2431 = vunpack.c.h.b16 %v2418
  %v2432 = vunpack.c.l.b16 %v2419
  %v2433 = vunpack.c.h.b16 %v2419
  %v2434 = vunpack.c.l.b16 %v2420
  %v2435 = vunpack.c.h.b16 %v2420
  %v2436 = vunpack.c.l.b16 %v2421
  %v2437 = vunpack.c.h.b16 %v2421
  %v2438 = vpack.c.b16 %v2434, %v2430
  %v2439 = vpack.c.b16 %v2435, %v2431
  %v2440 = vpack.c.b16 %v2436, %v2432
  %v2441 = vpack.c.b16 %v2437, %v2433
  %v2448 = vunpack.c.l.b16 %v2422
  %v2449 = vunpack.c.h.b16 %v2422
  %v2450 = vunpack.c.l.b16 %v2423
  %v2451 = vunpack.c.h.b16 %v2423
  %v2452 = vpack.c.b16 %v2448, %v2448
  %v2453 = vpack.c.b16 %v2449, %v2449
  %v2454 = vpack.c.b16 %v2450, %v2450
  %v2455 = vpack.c.b16 %v2451, %v2451
  %v2457 = vshrl.u32 %v2438, 16
  %v2459 = vshll.u32 %v2438, 16
  %v2461 = vrot.slane %v2459, 1
  %v2462 = vor.u32 %v2457, %v2461
  %v2464 = vshll.u32 %v2452, 16
  %v2466 = vrot.slane %v2464, 1
  %v2467 = vsel %vm46, %v2462, %v2466
  %v2469 = vshrl.u32 %v2439, 16
  %v2471 = vshll.u32 %v2439, 16
  %v2473 = vrot.slane %v2471, 1
  %v2474 = vor.u32 %v2469, %v2473
  %v2476 = vshll.u32 %v2453, 16
  %v2478 = vrot.slane %v2476, 1
  %v2479 = vsel %vm46, %v2474, %v2478
  %v2481 = vshrl.u32 %v2440, 16
  %v2483 = vshll.u32 %v2440, 16
  %v2485 = vrot.slane %v2483, 1
  %v2486 = vor.u32 %v2481, %v2485
  %v2488 = vshll.u32 %v2454, 16
  %v2490 = vrot.slane %v2488, 1
  %v2491 = vsel %vm46, %v2486, %v2490
  %v2493 = vshrl.u32 %v2441, 16
  %v2495 = vshll.u32 %v2441, 16
  %v2497 = vrot.slane %v2495, 1
  %v2498 = vor.u32 %v2493, %v2497
  %v2500 = vshll.u32 %v2455, 16
  %v2502 = vrot.slane %v2500, 1
  %v2503 = vsel %vm46, %v2498, %v2502
  %v2510 = vunpack.c.l.b16 %v2424
  %v2511 = vunpack.c.h.b16 %v2424
  %v2512 = vunpack.c.l.b16 %v2425
  %v2513 = vunpack.c.h.b16 %v2425
  %v2514 = vpack.c.b16 %v2434, %v2510
  %v2515 = vpack.c.b16 %v2435, %v2511
  %v2516 = vpack.c.b16 %v2436, %v2512
  %v2517 = vpack.c.b16 %v2437, %v2513
  %v2518 = vrot.slane %v2514, 1
  %v2519 = vrot.slane %v2452, 1
  %v2520 = vsel %vm63, %v2518, %v2519
  %v2521 = vrot.slane %v2515, 1
  %v2522 = vrot.slane %v2453, 1
  %v2523 = vsel %vm63, %v2521, %v2522
  %v2524 = vrot.slane %v2516, 1
  %v2525 = vrot.slane %v2454, 1
  %v2526 = vsel %vm63, %v2524, %v2525
  %v2527 = vrot.slane %v2517, 1
  %v2528 = vrot.slane %v2455, 1
  %v2529 = vsel %vm63, %v2527, %v2528
  %s2534 = scalar_lea.vmem [#allocation3], 48
  %v2535 = vld [vmem:[%s2534] sm:$0xff]
  %v2536 = vld [vmem:[%s2534 + $0x8] sm:$0xff]
  %v2537 = vld [vmem:[%s2534 + $0x10] sm:$0xff]
  %v2538 = vld [vmem:[%s2534 + $0x18] sm:$0xff]
  %v2539 = vld [vmem:[%s2534 + $0x20] sm:$0x11]
  %v2540 = vld [vmem:[%s2534 + $0x28] sm:$0x11]
  %v2541 = vld [vmem:[%s2534] sm:$0xee]
  %v2542 = vld [vmem:[%s2534 + $0x8] sm:$0xee]
  %v2547 = vunpack.c.l.b16 %v2535
  %v2548 = vunpack.c.h.b16 %v2535
  %v2549 = vunpack.c.l.b16 %v2536
  %v2550 = vunpack.c.h.b16 %v2536
  %v2551 = vunpack.c.l.b16 %v2537
  %v2552 = vunpack.c.h.b16 %v2537
  %v2553 = vunpack.c.l.b16 %v2538
  %v2554 = vunpack.c.h.b16 %v2538
  %v2555 = vpack.c.b16 %v2551, %v2547
  %v2556 = vpack.c.b16 %v2552, %v2548
  %v2557 = vpack.c.b16 %v2553, %v2549
  %v2558 = vpack.c.b16 %v2554, %v2550
  %v2565 = vunpack.c.l.b16 %v2539
  %v2566 = vunpack.c.h.b16 %v2539
  %v2567 = vunpack.c.l.b16 %v2540
  %v2568 = vunpack.c.h.b16 %v2540
  %v2569 = vpack.c.b16 %v2565, %v2565
  %v2570 = vpack.c.b16 %v2566, %v2566
  %v2571 = vpack.c.b16 %v2567, %v2567
  %v2572 = vpack.c.b16 %v2568, %v2568
  %v2574 = vshrl.u32 %v2555, 16
  %v2576 = vshll.u32 %v2555, 16
  %v2578 = vrot.slane %v2576, 1
  %v2579 = vor.u32 %v2574, %v2578
  %v2581 = vshll.u32 %v2569, 16
  %v2583 = vrot.slane %v2581, 1
  %v2584 = vsel %vm46, %v2579, %v2583
  %v2586 = vshrl.u32 %v2556, 16
  %v2588 = vshll.u32 %v2556, 16
  %v2590 = vrot.slane %v2588, 1
  %v2591 = vor.u32 %v2586, %v2590
  %v2593 = vshll.u32 %v2570, 16
  %v2595 = vrot.slane %v2593, 1
  %v2596 = vsel %vm46, %v2591, %v2595
  %v2598 = vshrl.u32 %v2557, 16
  %v2600 = vshll.u32 %v2557, 16
  %v2602 = vrot.slane %v2600, 1
  %v2603 = vor.u32 %v2598, %v2602
  %v2605 = vshll.u32 %v2571, 16
  %v2607 = vrot.slane %v2605, 1
  %v2608 = vsel %vm46, %v2603, %v2607
  %v2610 = vshrl.u32 %v2558, 16
  %v2612 = vshll.u32 %v2558, 16
  %v2614 = vrot.slane %v2612, 1
  %v2615 = vor.u32 %v2610, %v2614
  %v2617 = vshll.u32 %v2572, 16
  %v2619 = vrot.slane %v2617, 1
  %v2620 = vsel %vm46, %v2615, %v2619
  %v2627 = vunpack.c.l.b16 %v2541
  %v2628 = vunpack.c.h.b16 %v2541
  %v2629 = vunpack.c.l.b16 %v2542
  %v2630 = vunpack.c.h.b16 %v2542
  %v2631 = vpack.c.b16 %v2551, %v2627
  %v2632 = vpack.c.b16 %v2552, %v2628
  %v2633 = vpack.c.b16 %v2553, %v2629
  %v2634 = vpack.c.b16 %v2554, %v2630
  %v2635 = vrot.slane %v2631, 1
  %v2636 = vrot.slane %v2569, 1
  %v2637 = vsel %vm63, %v2635, %v2636
  %v2638 = vrot.slane %v2632, 1
  %v2639 = vrot.slane %v2570, 1
  %v2640 = vsel %vm63, %v2638, %v2639
  %v2641 = vrot.slane %v2633, 1
  %v2642 = vrot.slane %v2571, 1
  %v2643 = vsel %vm63, %v2641, %v2642
  %v2644 = vrot.slane %v2634, 1
  %v2645 = vrot.slane %v2572, 1
  %v2646 = vsel %vm63, %v2644, %v2645
  %v2651 = vld [vmem:[%s5] sm:$0xff]
  %v2652 = vld [vmem:[%s5 + $0x8] sm:$0xff]
  %v2653 = vld [vmem:[%s5 + $0x10] sm:$0xff]
  %v2654 = vld [vmem:[%s5 + $0x18] sm:$0xff]
  %v2655 = vld [vmem:[%s5 + $0x20] sm:$0xff]
  %v2656 = vld [vmem:[%s5 + $0x28] sm:$0xff]
  %v2657 = vld [vmem:[%s5 + $0x30] sm:$0xff]
  %v2658 = vld [vmem:[%s5 + $0x38] sm:$0xff]
  %v2659 = vld [vmem:[%s5 + $0x40] sm:$0xff]
  %v2660 = vld [vmem:[%s5 + $0x48] sm:$0xff]
  %v2661 = vld [vmem:[%s5 + $0x50] sm:$0xff]
  %v2662 = vld [vmem:[%s5 + $0x58] sm:$0xff]
  %v2663 = vld [vmem:[%s5 + $0x60] sm:$0xff]
  %v2664 = vld [vmem:[%s5 + $0x68] sm:$0xff]
  %v2665 = vld [vmem:[%s5 + $0x70] sm:$0xff]
  %v2666 = vld [vmem:[%s5 + $0x78] sm:$0xff]
  %v2667 = vld [vmem:[%s5 + $0x80] sm:$0xff]
  %v2668 = vld [vmem:[%s5 + $0x88] sm:$0xff]
  %v2669 = vld [vmem:[%s5 + $0x90] sm:$0xff]
  %v2670 = vld [vmem:[%s5 + $0x98] sm:$0xff]
  %v2671 = vld [vmem:[%s5 + $0xa0] sm:$0xff]
  %v2672 = vld [vmem:[%s5 + $0xa8] sm:$0xff]
  %v2673 = vld [vmem:[%s5 + $0xb0] sm:$0xff]
  %v2674 = vld [vmem:[%s5 + $0xb8] sm:$0xff]
  %v2675 = vld [vmem:[%s5 + $0xc0] sm:$0xff]
  %v2676 = vld [vmem:[%s5 + $0xc8] sm:$0xff]
  %v2677 = vld [vmem:[%s5 + $0xd0] sm:$0xff]
  %v2678 = vld [vmem:[%s5 + $0xd8] sm:$0xff]
  %v2679 = vld [vmem:[%s5 + $0xe0] sm:$0xff]
  %v2680 = vld [vmem:[%s5 + $0xe8] sm:$0xff]
  %v2681 = vld [vmem:[%s5 + $0xf0] sm:$0xff]
  %v2682 = vld [vmem:[%s5 + $0xf8] sm:$0xff]
  %v2683 = vld [vmem:[%s5 + $0x100] sm:$0xff]
  %v2684 = vld [vmem:[%s5 + $0x108] sm:$0xff]
  %v2685 = vld [vmem:[%s5 + $0x110] sm:$0xff]
  %v2686 = vld [vmem:[%s5 + $0x118] sm:$0xff]
  %v2687 = vld [vmem:[%s5 + $0x120] sm:$0xff]
  %v2688 = vld [vmem:[%s5 + $0x128] sm:$0xff]
  %v2689 = vld [vmem:[%s5 + $0x130] sm:$0xff]
  %v2690 = vld [vmem:[%s5 + $0x138] sm:$0xff]
  %v2691 = vld [vmem:[%s5 + $0x140] sm:$0xff]
  %v2692 = vld [vmem:[%s5 + $0x148] sm:$0xff]
  %v2693 = vld [vmem:[%s5 + $0x150] sm:$0xff]
  %v2694 = vld [vmem:[%s5 + $0x158] sm:$0xff]
  %v2695 = vld [vmem:[%s5 + $0x160] sm:$0xff]
  %v2696 = vld [vmem:[%s5 + $0x168] sm:$0xff]
  %v2697 = vld [vmem:[%s5 + $0x170] sm:$0xff]
  %v2698 = vld [vmem:[%s5 + $0x178] sm:$0xff]
  %v2699 = vld [vmem:[%s5 + $0x180] sm:$0xff]
  %v2700 = vld [vmem:[%s5 + $0x188] sm:$0xff]
  %v2701 = vld [vmem:[%s5 + $0x190] sm:$0xff]
  %v2702 = vld [vmem:[%s5 + $0x198] sm:$0xff]
  %v2703 = vld [vmem:[%s5 + $0x1a0] sm:$0xff]
  %v2704 = vld [vmem:[%s5 + $0x1a8] sm:$0xff]
  %v2705 = vld [vmem:[%s5 + $0x1b0] sm:$0xff]
  %v2706 = vld [vmem:[%s5 + $0x1b8] sm:$0xff]
  %v2707 = vld [vmem:[%s5 + $0x1c0] sm:$0xff]
  %v2708 = vld [vmem:[%s5 + $0x1c8] sm:$0xff]
  %v2709 = vld [vmem:[%s5 + $0x1d0] sm:$0xff]
  %v2710 = vld [vmem:[%s5 + $0x1d8] sm:$0xff]
  %v2711 = vld [vmem:[%s5 + $0x1e0] sm:$0xff]
  %v2712 = vld [vmem:[%s5 + $0x1e8] sm:$0xff]
  %v2713 = vld [vmem:[%s5 + $0x1f0] sm:$0xff]
  %v2714 = vld [vmem:[%s5 + $0x1f8] sm:$0xff]
  %v2715 = vld [vmem:[%s5 + $0x200] sm:$0xff]
  %v2716 = vld [vmem:[%s5 + $0x208] sm:$0xff]
  %v2717 = vld [vmem:[%s5 + $0x210] sm:$0xff]
  %v2718 = vld [vmem:[%s5 + $0x218] sm:$0xff]
  %v2719 = vld [vmem:[%s5 + $0x220] sm:$0xff]
  %v2720 = vld [vmem:[%s5 + $0x228] sm:$0xff]
  %v2721 = vld [vmem:[%s5 + $0x230] sm:$0xff]
  %v2722 = vld [vmem:[%s5 + $0x238] sm:$0xff]
  %v2723 = vld [vmem:[%s5 + $0x240] sm:$0xff]
  %v2724 = vld [vmem:[%s5 + $0x248] sm:$0xff]
  %v2725 = vld [vmem:[%s5 + $0x250] sm:$0xff]
  %v2726 = vld [vmem:[%s5 + $0x258] sm:$0xff]
  %v2727 = vld [vmem:[%s5 + $0x260] sm:$0xff]
  %v2728 = vld [vmem:[%s5 + $0x268] sm:$0xff]
  %v2729 = vld [vmem:[%s5 + $0x270] sm:$0xff]
  %v2730 = vld [vmem:[%s5 + $0x278] sm:$0xff]
  %v2731 = vld [vmem:[%s5 + $0x280] sm:$0xff]
  %v2732 = vld [vmem:[%s5 + $0x288] sm:$0xff]
  %v2733 = vld [vmem:[%s5 + $0x290] sm:$0xff]
  %v2734 = vld [vmem:[%s5 + $0x298] sm:$0xff]
  %v2735 = vld [vmem:[%s5 + $0x2a0] sm:$0xff]
  %v2736 = vld [vmem:[%s5 + $0x2a8] sm:$0xff]
  %v2737 = vld [vmem:[%s5 + $0x2b0] sm:$0xff]
  %v2738 = vld [vmem:[%s5 + $0x2b8] sm:$0xff]
  %v2739 = vld [vmem:[%s5 + $0x2c0] sm:$0xff]
  %v2740 = vld [vmem:[%s5 + $0x2c8] sm:$0xff]
  %v2741 = vld [vmem:[%s5 + $0x2d0] sm:$0xff]
  %v2742 = vld [vmem:[%s5 + $0x2d8] sm:$0xff]
  %v2743 = vld [vmem:[%s5 + $0x2e0] sm:$0xff]
  %v2744 = vld [vmem:[%s5 + $0x2e8] sm:$0xff]
  %v2745 = vld [vmem:[%s5 + $0x2f0] sm:$0xff]
  %v2746 = vld [vmem:[%s5 + $0x2f8] sm:$0xff]
  %v2747 = vld [vmem:[%s5 + $0x300] sm:$0xff]
  %v2748 = vld [vmem:[%s5 + $0x308] sm:$0xff]
  %v2749 = vld [vmem:[%s5 + $0x310] sm:$0xff]
  %v2750 = vld [vmem:[%s5 + $0x318] sm:$0xff]
  %v2751 = vld [vmem:[%s5 + $0x320] sm:$0xff]
  %v2752 = vld [vmem:[%s5 + $0x328] sm:$0xff]
  %v2753 = vld [vmem:[%s5 + $0x330] sm:$0xff]
  %v2754 = vld [vmem:[%s5 + $0x338] sm:$0xff]
  %v2755 = vld [vmem:[%s5 + $0x340] sm:$0xff]
  %v2756 = vld [vmem:[%s5 + $0x348] sm:$0xff]
  %v2757 = vld [vmem:[%s5 + $0x350] sm:$0xff]
  %v2758 = vld [vmem:[%s5 + $0x358] sm:$0xff]
  %v2759 = vld [vmem:[%s5 + $0x360] sm:$0xff]
  %v2760 = vld [vmem:[%s5 + $0x368] sm:$0xff]
  %v2761 = vld [vmem:[%s5 + $0x370] sm:$0xff]
  %v2762 = vld [vmem:[%s5 + $0x378] sm:$0xff]
  %v2763 = vld [vmem:[%s5 + $0x380] sm:$0xff]
  %v2764 = vld [vmem:[%s5 + $0x388] sm:$0xff]
  %v2765 = vld [vmem:[%s5 + $0x390] sm:$0xff]
  %v2766 = vld [vmem:[%s5 + $0x398] sm:$0xff]
  %v2767 = vld [vmem:[%s5 + $0x3a0] sm:$0xff]
  %v2768 = vld [vmem:[%s5 + $0x3a8] sm:$0xff]
  %v2769 = vld [vmem:[%s5 + $0x3b0] sm:$0xff]
  %v2770 = vld [vmem:[%s5 + $0x3b8] sm:$0xff]
  %v2771 = vld [vmem:[%s5 + $0x3c0] sm:$0xff]
  %v2772 = vld [vmem:[%s5 + $0x3c8] sm:$0xff]
  %v2773 = vld [vmem:[%s5 + $0x3d0] sm:$0xff]
  %v2774 = vld [vmem:[%s5 + $0x3d8] sm:$0xff]
  %v2775 = vld [vmem:[%s5 + $0x3e0] sm:$0xff]
  %v2776 = vld [vmem:[%s5 + $0x3e8] sm:$0xff]
  %v2777 = vld [vmem:[%s5 + $0x3f0] sm:$0xff]
  %v2778 = vld [vmem:[%s5 + $0x3f8] sm:$0xff]
  %v2779 = vld [vmem:[%s5 + $0x400] sm:$0xff]
  %v2780 = vld [vmem:[%s5 + $0x408] sm:$0xff]
  %v2781 = vld [vmem:[%s5 + $0x410] sm:$0xff]
  %v2782 = vld [vmem:[%s5 + $0x418] sm:$0xff]
  %v2783 = vld [vmem:[%s5 + $0x420] sm:$0xff]
  %v2784 = vld [vmem:[%s5 + $0x428] sm:$0xff]
  %v2785 = vld [vmem:[%s5 + $0x430] sm:$0xff]
  %v2786 = vld [vmem:[%s5 + $0x438] sm:$0xff]
  %v2787 = vld [vmem:[%s5 + $0x440] sm:$0xff]
  %v2788 = vld [vmem:[%s5 + $0x448] sm:$0xff]
  %v2789 = vld [vmem:[%s5 + $0x450] sm:$0xff]
  %v2790 = vld [vmem:[%s5 + $0x458] sm:$0xff]
  %v2791 = vld [vmem:[%s5 + $0x460] sm:$0xff]
  %v2792 = vld [vmem:[%s5 + $0x468] sm:$0xff]
  %v2793 = vld [vmem:[%s5 + $0x470] sm:$0xff]
  %v2794 = vld [vmem:[%s5 + $0x478] sm:$0xff]
  %v2795 = vld [vmem:[%s5 + $0x480] sm:$0xff]
  %v2796 = vld [vmem:[%s5 + $0x488] sm:$0xff]
  %v2797 = vld [vmem:[%s5 + $0x490] sm:$0xff]
  %v2798 = vld [vmem:[%s5 + $0x498] sm:$0xff]
  %v2799 = vld [vmem:[%s5 + $0x4a0] sm:$0xff]
  %v2800 = vld [vmem:[%s5 + $0x4a8] sm:$0xff]
  %v2801 = vld [vmem:[%s5 + $0x4b0] sm:$0xff]
  %v2802 = vld [vmem:[%s5 + $0x4b8] sm:$0xff]
  %v2803 = vld [vmem:[%s5 + $0x4c0] sm:$0xff]
  %v2804 = vld [vmem:[%s5 + $0x4c8] sm:$0xff]
  %v2805 = vld [vmem:[%s5 + $0x4d0] sm:$0xff]
  %v2806 = vld [vmem:[%s5 + $0x4d8] sm:$0xff]
  %v2807 = vld [vmem:[%s5 + $0x4e0] sm:$0xff]
  %v2808 = vld [vmem:[%s5 + $0x4e8] sm:$0xff]
  %v2809 = vld [vmem:[%s5 + $0x4f0] sm:$0xff]
  %v2810 = vld [vmem:[%s5 + $0x4f8] sm:$0xff]
  %v2811 = vld [vmem:[%s5 + $0x500] sm:$0xff]
  %v2812 = vld [vmem:[%s5 + $0x508] sm:$0xff]
  %v2813 = vld [vmem:[%s5 + $0x510] sm:$0xff]
  %v2814 = vld [vmem:[%s5 + $0x518] sm:$0xff]
  %v2815 = vld [vmem:[%s5 + $0x520] sm:$0xff]
  %v2816 = vld [vmem:[%s5 + $0x528] sm:$0xff]
  %v2817 = vld [vmem:[%s5 + $0x530] sm:$0xff]
  %v2818 = vld [vmem:[%s5 + $0x538] sm:$0xff]
  %v2819 = vld [vmem:[%s5 + $0x540] sm:$0xff]
  %v2820 = vld [vmem:[%s5 + $0x548] sm:$0xff]
  %v2821 = vld [vmem:[%s5 + $0x550] sm:$0xff]
  %v2822 = vld [vmem:[%s5 + $0x558] sm:$0xff]
  %v2823 = vld [vmem:[%s5 + $0x560] sm:$0xff]
  %v2824 = vld [vmem:[%s5 + $0x568] sm:$0xff]
  %v2825 = vld [vmem:[%s5 + $0x570] sm:$0xff]
  %v2826 = vld [vmem:[%s5 + $0x578] sm:$0xff]
  %v2827 = vld [vmem:[%s5 + $0x580] sm:$0xff]
  %v2828 = vld [vmem:[%s5 + $0x588] sm:$0xff]
  %v2829 = vld [vmem:[%s5 + $0x590] sm:$0xff]
  %v2830 = vld [vmem:[%s5 + $0x598] sm:$0xff]
  %v2831 = vld [vmem:[%s5 + $0x5a0] sm:$0xff]
  %v2832 = vld [vmem:[%s5 + $0x5a8] sm:$0xff]
  %v2833 = vld [vmem:[%s5 + $0x5b0] sm:$0xff]
  %v2834 = vld [vmem:[%s5 + $0x5b8] sm:$0xff]
  %v2835 = vld [vmem:[%s5 + $0x5c0] sm:$0xff]
  %v2836 = vld [vmem:[%s5 + $0x5c8] sm:$0xff]
  %v2837 = vld [vmem:[%s5 + $0x5d0] sm:$0xff]
  %v2838 = vld [vmem:[%s5 + $0x5d8] sm:$0xff]
  %v2839 = vld [vmem:[%s5 + $0x5e0] sm:$0xff]
  %v2840 = vld [vmem:[%s5 + $0x5e8] sm:$0xff]
  %v2841 = vld [vmem:[%s5 + $0x5f0] sm:$0xff]
  %v2842 = vld [vmem:[%s5 + $0x5f8] sm:$0xff]
  %v2843 = vld [vmem:[%s6] sm:$0x3]
  %v2845 = vlaneseq
  %v2846 = vshrl.u32 %v2845, 7
  %v2847 = vsub.s32 0, %v2846
  %v2848 = vrot.slane %v2843, %v2847
  %v2849 = vlaneseq
  %v2850 = vshrl.u32 %v2849, 7
  %v2851 = vsub.s32 1, %v2850
  %v2852 = vrot.slane %v2843, %v2851
  %v3047 = vunpack.c.l.b16 %v2651
  %v3048 = vunpack.c.h.b16 %v2651
  %v3049 = vunpack.c.l.b16 %v2652
  %v3050 = vunpack.c.h.b16 %v2652
  %v3051 = vunpack.c.l.b16 %v2653
  %v3052 = vunpack.c.h.b16 %v2653
  %v3053 = vunpack.c.l.b16 %v2654
  %v3054 = vunpack.c.h.b16 %v2654
  %v3055 = vunpack.c.l.b16 %v2655
  %v3056 = vunpack.c.h.b16 %v2655
  %v3057 = vunpack.c.l.b16 %v2656
  %v3058 = vunpack.c.h.b16 %v2656
  %v3059 = vunpack.c.l.b16 %v2657
  %v3060 = vunpack.c.h.b16 %v2657
  %v3061 = vunpack.c.l.b16 %v2658
  %v3062 = vunpack.c.h.b16 %v2658
  %v3063 = vunpack.c.l.b16 %v2659
  %v3064 = vunpack.c.h.b16 %v2659
  %v3065 = vunpack.c.l.b16 %v2660
  %v3066 = vunpack.c.h.b16 %v2660
  %v3067 = vunpack.c.l.b16 %v2661
  %v3068 = vunpack.c.h.b16 %v2661
  %v3069 = vunpack.c.l.b16 %v2662
  %v3070 = vunpack.c.h.b16 %v2662
  %v3071 = vunpack.c.l.b16 %v2663
  %v3072 = vunpack.c.h.b16 %v2663
  %v3073 = vunpack.c.l.b16 %v2664
  %v3074 = vunpack.c.h.b16 %v2664
  %v3075 = vunpack.c.l.b16 %v2665
  %v3076 = vunpack.c.h.b16 %v2665
  %v3077 = vunpack.c.l.b16 %v2666
  %v3078 = vunpack.c.h.b16 %v2666
  %v3079 = vunpack.c.l.b16 %v2667
  %v3080 = vunpack.c.h.b16 %v2667
  %v3081 = vunpack.c.l.b16 %v2668
  %v3082 = vunpack.c.h.b16 %v2668
  %v3083 = vunpack.c.l.b16 %v2669
  %v3084 = vunpack.c.h.b16 %v2669
  %v3085 = vunpack.c.l.b16 %v2670
  %v3086 = vunpack.c.h.b16 %v2670
  %v3087 = vunpack.c.l.b16 %v2671
  %v3088 = vunpack.c.h.b16 %v2671
  %v3089 = vunpack.c.l.b16 %v2672
  %v3090 = vunpack.c.h.b16 %v2672
  %v3091 = vunpack.c.l.b16 %v2673
  %v3092 = vunpack.c.h.b16 %v2673
  %v3093 = vunpack.c.l.b16 %v2674
  %v3094 = vunpack.c.h.b16 %v2674
  %v3095 = vunpack.c.l.b16 %v2675
  %v3096 = vunpack.c.h.b16 %v2675
  %v3097 = vunpack.c.l.b16 %v2676
  %v3098 = vunpack.c.h.b16 %v2676
  %v3099 = vunpack.c.l.b16 %v2677
  %v3100 = vunpack.c.h.b16 %v2677
  %v3101 = vunpack.c.l.b16 %v2678
  %v3102 = vunpack.c.h.b16 %v2678
  %v3103 = vunpack.c.l.b16 %v2679
  %v3104 = vunpack.c.h.b16 %v2679
  %v3105 = vunpack.c.l.b16 %v2680
  %v3106 = vunpack.c.h.b16 %v2680
  %v3107 = vunpack.c.l.b16 %v2681
  %v3108 = vunpack.c.h.b16 %v2681
  %v3109 = vunpack.c.l.b16 %v2682
  %v3110 = vunpack.c.h.b16 %v2682
  %v3111 = vunpack.c.l.b16 %v2683
  %v3112 = vunpack.c.h.b16 %v2683
  %v3113 = vunpack.c.l.b16 %v2684
  %v3114 = vunpack.c.h.b16 %v2684
  %v3115 = vunpack.c.l.b16 %v2685
  %v3116 = vunpack.c.h.b16 %v2685
  %v3117 = vunpack.c.l.b16 %v2686
  %v3118 = vunpack.c.h.b16 %v2686
  %v3119 = vunpack.c.l.b16 %v2687
  %v3120 = vunpack.c.h.b16 %v2687
  %v3121 = vunpack.c.l.b16 %v2688
  %v3122 = vunpack.c.h.b16 %v2688
  %v3123 = vunpack.c.l.b16 %v2689
  %v3124 = vunpack.c.h.b16 %v2689
  %v3125 = vunpack.c.l.b16 %v2690
  %v3126 = vunpack.c.h.b16 %v2690
  %v3127 = vunpack.c.l.b16 %v2691
  %v3128 = vunpack.c.h.b16 %v2691
  %v3129 = vunpack.c.l.b16 %v2692
  %v3130 = vunpack.c.h.b16 %v2692
  %v3131 = vunpack.c.l.b16 %v2693
  %v3132 = vunpack.c.h.b16 %v2693
  %v3133 = vunpack.c.l.b16 %v2694
  %v3134 = vunpack.c.h.b16 %v2694
  %v3135 = vunpack.c.l.b16 %v2695
  %v3136 = vunpack.c.h.b16 %v2695
  %v3137 = vunpack.c.l.b16 %v2696
  %v3138 = vunpack.c.h.b16 %v2696
  %v3139 = vunpack.c.l.b16 %v2697
  %v3140 = vunpack.c.h.b16 %v2697
  %v3141 = vunpack.c.l.b16 %v2698
  %v3142 = vunpack.c.h.b16 %v2698
  %v3143 = vunpack.c.l.b16 %v2699
  %v3144 = vunpack.c.h.b16 %v2699
  %v3145 = vunpack.c.l.b16 %v2700
  %v3146 = vunpack.c.h.b16 %v2700
  %v3147 = vunpack.c.l.b16 %v2701
  %v3148 = vunpack.c.h.b16 %v2701
  %v3149 = vunpack.c.l.b16 %v2702
  %v3150 = vunpack.c.h.b16 %v2702
  %v3151 = vunpack.c.l.b16 %v2703
  %v3152 = vunpack.c.h.b16 %v2703
  %v3153 = vunpack.c.l.b16 %v2704
  %v3154 = vunpack.c.h.b16 %v2704
  %v3155 = vunpack.c.l.b16 %v2705
  %v3156 = vunpack.c.h.b16 %v2705
  %v3157 = vunpack.c.l.b16 %v2706
  %v3158 = vunpack.c.h.b16 %v2706
  %v3159 = vunpack.c.l.b16 %v2707
  %v3160 = vunpack.c.h.b16 %v2707
  %v3161 = vunpack.c.l.b16 %v2708
  %v3162 = vunpack.c.h.b16 %v2708
  %v3163 = vunpack.c.l.b16 %v2709
  %v3164 = vunpack.c.h.b16 %v2709
  %v3165 = vunpack.c.l.b16 %v2710
  %v3166 = vunpack.c.h.b16 %v2710
  %v3167 = vunpack.c.l.b16 %v2711
  %v3168 = vunpack.c.h.b16 %v2711
  %v3169 = vunpack.c.l.b16 %v2712
  %v3170 = vunpack.c.h.b16 %v2712
  %v3171 = vunpack.c.l.b16 %v2713
  %v3172 = vunpack.c.h.b16 %v2713
  %v3173 = vunpack.c.l.b16 %v2714
  %v3174 = vunpack.c.h.b16 %v2714
  %v3175 = vunpack.c.l.b16 %v2715
  %v3176 = vunpack.c.h.b16 %v2715
  %v3177 = vunpack.c.l.b16 %v2716
  %v3178 = vunpack.c.h.b16 %v2716
  %v3179 = vunpack.c.l.b16 %v2717
  %v3180 = vunpack.c.h.b16 %v2717
  %v3181 = vunpack.c.l.b16 %v2718
  %v3182 = vunpack.c.h.b16 %v2718
  %v3183 = vunpack.c.l.b16 %v2719
  %v3184 = vunpack.c.h.b16 %v2719
  %v3185 = vunpack.c.l.b16 %v2720
  %v3186 = vunpack.c.h.b16 %v2720
  %v3187 = vunpack.c.l.b16 %v2721
  %v3188 = vunpack.c.h.b16 %v2721
  %v3189 = vunpack.c.l.b16 %v2722
  %v3190 = vunpack.c.h.b16 %v2722
  %v3191 = vunpack.c.l.b16 %v2723
  %v3192 = vunpack.c.h.b16 %v2723
  %v3193 = vunpack.c.l.b16 %v2724
  %v3194 = vunpack.c.h.b16 %v2724
  %v3195 = vunpack.c.l.b16 %v2725
  %v3196 = vunpack.c.h.b16 %v2725
  %v3197 = vunpack.c.l.b16 %v2726
  %v3198 = vunpack.c.h.b16 %v2726
  %v3199 = vunpack.c.l.b16 %v2727
  %v3200 = vunpack.c.h.b16 %v2727
  %v3201 = vunpack.c.l.b16 %v2728
  %v3202 = vunpack.c.h.b16 %v2728
  %v3203 = vunpack.c.l.b16 %v2729
  %v3204 = vunpack.c.h.b16 %v2729
  %v3205 = vunpack.c.l.b16 %v2730
  %v3206 = vunpack.c.h.b16 %v2730
  %v3207 = vunpack.c.l.b16 %v2731
  %v3208 = vunpack.c.h.b16 %v2731
  %v3209 = vunpack.c.l.b16 %v2732
  %v3210 = vunpack.c.h.b16 %v2732
  %v3211 = vunpack.c.l.b16 %v2733
  %v3212 = vunpack.c.h.b16 %v2733
  %v3213 = vunpack.c.l.b16 %v2734
  %v3214 = vunpack.c.h.b16 %v2734
  %v3215 = vunpack.c.l.b16 %v2735
  %v3216 = vunpack.c.h.b16 %v2735
  %v3217 = vunpack.c.l.b16 %v2736
  %v3218 = vunpack.c.h.b16 %v2736
  %v3219 = vunpack.c.l.b16 %v2737
  %v3220 = vunpack.c.h.b16 %v2737
  %v3221 = vunpack.c.l.b16 %v2738
  %v3222 = vunpack.c.h.b16 %v2738
  %v3223 = vunpack.c.l.b16 %v2739
  %v3224 = vunpack.c.h.b16 %v2739
  %v3225 = vunpack.c.l.b16 %v2740
  %v3226 = vunpack.c.h.b16 %v2740
  %v3227 = vunpack.c.l.b16 %v2741
  %v3228 = vunpack.c.h.b16 %v2741
  %v3229 = vunpack.c.l.b16 %v2742
  %v3230 = vunpack.c.h.b16 %v2742
  %v3231 = vunpack.c.l.b16 %v2743
  %v3232 = vunpack.c.h.b16 %v2743
  %v3233 = vunpack.c.l.b16 %v2744
  %v3234 = vunpack.c.h.b16 %v2744
  %v3235 = vunpack.c.l.b16 %v2745
  %v3236 = vunpack.c.h.b16 %v2745
  %v3237 = vunpack.c.l.b16 %v2746
  %v3238 = vunpack.c.h.b16 %v2746
  %v3239 = vunpack.c.l.b16 %v2747
  %v3240 = vunpack.c.h.b16 %v2747
  %v3241 = vunpack.c.l.b16 %v2748
  %v3242 = vunpack.c.h.b16 %v2748
  %v3243 = vunpack.c.l.b16 %v2749
  %v3244 = vunpack.c.h.b16 %v2749
  %v3245 = vunpack.c.l.b16 %v2750
  %v3246 = vunpack.c.h.b16 %v2750
  %v3247 = vunpack.c.l.b16 %v2751
  %v3248 = vunpack.c.h.b16 %v2751
  %v3249 = vunpack.c.l.b16 %v2752
  %v3250 = vunpack.c.h.b16 %v2752
  %v3251 = vunpack.c.l.b16 %v2753
  %v3252 = vunpack.c.h.b16 %v2753
  %v3253 = vunpack.c.l.b16 %v2754
  %v3254 = vunpack.c.h.b16 %v2754
  %v3255 = vunpack.c.l.b16 %v2755
  %v3256 = vunpack.c.h.b16 %v2755
  %v3257 = vunpack.c.l.b16 %v2756
  %v3258 = vunpack.c.h.b16 %v2756
  %v3259 = vunpack.c.l.b16 %v2757
  %v3260 = vunpack.c.h.b16 %v2757
  %v3261 = vunpack.c.l.b16 %v2758
  %v3262 = vunpack.c.h.b16 %v2758
  %v3263 = vunpack.c.l.b16 %v2759
  %v3264 = vunpack.c.h.b16 %v2759
  %v3265 = vunpack.c.l.b16 %v2760
  %v3266 = vunpack.c.h.b16 %v2760
  %v3267 = vunpack.c.l.b16 %v2761
  %v3268 = vunpack.c.h.b16 %v2761
  %v3269 = vunpack.c.l.b16 %v2762
  %v3270 = vunpack.c.h.b16 %v2762
  %v3271 = vunpack.c.l.b16 %v2763
  %v3272 = vunpack.c.h.b16 %v2763
  %v3273 = vunpack.c.l.b16 %v2764
  %v3274 = vunpack.c.h.b16 %v2764
  %v3275 = vunpack.c.l.b16 %v2765
  %v3276 = vunpack.c.h.b16 %v2765
  %v3277 = vunpack.c.l.b16 %v2766
  %v3278 = vunpack.c.h.b16 %v2766
  %v3279 = vunpack.c.l.b16 %v2767
  %v3280 = vunpack.c.h.b16 %v2767
  %v3281 = vunpack.c.l.b16 %v2768
  %v3282 = vunpack.c.h.b16 %v2768
  %v3283 = vunpack.c.l.b16 %v2769
  %v3284 = vunpack.c.h.b16 %v2769
  %v3285 = vunpack.c.l.b16 %v2770
  %v3286 = vunpack.c.h.b16 %v2770
  %v3287 = vunpack.c.l.b16 %v2771
  %v3288 = vunpack.c.h.b16 %v2771
  %v3289 = vunpack.c.l.b16 %v2772
  %v3290 = vunpack.c.h.b16 %v2772
  %v3291 = vunpack.c.l.b16 %v2773
  %v3292 = vunpack.c.h.b16 %v2773
  %v3293 = vunpack.c.l.b16 %v2774
  %v3294 = vunpack.c.h.b16 %v2774
  %v3295 = vunpack.c.l.b16 %v2775
  %v3296 = vunpack.c.h.b16 %v2775
  %v3297 = vunpack.c.l.b16 %v2776
  %v3298 = vunpack.c.h.b16 %v2776
  %v3299 = vunpack.c.l.b16 %v2777
  %v3300 = vunpack.c.h.b16 %v2777
  %v3301 = vunpack.c.l.b16 %v2778
  %v3302 = vunpack.c.h.b16 %v2778
  %v3303 = vunpack.c.l.b16 %v2779
  %v3304 = vunpack.c.h.b16 %v2779
  %v3305 = vunpack.c.l.b16 %v2780
  %v3306 = vunpack.c.h.b16 %v2780
  %v3307 = vunpack.c.l.b16 %v2781
  %v3308 = vunpack.c.h.b16 %v2781
  %v3309 = vunpack.c.l.b16 %v2782
  %v3310 = vunpack.c.h.b16 %v2782
  %v3311 = vunpack.c.l.b16 %v2783
  %v3312 = vunpack.c.h.b16 %v2783
  %v3313 = vunpack.c.l.b16 %v2784
  %v3314 = vunpack.c.h.b16 %v2784
  %v3315 = vunpack.c.l.b16 %v2785
  %v3316 = vunpack.c.h.b16 %v2785
  %v3317 = vunpack.c.l.b16 %v2786
  %v3318 = vunpack.c.h.b16 %v2786
  %v3319 = vunpack.c.l.b16 %v2787
  %v3320 = vunpack.c.h.b16 %v2787
  %v3321 = vunpack.c.l.b16 %v2788
  %v3322 = vunpack.c.h.b16 %v2788
  %v3323 = vunpack.c.l.b16 %v2789
  %v3324 = vunpack.c.h.b16 %v2789
  %v3325 = vunpack.c.l.b16 %v2790
  %v3326 = vunpack.c.h.b16 %v2790
  %v3327 = vunpack.c.l.b16 %v2791
  %v3328 = vunpack.c.h.b16 %v2791
  %v3329 = vunpack.c.l.b16 %v2792
  %v3330 = vunpack.c.h.b16 %v2792
  %v3331 = vunpack.c.l.b16 %v2793
  %v3332 = vunpack.c.h.b16 %v2793
  %v3333 = vunpack.c.l.b16 %v2794
  %v3334 = vunpack.c.h.b16 %v2794
  %v3335 = vunpack.c.l.b16 %v2795
  %v3336 = vunpack.c.h.b16 %v2795
  %v3337 = vunpack.c.l.b16 %v2796
  %v3338 = vunpack.c.h.b16 %v2796
  %v3339 = vunpack.c.l.b16 %v2797
  %v3340 = vunpack.c.h.b16 %v2797
  %v3341 = vunpack.c.l.b16 %v2798
  %v3342 = vunpack.c.h.b16 %v2798
  %v3343 = vunpack.c.l.b16 %v2799
  %v3344 = vunpack.c.h.b16 %v2799
  %v3345 = vunpack.c.l.b16 %v2800
  %v3346 = vunpack.c.h.b16 %v2800
  %v3347 = vunpack.c.l.b16 %v2801
  %v3348 = vunpack.c.h.b16 %v2801
  %v3349 = vunpack.c.l.b16 %v2802
  %v3350 = vunpack.c.h.b16 %v2802
  %v3351 = vunpack.c.l.b16 %v2803
  %v3352 = vunpack.c.h.b16 %v2803
  %v3353 = vunpack.c.l.b16 %v2804
  %v3354 = vunpack.c.h.b16 %v2804
  %v3355 = vunpack.c.l.b16 %v2805
  %v3356 = vunpack.c.h.b16 %v2805
  %v3357 = vunpack.c.l.b16 %v2806
  %v3358 = vunpack.c.h.b16 %v2806
  %v3359 = vunpack.c.l.b16 %v2807
  %v3360 = vunpack.c.h.b16 %v2807
  %v3361 = vunpack.c.l.b16 %v2808
  %v3362 = vunpack.c.h.b16 %v2808
  %v3363 = vunpack.c.l.b16 %v2809
  %v3364 = vunpack.c.h.b16 %v2809
  %v3365 = vunpack.c.l.b16 %v2810
  %v3366 = vunpack.c.h.b16 %v2810
  %v3367 = vunpack.c.l.b16 %v2811
  %v3368 = vunpack.c.h.b16 %v2811
  %v3369 = vunpack.c.l.b16 %v2812
  %v3370 = vunpack.c.h.b16 %v2812
  %v3371 = vunpack.c.l.b16 %v2813
  %v3372 = vunpack.c.h.b16 %v2813
  %v3373 = vunpack.c.l.b16 %v2814
  %v3374 = vunpack.c.h.b16 %v2814
  %v3375 = vunpack.c.l.b16 %v2815
  %v3376 = vunpack.c.h.b16 %v2815
  %v3377 = vunpack.c.l.b16 %v2816
  %v3378 = vunpack.c.h.b16 %v2816
  %v3379 = vunpack.c.l.b16 %v2817
  %v3380 = vunpack.c.h.b16 %v2817
  %v3381 = vunpack.c.l.b16 %v2818
  %v3382 = vunpack.c.h.b16 %v2818
  %v3383 = vunpack.c.l.b16 %v2819
  %v3384 = vunpack.c.h.b16 %v2819
  %v3385 = vunpack.c.l.b16 %v2820
  %v3386 = vunpack.c.h.b16 %v2820
  %v3387 = vunpack.c.l.b16 %v2821
  %v3388 = vunpack.c.h.b16 %v2821
  %v3389 = vunpack.c.l.b16 %v2822
  %v3390 = vunpack.c.h.b16 %v2822
  %v3391 = vunpack.c.l.b16 %v2823
  %v3392 = vunpack.c.h.b16 %v2823
  %v3393 = vunpack.c.l.b16 %v2824
  %v3394 = vunpack.c.h.b16 %v2824
  %v3395 = vunpack.c.l.b16 %v2825
  %v3396 = vunpack.c.h.b16 %v2825
  %v3397 = vunpack.c.l.b16 %v2826
  %v3398 = vunpack.c.h.b16 %v2826
  %v3399 = vunpack.c.l.b16 %v2827
  %v3400 = vunpack.c.h.b16 %v2827
  %v3401 = vunpack.c.l.b16 %v2828
  %v3402 = vunpack.c.h.b16 %v2828
  %v3403 = vunpack.c.l.b16 %v2829
  %v3404 = vunpack.c.h.b16 %v2829
  %v3405 = vunpack.c.l.b16 %v2830
  %v3406 = vunpack.c.h.b16 %v2830
  %v3407 = vunpack.c.l.b16 %v2831
  %v3408 = vunpack.c.h.b16 %v2831
  %v3409 = vunpack.c.l.b16 %v2832
  %v3410 = vunpack.c.h.b16 %v2832
  %v3411 = vunpack.c.l.b16 %v2833
  %v3412 = vunpack.c.h.b16 %v2833
  %v3413 = vunpack.c.l.b16 %v2834
  %v3414 = vunpack.c.h.b16 %v2834
  %v3415 = vunpack.c.l.b16 %v2835
  %v3416 = vunpack.c.h.b16 %v2835
  %v3417 = vunpack.c.l.b16 %v2836
  %v3418 = vunpack.c.h.b16 %v2836
  %v3419 = vunpack.c.l.b16 %v2837
  %v3420 = vunpack.c.h.b16 %v2837
  %v3421 = vunpack.c.l.b16 %v2838
  %v3422 = vunpack.c.h.b16 %v2838
  %v3423 = vunpack.c.l.b16 %v2839
  %v3424 = vunpack.c.h.b16 %v2839
  %v3425 = vunpack.c.l.b16 %v2840
  %v3426 = vunpack.c.h.b16 %v2840
  %v3427 = vunpack.c.l.b16 %v2841
  %v3428 = vunpack.c.h.b16 %v2841
  %v3429 = vunpack.c.l.b16 %v2842
  %v3430 = vunpack.c.h.b16 %v2842
  %v3431 = vpack.c.b16 %v3049, %v3047
  %v3432 = vpack.c.b16 %v3050, %v3048
  %v3433 = vpack.c.b16 %v3053, %v3051
  %v3434 = vpack.c.b16 %v3054, %v3052
  %v3435 = vpack.c.b16 %v3057, %v3055
  %v3436 = vpack.c.b16 %v3058, %v3056
  %v3437 = vpack.c.b16 %v3061, %v3059
  %v3438 = vpack.c.b16 %v3062, %v3060
  %v3439 = vpack.c.b16 %v3065, %v3063
  %v3440 = vpack.c.b16 %v3066, %v3064
  %v3441 = vpack.c.b16 %v3069, %v3067
  %v3442 = vpack.c.b16 %v3070, %v3068
  %v3443 = vpack.c.b16 %v3073, %v3071
  %v3444 = vpack.c.b16 %v3074, %v3072
  %v3445 = vpack.c.b16 %v3077, %v3075
  %v3446 = vpack.c.b16 %v3078, %v3076
  %v3447 = vpack.c.b16 %v3081, %v3079
  %v3448 = vpack.c.b16 %v3082, %v3080
  %v3449 = vpack.c.b16 %v3085, %v3083
  %v3450 = vpack.c.b16 %v3086, %v3084
  %v3451 = vpack.c.b16 %v3089, %v3087
  %v3452 = vpack.c.b16 %v3090, %v3088
  %v3453 = vpack.c.b16 %v3093, %v3091
  %v3454 = vpack.c.b16 %v3094, %v3092
  %v3455 = vpack.c.b16 %v3097, %v3095
  %v3456 = vpack.c.b16 %v3098, %v3096
  %v3457 = vpack.c.b16 %v3101, %v3099
  %v3458 = vpack.c.b16 %v3102, %v3100
  %v3459 = vpack.c.b16 %v3105, %v3103
  %v3460 = vpack.c.b16 %v3106, %v3104
  %v3461 = vpack.c.b16 %v3109, %v3107
  %v3462 = vpack.c.b16 %v3110, %v3108
  %v3463 = vpack.c.b16 %v3113, %v3111
  %v3464 = vpack.c.b16 %v3114, %v3112
  %v3465 = vpack.c.b16 %v3117, %v3115
  %v3466 = vpack.c.b16 %v3118, %v3116
  %v3467 = vpack.c.b16 %v3121, %v3119
  %v3468 = vpack.c.b16 %v3122, %v3120
  %v3469 = vpack.c.b16 %v3125, %v3123
  %v3470 = vpack.c.b16 %v3126, %v3124
  %v3471 = vpack.c.b16 %v3129, %v3127
  %v3472 = vpack.c.b16 %v3130, %v3128
  %v3473 = vpack.c.b16 %v3133, %v3131
  %v3474 = vpack.c.b16 %v3134, %v3132
  %v3475 = vpack.c.b16 %v3137, %v3135
  %v3476 = vpack.c.b16 %v3138, %v3136
  %v3477 = vpack.c.b16 %v3141, %v3139
  %v3478 = vpack.c.b16 %v3142, %v3140
  %v3479 = vpack.c.b16 %v3145, %v3143
  %v3480 = vpack.c.b16 %v3146, %v3144
  %v3481 = vpack.c.b16 %v3149, %v3147
  %v3482 = vpack.c.b16 %v3150, %v3148
  %v3483 = vpack.c.b16 %v3153, %v3151
  %v3484 = vpack.c.b16 %v3154, %v3152
  %v3485 = vpack.c.b16 %v3157, %v3155
  %v3486 = vpack.c.b16 %v3158, %v3156
  %v3487 = vpack.c.b16 %v3161, %v3159
  %v3488 = vpack.c.b16 %v3162, %v3160
  %v3489 = vpack.c.b16 %v3165, %v3163
  %v3490 = vpack.c.b16 %v3166, %v3164
  %v3491 = vpack.c.b16 %v3169, %v3167
  %v3492 = vpack.c.b16 %v3170, %v3168
  %v3493 = vpack.c.b16 %v3173, %v3171
  %v3494 = vpack.c.b16 %v3174, %v3172
  %v3495 = vpack.c.b16 %v3177, %v3175
  %v3496 = vpack.c.b16 %v3178, %v3176
  %v3497 = vpack.c.b16 %v3181, %v3179
  %v3498 = vpack.c.b16 %v3182, %v3180
  %v3499 = vpack.c.b16 %v3185, %v3183
  %v3500 = vpack.c.b16 %v3186, %v3184
  %v3501 = vpack.c.b16 %v3189, %v3187
  %v3502 = vpack.c.b16 %v3190, %v3188
  %v3503 = vpack.c.b16 %v3193, %v3191
  %v3504 = vpack.c.b16 %v3194, %v3192
  %v3505 = vpack.c.b16 %v3197, %v3195
  %v3506 = vpack.c.b16 %v3198, %v3196
  %v3507 = vpack.c.b16 %v3201, %v3199
  %v3508 = vpack.c.b16 %v3202, %v3200
  %v3509 = vpack.c.b16 %v3205, %v3203
  %v3510 = vpack.c.b16 %v3206, %v3204
  %v3511 = vpack.c.b16 %v3209, %v3207
  %v3512 = vpack.c.b16 %v3210, %v3208
  %v3513 = vpack.c.b16 %v3213, %v3211
  %v3514 = vpack.c.b16 %v3214, %v3212
  %v3515 = vpack.c.b16 %v3217, %v3215
  %v3516 = vpack.c.b16 %v3218, %v3216
  %v3517 = vpack.c.b16 %v3221, %v3219
  %v3518 = vpack.c.b16 %v3222, %v3220
  %v3519 = vpack.c.b16 %v3225, %v3223
  %v3520 = vpack.c.b16 %v3226, %v3224
  %v3521 = vpack.c.b16 %v3229, %v3227
  %v3522 = vpack.c.b16 %v3230, %v3228
  %v3523 = vpack.c.b16 %v3233, %v3231
  %v3524 = vpack.c.b16 %v3234, %v3232
  %v3525 = vpack.c.b16 %v3237, %v3235
  %v3526 = vpack.c.b16 %v3238, %v3236
  %v3527 = vpack.c.b16 %v3241, %v3239
  %v3528 = vpack.c.b16 %v3242, %v3240
  %v3529 = vpack.c.b16 %v3245, %v3243
  %v3530 = vpack.c.b16 %v3246, %v3244
  %v3531 = vpack.c.b16 %v3249, %v3247
  %v3532 = vpack.c.b16 %v3250, %v3248
  %v3533 = vpack.c.b16 %v3253, %v3251
  %v3534 = vpack.c.b16 %v3254, %v3252
  %v3535 = vpack.c.b16 %v3257, %v3255
  %v3536 = vpack.c.b16 %v3258, %v3256
  %v3537 = vpack.c.b16 %v3261, %v3259
  %v3538 = vpack.c.b16 %v3262, %v3260
  %v3539 = vpack.c.b16 %v3265, %v3263
  %v3540 = vpack.c.b16 %v3266, %v3264
  %v3541 = vpack.c.b16 %v3269, %v3267
  %v3542 = vpack.c.b16 %v3270, %v3268
  %v3543 = vpack.c.b16 %v3273, %v3271
  %v3544 = vpack.c.b16 %v3274, %v3272
  %v3545 = vpack.c.b16 %v3277, %v3275
  %v3546 = vpack.c.b16 %v3278, %v3276
  %v3547 = vpack.c.b16 %v3281, %v3279
  %v3548 = vpack.c.b16 %v3282, %v3280
  %v3549 = vpack.c.b16 %v3285, %v3283
  %v3550 = vpack.c.b16 %v3286, %v3284
  %v3551 = vpack.c.b16 %v3289, %v3287
  %v3552 = vpack.c.b16 %v3290, %v3288
  %v3553 = vpack.c.b16 %v3293, %v3291
  %v3554 = vpack.c.b16 %v3294, %v3292
  %v3555 = vpack.c.b16 %v3297, %v3295
  %v3556 = vpack.c.b16 %v3298, %v3296
  %v3557 = vpack.c.b16 %v3301, %v3299
  %v3558 = vpack.c.b16 %v3302, %v3300
  %v3559 = vpack.c.b16 %v3305, %v3303
  %v3560 = vpack.c.b16 %v3306, %v3304
  %v3561 = vpack.c.b16 %v3309, %v3307
  %v3562 = vpack.c.b16 %v3310, %v3308
  %v3563 = vpack.c.b16 %v3313, %v3311
  %v3564 = vpack.c.b16 %v3314, %v3312
  %v3565 = vpack.c.b16 %v3317, %v3315
  %v3566 = vpack.c.b16 %v3318, %v3316
  %v3567 = vpack.c.b16 %v3321, %v3319
  %v3568 = vpack.c.b16 %v3322, %v3320
  %v3569 = vpack.c.b16 %v3325, %v3323
  %v3570 = vpack.c.b16 %v3326, %v3324
  %v3571 = vpack.c.b16 %v3329, %v3327
  %v3572 = vpack.c.b16 %v3330, %v3328
  %v3573 = vpack.c.b16 %v3333, %v3331
  %v3574 = vpack.c.b16 %v3334, %v3332
  %v3575 = vpack.c.b16 %v3337, %v3335
  %v3576 = vpack.c.b16 %v3338, %v3336
  %v3577 = vpack.c.b16 %v3341, %v3339
  %v3578 = vpack.c.b16 %v3342, %v3340
  %v3579 = vpack.c.b16 %v3345, %v3343
  %v3580 = vpack.c.b16 %v3346, %v3344
  %v3581 = vpack.c.b16 %v3349, %v3347
  %v3582 = vpack.c.b16 %v3350, %v3348
  %v3583 = vpack.c.b16 %v3353, %v3351
  %v3584 = vpack.c.b16 %v3354, %v3352
  %v3585 = vpack.c.b16 %v3357, %v3355
  %v3586 = vpack.c.b16 %v3358, %v3356
  %v3587 = vpack.c.b16 %v3361, %v3359
  %v3588 = vpack.c.b16 %v3362, %v3360
  %v3589 = vpack.c.b16 %v3365, %v3363
  %v3590 = vpack.c.b16 %v3366, %v3364
  %v3591 = vpack.c.b16 %v3369, %v3367
  %v3592 = vpack.c.b16 %v3370, %v3368
  %v3593 = vpack.c.b16 %v3373, %v3371
  %v3594 = vpack.c.b16 %v3374, %v3372
  %v3595 = vpack.c.b16 %v3377, %v3375
  %v3596 = vpack.c.b16 %v3378, %v3376
  %v3597 = vpack.c.b16 %v3381, %v3379
  %v3598 = vpack.c.b16 %v3382, %v3380
  %v3599 = vpack.c.b16 %v3385, %v3383
  %v3600 = vpack.c.b16 %v3386, %v3384
  %v3601 = vpack.c.b16 %v3389, %v3387
  %v3602 = vpack.c.b16 %v3390, %v3388
  %v3603 = vpack.c.b16 %v3393, %v3391
  %v3604 = vpack.c.b16 %v3394, %v3392
  %v3605 = vpack.c.b16 %v3397, %v3395
  %v3606 = vpack.c.b16 %v3398, %v3396
  %v3607 = vpack.c.b16 %v3401, %v3399
  %v3608 = vpack.c.b16 %v3402, %v3400
  %v3609 = vpack.c.b16 %v3405, %v3403
  %v3610 = vpack.c.b16 %v3406, %v3404
  %v3611 = vpack.c.b16 %v3409, %v3407
  %v3612 = vpack.c.b16 %v3410, %v3408
  %v3613 = vpack.c.b16 %v3413, %v3411
  %v3614 = vpack.c.b16 %v3414, %v3412
  %v3615 = vpack.c.b16 %v3417, %v3415
  %v3616 = vpack.c.b16 %v3418, %v3416
  %v3617 = vpack.c.b16 %v3421, %v3419
  %v3618 = vpack.c.b16 %v3422, %v3420
  %v3619 = vpack.c.b16 %v3425, %v3423
  %v3620 = vpack.c.b16 %v3426, %v3424
  %v3621 = vpack.c.b16 %v3429, %v3427
  %v3622 = vpack.c.b16 %v3430, %v3428
  %3815 = vmatprep.subr.bf16.mxu0 %v3446
  %3816 = vmatpush1.bf16.msra.mxu0 %v3445
  %3817 = vmatprep.subr.bf16.mxu0 %v3444
  %3818 = vmatpush1.bf16.msra.mxu0 %v3443
  %3819 = vmatprep.subr.bf16.mxu0 %v3442
  %3820 = vmatpush1.bf16.msra.mxu0 %v3441
  %3821 = vmatprep.subr.bf16.mxu0 %v3440
  %3822 = vmatpush1.bf16.msra.mxu0 %v3439
  %3823 = vmatprep.subr.bf16.mxu0 %v3438
  %3824 = vmatpush1.bf16.msra.mxu0 %v3437
  %3825 = vmatprep.subr.bf16.mxu0 %v3436
  %3826 = vmatpush1.bf16.msra.mxu0 %v3435
  %3827 = vmatprep.subr.bf16.mxu0 %v3434
  %3828 = vmatpush1.bf16.msra.mxu0 %v3433
  %3829 = vmatprep.subr.bf16.mxu0 %v3432
  %3830 = vmatpush1.bf16.msra.mxu0 %v3431
  %3831 = vmatprep.subr.bf16.mxu0 %v3462
  %3832 = vmatpush2.bf16.msra.mxu0 %v3461
  %3833 = vmatprep.subr.bf16.mxu0 %v3460
  %3834 = vmatpush2.bf16.msra.mxu0 %v3459
  %3835 = vmatprep.subr.bf16.mxu0 %v3458
  %3836 = vmatpush2.bf16.msra.mxu0 %v3457
  %3837 = vmatprep.subr.bf16.mxu0 %v3456
  %3838 = vmatpush2.bf16.msra.mxu0 %v3455
  %3839 = vmatprep.subr.bf16.mxu0 %v3454
  %3840 = vmatpush2.bf16.msra.mxu0 %v3453
  %3841 = vmatprep.subr.bf16.mxu0 %v3452
  %3842 = vmatpush2.bf16.msra.mxu0 %v3451
  %3843 = vmatprep.subr.bf16.mxu0 %v3450
  %3844 = vmatpush2.bf16.msra.mxu0 %v3449
  %3845 = vmatprep.subr.bf16.mxu0 %v3448
  %3846 = vmatpush2.bf16.msra.mxu0 %v3447
  %3847 = vmatprep.mubr.bf16.mxu0 %v2439
  %3848 = vmatmul.mubr.bf16.gmra.mxu0 %v2438
  %v3849 = vpop.f32.mrf.mxu0
  %v3850 = vadd.f32 %v2848, %v3849
  %v3851 = vpop.f32.mrf.mxu0
  %v3852 = vadd.f32 %v2852, %v3851
  %v3853 = vpop.f32.mrf.mxu0
  %v3854 = vadd.f32 %v2848, %v3853
  %v3855 = vpop.f32.mrf.mxu0
  %v3856 = vadd.f32 %v2852, %v3855
  %3857 = vmatprep.mubr.bf16.mxu0 %v2556
  %3858 = vmatmul.mubr.bf16.gmra.mxu0 %v2555
  %v3859 = vpop.f32.mrf.mxu0
  %v3860 = vadd.f32 %v2848, %v3859
  %v3861 = vpop.f32.mrf.mxu0
  %v3862 = vadd.f32 %v2852, %v3861
  %v3863 = vpop.f32.mrf.mxu0
  %v3864 = vadd.f32 %v2848, %v3863
  %v3865 = vpop.f32.mrf.mxu0
  %v3866 = vadd.f32 %v2852, %v3865
  %3867 = vdwg.mxu0
  %3868 = vmatprep.subr.bf16.mxu0 %v3478
  %3869 = vmatpush1.bf16.msra.mxu0 %v3477
  %3870 = vmatprep.subr.bf16.mxu0 %v3476
  %3871 = vmatpush1.bf16.msra.mxu0 %v3475
  %3872 = vmatprep.subr.bf16.mxu0 %v3474
  %3873 = vmatpush1.bf16.msra.mxu0 %v3473
  %3874 = vmatprep.subr.bf16.mxu0 %v3472
  %3875 = vmatpush1.bf16.msra.mxu0 %v3471
  %3876 = vmatprep.subr.bf16.mxu0 %v3470
  %3877 = vmatpush1.bf16.msra.mxu0 %v3469
  %3878 = vmatprep.subr.bf16.mxu0 %v3468
  %3879 = vmatpush1.bf16.msra.mxu0 %v3467
  %3880 = vmatprep.subr.bf16.mxu0 %v3466
  %3881 = vmatpush1.bf16.msra.mxu0 %v3465
  %3882 = vmatprep.subr.bf16.mxu0 %v3464
  %3883 = vmatpush1.bf16.msra.mxu0 %v3463
  %3884 = vmatprep.subr.bf16.mxu0 %v3494
  %3885 = vmatpush2.bf16.msra.mxu0 %v3493
  %3886 = vmatprep.subr.bf16.mxu0 %v3492
  %3887 = vmatpush2.bf16.msra.mxu0 %v3491
  %3888 = vmatprep.subr.bf16.mxu0 %v3490
  %3889 = vmatpush2.bf16.msra.mxu0 %v3489
  %3890 = vmatprep.subr.bf16.mxu0 %v3488
  %3891 = vmatpush2.bf16.msra.mxu0 %v3487
  %3892 = vmatprep.subr.bf16.mxu0 %v3486
  %3893 = vmatpush2.bf16.msra.mxu0 %v3485
  %3894 = vmatprep.subr.bf16.mxu0 %v3484
  %3895 = vmatpush2.bf16.msra.mxu0 %v3483
  %3896 = vmatprep.subr.bf16.mxu0 %v3482
  %3897 = vmatpush2.bf16.msra.mxu0 %v3481
  %3898 = vmatprep.subr.bf16.mxu0 %v3480
  %3899 = vmatpush2.bf16.msra.mxu0 %v3479
  %3900 = vmatprep.mubr.bf16.mxu0 %v2441
  %3901 = vmatmul.mubr.bf16.gmra.mxu0 %v2440
  %v3902 = vpop.f32.mrf.mxu0
  %v3903 = vadd.f32 %v3850, %v3902
  %v3904 = vpop.f32.mrf.mxu0
  %v3905 = vadd.f32 %v3852, %v3904
  %v3906 = vpop.f32.mrf.mxu0
  %v3907 = vadd.f32 %v3854, %v3906
  %v3908 = vpop.f32.mrf.mxu0
  %v3909 = vadd.f32 %v3856, %v3908
  %3910 = vmatprep.mubr.bf16.mxu0 %v2558
  %3911 = vmatmul.mubr.bf16.gmra.mxu0 %v2557
  %v3912 = vpop.f32.mrf.mxu0
  %v3913 = vadd.f32 %v3860, %v3912
  %v3914 = vpop.f32.mrf.mxu0
  %v3915 = vadd.f32 %v3862, %v3914
  %v3916 = vpop.f32.mrf.mxu0
  %v3917 = vadd.f32 %v3864, %v3916
  %v3918 = vpop.f32.mrf.mxu0
  %v3919 = vadd.f32 %v3866, %v3918
  %3920 = vdwg.mxu0
  %3921 = vmatprep.subr.bf16.mxu0 %v3510
  %3922 = vmatpush1.bf16.msra.mxu0 %v3509
  %3923 = vmatprep.subr.bf16.mxu0 %v3508
  %3924 = vmatpush1.bf16.msra.mxu0 %v3507
  %3925 = vmatprep.subr.bf16.mxu0 %v3506
  %3926 = vmatpush1.bf16.msra.mxu0 %v3505
  %3927 = vmatprep.subr.bf16.mxu0 %v3504
  %3928 = vmatpush1.bf16.msra.mxu0 %v3503
  %3929 = vmatprep.subr.bf16.mxu0 %v3502
  %3930 = vmatpush1.bf16.msra.mxu0 %v3501
  %3931 = vmatprep.subr.bf16.mxu0 %v3500
  %3932 = vmatpush1.bf16.msra.mxu0 %v3499
  %3933 = vmatprep.subr.bf16.mxu0 %v3498
  %3934 = vmatpush1.bf16.msra.mxu0 %v3497
  %3935 = vmatprep.subr.bf16.mxu0 %v3496
  %3936 = vmatpush1.bf16.msra.mxu0 %v3495
  %3937 = vmatprep.subr.bf16.mxu0 %v3526
  %3938 = vmatpush2.bf16.msra.mxu0 %v3525
  %3939 = vmatprep.subr.bf16.mxu0 %v3524
  %3940 = vmatpush2.bf16.msra.mxu0 %v3523
  %3941 = vmatprep.subr.bf16.mxu0 %v3522
  %3942 = vmatpush2.bf16.msra.mxu0 %v3521
  %3943 = vmatprep.subr.bf16.mxu0 %v3520
  %3944 = vmatpush2.bf16.msra.mxu0 %v3519
  %3945 = vmatprep.subr.bf16.mxu0 %v3518
  %3946 = vmatpush2.bf16.msra.mxu0 %v3517
  %3947 = vmatprep.subr.bf16.mxu0 %v3516
  %3948 = vmatpush2.bf16.msra.mxu0 %v3515
  %3949 = vmatprep.subr.bf16.mxu0 %v3514
  %3950 = vmatpush2.bf16.msra.mxu0 %v3513
  %3951 = vmatprep.subr.bf16.mxu0 %v3512
  %3952 = vmatpush2.bf16.msra.mxu0 %v3511
  %3953 = vmatprep.mubr.bf16.mxu0 %v2479
  %3954 = vmatmul.mubr.bf16.gmra.mxu0 %v2467
  %v3955 = vpop.f32.mrf.mxu0
  %v3956 = vadd.f32 %v3903, %v3955
  %v3957 = vpop.f32.mrf.mxu0
  %v3958 = vadd.f32 %v3905, %v3957
  %v3959 = vpop.f32.mrf.mxu0
  %v3960 = vadd.f32 %v3907, %v3959
  %v3961 = vpop.f32.mrf.mxu0
  %v3962 = vadd.f32 %v3909, %v3961
  %3963 = vmatprep.mubr.bf16.mxu0 %v2596
  %3964 = vmatmul.mubr.bf16.gmra.mxu0 %v2584
  %v3965 = vpop.f32.mrf.mxu0
  %v3966 = vadd.f32 %v3913, %v3965
  %v3967 = vpop.f32.mrf.mxu0
  %v3968 = vadd.f32 %v3915, %v3967
  %v3969 = vpop.f32.mrf.mxu0
  %v3970 = vadd.f32 %v3917, %v3969
  %v3971 = vpop.f32.mrf.mxu0
  %v3972 = vadd.f32 %v3919, %v3971
  %3973 = vdwg.mxu0
  %3974 = vmatprep.subr.bf16.mxu0 %v3542
  %3975 = vmatpush1.bf16.msra.mxu0 %v3541
  %3976 = vmatprep.subr.bf16.mxu0 %v3540
  %3977 = vmatpush1.bf16.msra.mxu0 %v3539
  %3978 = vmatprep.subr.bf16.mxu0 %v3538
  %3979 = vmatpush1.bf16.msra.mxu0 %v3537
  %3980 = vmatprep.subr.bf16.mxu0 %v3536
  %3981 = vmatpush1.bf16.msra.mxu0 %v3535
  %3982 = vmatprep.subr.bf16.mxu0 %v3534
  %3983 = vmatpush1.bf16.msra.mxu0 %v3533
  %3984 = vmatprep.subr.bf16.mxu0 %v3532
  %3985 = vmatpush1.bf16.msra.mxu0 %v3531
  %3986 = vmatprep.subr.bf16.mxu0 %v3530
  %3987 = vmatpush1.bf16.msra.mxu0 %v3529
  %3988 = vmatprep.subr.bf16.mxu0 %v3528
  %3989 = vmatpush1.bf16.msra.mxu0 %v3527
  %3990 = vmatprep.subr.bf16.mxu0 %v3558
  %3991 = vmatpush2.bf16.msra.mxu0 %v3557
  %3992 = vmatprep.subr.bf16.mxu0 %v3556
  %3993 = vmatpush2.bf16.msra.mxu0 %v3555
  %3994 = vmatprep.subr.bf16.mxu0 %v3554
  %3995 = vmatpush2.bf16.msra.mxu0 %v3553
  %3996 = vmatprep.subr.bf16.mxu0 %v3552
  %3997 = vmatpush2.bf16.msra.mxu0 %v3551
  %3998 = vmatprep.subr.bf16.mxu0 %v3550
  %3999 = vmatpush2.bf16.msra.mxu0 %v3549
  %4000 = vmatprep.subr.bf16.mxu0 %v3548
  %4001 = vmatpush2.bf16.msra.mxu0 %v3547
  %4002 = vmatprep.subr.bf16.mxu0 %v3546
  %4003 = vmatpush2.bf16.msra.mxu0 %v3545
  %4004 = vmatprep.subr.bf16.mxu0 %v3544
  %4005 = vmatpush2.bf16.msra.mxu0 %v3543
  %4006 = vmatprep.mubr.bf16.mxu0 %v2503
  %4007 = vmatmul.mubr.bf16.gmra.mxu0 %v2491
  %v4008 = vpop.f32.mrf.mxu0
  %v4009 = vadd.f32 %v3956, %v4008
  %v4010 = vpop.f32.mrf.mxu0
  %v4011 = vadd.f32 %v3958, %v4010
  %v4012 = vpop.f32.mrf.mxu0
  %v4013 = vadd.f32 %v3960, %v4012
  %v4014 = vpop.f32.mrf.mxu0
  %v4015 = vadd.f32 %v3962, %v4014
  %4016 = vmatprep.mubr.bf16.mxu0 %v2620
  %4017 = vmatmul.mubr.bf16.gmra.mxu0 %v2608
  %v4018 = vpop.f32.mrf.mxu0
  %v4019 = vadd.f32 %v3966, %v4018
  %v4020 = vpop.f32.mrf.mxu0
  %v4021 = vadd.f32 %v3968, %v4020
  %v4022 = vpop.f32.mrf.mxu0
  %v4023 = vadd.f32 %v3970, %v4022
  %v4024 = vpop.f32.mrf.mxu0
  %v4025 = vadd.f32 %v3972, %v4024
  %4026 = vdwg.mxu0
  %4027 = vmatprep.subr.bf16.mxu0 %v3574
  %4028 = vmatpush1.bf16.msra.mxu0 %v3573
  %4029 = vmatprep.subr.bf16.mxu0 %v3572
  %4030 = vmatpush1.bf16.msra.mxu0 %v3571
  %4031 = vmatprep.subr.bf16.mxu0 %v3570
  %4032 = vmatpush1.bf16.msra.mxu0 %v3569
  %4033 = vmatprep.subr.bf16.mxu0 %v3568
  %4034 = vmatpush1.bf16.msra.mxu0 %v3567
  %4035 = vmatprep.subr.bf16.mxu0 %v3566
  %4036 = vmatpush1.bf16.msra.mxu0 %v3565
  %4037 = vmatprep.subr.bf16.mxu0 %v3564
  %4038 = vmatpush1.bf16.msra.mxu0 %v3563
  %4039 = vmatprep.subr.bf16.mxu0 %v3562
  %4040 = vmatpush1.bf16.msra.mxu0 %v3561
  %4041 = vmatprep.subr.bf16.mxu0 %v3560
  %4042 = vmatpush1.bf16.msra.mxu0 %v3559
  %4043 = vmatprep.subr.bf16.mxu0 %v3590
  %4044 = vmatpush2.bf16.msra.mxu0 %v3589
  %4045 = vmatprep.subr.bf16.mxu0 %v3588
  %4046 = vmatpush2.bf16.msra.mxu0 %v3587
  %4047 = vmatprep.subr.bf16.mxu0 %v3586
  %4048 = vmatpush2.bf16.msra.mxu0 %v3585
  %4049 = vmatprep.subr.bf16.mxu0 %v3584
  %4050 = vmatpush2.bf16.msra.mxu0 %v3583
  %4051 = vmatprep.subr.bf16.mxu0 %v3582
  %4052 = vmatpush2.bf16.msra.mxu0 %v3581
  %4053 = vmatprep.subr.bf16.mxu0 %v3580
  %4054 = vmatpush2.bf16.msra.mxu0 %v3579
  %4055 = vmatprep.subr.bf16.mxu0 %v3578
  %4056 = vmatpush2.bf16.msra.mxu0 %v3577
  %4057 = vmatprep.subr.bf16.mxu0 %v3576
  %4058 = vmatpush2.bf16.msra.mxu0 %v3575
  %4059 = vmatprep.mubr.bf16.mxu0 %v2523
  %4060 = vmatmul.mubr.bf16.gmra.mxu0 %v2520
  %v4061 = vpop.f32.mrf.mxu0
  %v4062 = vadd.f32 %v4009, %v4061
  %v4063 = vpop.f32.mrf.mxu0
  %v4064 = vadd.f32 %v4011, %v4063
  %v4065 = vpop.f32.mrf.mxu0
  %v4066 = vadd.f32 %v4013, %v4065
  %v4067 = vpop.f32.mrf.mxu0
  %v4068 = vadd.f32 %v4015, %v4067
  %4069 = vmatprep.mubr.bf16.mxu0 %v2640
  %4070 = vmatmul.mubr.bf16.gmra.mxu0 %v2637
  %v4071 = vpop.f32.mrf.mxu0
  %v4072 = vadd.f32 %v4019, %v4071
  %v4073 = vpop.f32.mrf.mxu0
  %v4074 = vadd.f32 %v4021, %v4073
  %v4075 = vpop.f32.mrf.mxu0
  %v4076 = vadd.f32 %v4023, %v4075
  %v4077 = vpop.f32.mrf.mxu0
  %v4078 = vadd.f32 %v4025, %v4077
  %4079 = vdwg.mxu0
  %4080 = vmatprep.subr.bf16.mxu0 %v3606
  %4081 = vmatpush1.bf16.msra.mxu0 %v3605
  %4082 = vmatprep.subr.bf16.mxu0 %v3604
  %4083 = vmatpush1.bf16.msra.mxu0 %v3603
  %4084 = vmatprep.subr.bf16.mxu0 %v3602
  %4085 = vmatpush1.bf16.msra.mxu0 %v3601
  %4086 = vmatprep.subr.bf16.mxu0 %v3600
  %4087 = vmatpush1.bf16.msra.mxu0 %v3599
  %4088 = vmatprep.subr.bf16.mxu0 %v3598
  %4089 = vmatpush1.bf16.msra.mxu0 %v3597
  %4090 = vmatprep.subr.bf16.mxu0 %v3596
  %4091 = vmatpush1.bf16.msra.mxu0 %v3595
  %4092 = vmatprep.subr.bf16.mxu0 %v3594
  %4093 = vmatpush1.bf16.msra.mxu0 %v3593
  %4094 = vmatprep.subr.bf16.mxu0 %v3592
  %4095 = vmatpush1.bf16.msra.mxu0 %v3591
  %4096 = vmatprep.subr.bf16.mxu0 %v3622
  %4097 = vmatpush2.bf16.msra.mxu0 %v3621
  %4098 = vmatprep.subr.bf16.mxu0 %v3620
  %4099 = vmatpush2.bf16.msra.mxu0 %v3619
  %4100 = vmatprep.subr.bf16.mxu0 %v3618
  %4101 = vmatpush2.bf16.msra.mxu0 %v3617
  %4102 = vmatprep.subr.bf16.mxu0 %v3616
  %4103 = vmatpush2.bf16.msra.mxu0 %v3615
  %4104 = vmatprep.subr.bf16.mxu0 %v3614
  %4105 = vmatpush2.bf16.msra.mxu0 %v3613
  %4106 = vmatprep.subr.bf16.mxu0 %v3612
  %4107 = vmatpush2.bf16.msra.mxu0 %v3611
  %4108 = vmatprep.subr.bf16.mxu0 %v3610
  %4109 = vmatpush2.bf16.msra.mxu0 %v3609
  %4110 = vmatprep.subr.bf16.mxu0 %v3608
  %4111 = vmatpush2.bf16.msra.mxu0 %v3607
  %4112 = vmatprep.mubr.bf16.mxu0 %v2529
  %4113 = vmatmul.mubr.bf16.gmra.mxu0 %v2526
  %v4114 = vpop.f32.mrf.mxu0
  %v4115 = vadd.f32 %v4062, %v4114
  %v4116 = vpop.f32.mrf.mxu0
  %v4117 = vadd.f32 %v4064, %v4116
  %v4118 = vpop.f32.mrf.mxu0
  %v4119 = vadd.f32 %v4066, %v4118
  %v4120 = vpop.f32.mrf.mxu0
  %v4121 = vadd.f32 %v4068, %v4120
  %4122 = vmatprep.mubr.bf16.mxu0 %v2646
  %4123 = vmatmul.mubr.bf16.gmra.mxu0 %v2643
  %v4124 = vpop.f32.mrf.mxu0
  %v4125 = vadd.f32 %v4072, %v4124
  %v4126 = vpop.f32.mrf.mxu0
  %v4127 = vadd.f32 %v4074, %v4126
  %v4128 = vpop.f32.mrf.mxu0
  %v4129 = vadd.f32 %v4076, %v4128
  %v4130 = vpop.f32.mrf.mxu0
  %v4131 = vadd.f32 %v4078, %v4130
  %4132 = vdwg.mxu0
  %v4133 = vmax.f32 %v4115, 0.0
  %v4134 = vmax.f32 %v4117, 0.0
  %v4135 = vmax.f32 %v4119, 0.0
  %v4136 = vmax.f32 %v4121, 0.0
  %v4137 = vmax.f32 %v4125, 0.0
  %v4138 = vmax.f32 %v4127, 0.0
  %v4139 = vmax.f32 %v4129, 0.0
  %v4140 = vmax.f32 %v4131, 0.0
  %v4141 = vpack.c.bf16 %v4135, %v4133
  %v4142 = vpack.c.bf16 %v4136, %v4134
  %v4143 = vpack.c.bf16 %v4139, %v4137
  %v4144 = vpack.c.bf16 %v4140, %v4138
  %v4145 = vld [vmem:[%s7] sm:$0xf]
  %v4146 = vld [vmem:[%s7 + $0x4] sm:$0xf]
  %v4147 = vld [vmem:[%s7 + $0x8] sm:$0xf]
  %v4148 = vld [vmem:[%s7 + $0xc] sm:$0xf]
  %v4149 = vld [vmem:[%s7 + $0x10] sm:$0xf]
  %v4150 = vld [vmem:[%s7 + $0x14] sm:$0xf]
  %v4151 = vld [vmem:[%s7 + $0x18] sm:$0xf]
  %v4152 = vld [vmem:[%s7 + $0x1c] sm:$0xf]
  %v4153 = vld [vmem:[%s7 + $0x20] sm:$0xf]
  %v4154 = vld [vmem:[%s7 + $0x24] sm:$0xf]
  %v4155 = vld [vmem:[%s7 + $0x28] sm:$0xf]
  %v4156 = vld [vmem:[%s7 + $0x2c] sm:$0xf]
  %v4157 = vld [vmem:[%s7 + $0x30] sm:$0xf]
  %v4158 = vld [vmem:[%s7 + $0x34] sm:$0xf]
  %v4159 = vld [vmem:[%s7 + $0x38] sm:$0xf]
  %v4160 = vld [vmem:[%s7 + $0x3c] sm:$0xf]
  %v4161 = vld [vmem:[%s7 + $0x40] sm:$0xf]
  %v4162 = vld [vmem:[%s7 + $0x44] sm:$0xf]
  %v4163 = vld [vmem:[%s7 + $0x48] sm:$0xf]
  %v4164 = vld [vmem:[%s7 + $0x4c] sm:$0xf]
  %v4165 = vld [vmem:[%s7 + $0x50] sm:$0xf]
  %v4166 = vld [vmem:[%s7 + $0x54] sm:$0xf]
  %v4167 = vld [vmem:[%s7 + $0x58] sm:$0xf]
  %v4168 = vld [vmem:[%s7 + $0x5c] sm:$0xf]
  %v4169 = vld [vmem:[%s7 + $0x60] sm:$0xf]
  %v4170 = vld [vmem:[%s7 + $0x64] sm:$0xf]
  %v4171 = vld [vmem:[%s7 + $0x68] sm:$0xf]
  %v4172 = vld [vmem:[%s7 + $0x6c] sm:$0xf]
  %v4173 = vld [vmem:[%s7 + $0x70] sm:$0xf]
  %v4174 = vld [vmem:[%s7 + $0x74] sm:$0xf]
  %v4175 = vld [vmem:[%s7 + $0x78] sm:$0xf]
  %v4176 = vld [vmem:[%s7 + $0x7c] sm:$0xf]
  %v4177 = vld [vmem:[%s8] sm:$0x1]
  %v4179 = vlaneseq
  %v4180 = vshrl.u32 %v4179, 7
  %v4181 = vsub.s32 0, %v4180
  %v4182 = vrot.slane %v4177, %v4181
  %v4216 = vunpack.c.l.b16 %v4145
  %v4217 = vunpack.c.l.b16 %v4146
  %v4218 = vunpack.c.l.b16 %v4147
  %v4219 = vunpack.c.l.b16 %v4148
  %v4220 = vunpack.c.l.b16 %v4149
  %v4221 = vunpack.c.l.b16 %v4150
  %v4222 = vunpack.c.l.b16 %v4151
  %v4223 = vunpack.c.l.b16 %v4152
  %v4224 = vunpack.c.l.b16 %v4153
  %v4225 = vunpack.c.l.b16 %v4154
  %v4226 = vunpack.c.l.b16 %v4155
  %v4227 = vunpack.c.l.b16 %v4156
  %v4228 = vunpack.c.l.b16 %v4157
  %v4229 = vunpack.c.l.b16 %v4158
  %v4230 = vunpack.c.l.b16 %v4159
  %v4231 = vunpack.c.l.b16 %v4160
  %v4232 = vunpack.c.l.b16 %v4161
  %v4233 = vunpack.c.l.b16 %v4162
  %v4234 = vunpack.c.l.b16 %v4163
  %v4235 = vunpack.c.l.b16 %v4164
  %v4236 = vunpack.c.l.b16 %v4165
  %v4237 = vunpack.c.l.b16 %v4166
  %v4238 = vunpack.c.l.b16 %v4167
  %v4239 = vunpack.c.l.b16 %v4168
  %v4240 = vunpack.c.l.b16 %v4169
  %v4241 = vunpack.c.l.b16 %v4170
  %v4242 = vunpack.c.l.b16 %v4171
  %v4243 = vunpack.c.l.b16 %v4172
  %v4244 = vunpack.c.l.b16 %v4173
  %v4245 = vunpack.c.l.b16 %v4174
  %v4246 = vunpack.c.l.b16 %v4175
  %v4247 = vunpack.c.l.b16 %v4176
  %v4248 = vpack.c.b16 %v4217, %v4216
  %v4249 = vpack.c.b16 %v4219, %v4218
  %v4250 = vpack.c.b16 %v4221, %v4220
  %v4251 = vpack.c.b16 %v4223, %v4222
  %v4252 = vpack.c.b16 %v4225, %v4224
  %v4253 = vpack.c.b16 %v4227, %v4226
  %v4254 = vpack.c.b16 %v4229, %v4228
  %v4255 = vpack.c.b16 %v4231, %v4230
  %v4256 = vpack.c.b16 %v4233, %v4232
  %v4257 = vpack.c.b16 %v4235, %v4234
  %v4258 = vpack.c.b16 %v4237, %v4236
  %v4259 = vpack.c.b16 %v4239, %v4238
  %v4260 = vpack.c.b16 %v4241, %v4240
  %v4261 = vpack.c.b16 %v4243, %v4242
  %v4262 = vpack.c.b16 %v4245, %v4244
  %v4263 = vpack.c.b16 %v4247, %v4246
  %4280 = vmatprep.subr.bf16.mxu0 0
  %4281 = vmatpush1.bf16.msra.mxu0 %v4255
  %4282 = vmatprep.subr.bf16.mxu0 0
  %4283 = vmatpush1.bf16.msra.mxu0 %v4254
  %4284 = vmatprep.subr.bf16.mxu0 0
  %4285 = vmatpush1.bf16.msra.mxu0 %v4253
  %4286 = vmatprep.subr.bf16.mxu0 0
  %4287 = vmatpush1.bf16.msra.mxu0 %v4252
  %4288 = vmatprep.subr.bf16.mxu0 0
  %4289 = vmatpush1.bf16.msra.mxu0 %v4251
  %4290 = vmatprep.subr.bf16.mxu0 0
  %4291 = vmatpush1.bf16.msra.mxu0 %v4250
  %4292 = vmatprep.subr.bf16.mxu0 0
  %4293 = vmatpush1.bf16.msra.mxu0 %v4249
  %4294 = vmatprep.subr.bf16.mxu0 0
  %4295 = vmatpush1.bf16.msra.mxu0 %v4248
  %4296 = vmatprep.subr.bf16.mxu0 0
  %4297 = vmatpush2.bf16.msra.mxu0 %v4263
  %4298 = vmatprep.subr.bf16.mxu0 0
  %4299 = vmatpush2.bf16.msra.mxu0 %v4262
  %4300 = vmatprep.subr.bf16.mxu0 0
  %4301 = vmatpush2.bf16.msra.mxu0 %v4261
  %4302 = vmatprep.subr.bf16.mxu0 0
  %4303 = vmatpush2.bf16.msra.mxu0 %v4260
  %4304 = vmatprep.subr.bf16.mxu0 0
  %4305 = vmatpush2.bf16.msra.mxu0 %v4259
  %4306 = vmatprep.subr.bf16.mxu0 0
  %4307 = vmatpush2.bf16.msra.mxu0 %v4258
  %4308 = vmatprep.subr.bf16.mxu0 0
  %4309 = vmatpush2.bf16.msra.mxu0 %v4257
  %4310 = vmatprep.subr.bf16.mxu0 0
  %4311 = vmatpush2.bf16.msra.mxu0 %v4256
  %4312 = vmatprep.mubr.bf16.mxu0 %v4142
  %4313 = vmatmul.mubr.bf16.gmra.mxu0 %v4141
  %v4314 = vpop.f32.mrf.mxu0
  %v4315 = vadd.f32 %v4182, %v4314
  %v4316 = vpop.f32.mrf.mxu0
  %v4317 = vpop.f32.mrf.mxu0
  %v4318 = vadd.f32 %v4182, %v4317
  %v4319 = vpop.f32.mrf.mxu0
  %4320 = vmatprep.mubr.bf16.mxu0 %v4144
  %4321 = vmatmul.mubr.bf16.gmra.mxu0 %v4143
  %v4322 = vpop.f32.mrf.mxu0
  %v4323 = vadd.f32 %v4182, %v4322
  %v4324 = vpop.f32.mrf.mxu0
  %v4325 = vpop.f32.mrf.mxu0
  %v4326 = vadd.f32 %v4182, %v4325
  %v4327 = vpop.f32.mrf.mxu0
  %4328 = vdwg.mxu0
  %4329 = vst [vmem:[%s9] sm:$0xff] %v4315
  %4330 = vst [vmem:[%s9 + $0x8] sm:$0xff] %v4318
  %4331 = vst [vmem:[%s9 + $0x10] sm:$0xff] %v4323
  %4332 = vst [vmem:[%s9 + $0x18] sm:$0xff] %v4326
  // Predicated region
  $region38: #{simple_2d_unet.1} parent=0 // pred_check
    _
  $region39: #{simple_2d_unet.1} parent=0 // pred_check_branch
    %4334 = sbr.rel (0) target = $region41
  $region40: #{simple_2d_unet.1} parent=0 // pred_region
    _
  $region41: #{simple_2d_unet.1} parent=0 // pred_fallthru
    _
  // Predicated region
  $region42: #{simple_2d_unet.1} parent=0 // pred_check
    _
  $region43: #{simple_2d_unet.1} parent=0 // pred_check_branch
    %4336 = sbr.rel (0) target = $region45
  $region44: #{simple_2d_unet.1} parent=0 // pred_region
    _
  $region45: #{simple_2d_unet.1} parent=0 // pred_fallthru
    _

</llo_original>
